<compile_context>
chip_gen: v5e
topology: v5e:2x2
jax: 0.10.0
libtpu: 0.0.40
codegen_flags: <defaults>
</compile_context>

<pallas_src>
import functools

import jax
import jax.numpy as jnp
from jax.experimental import pallas as pl
from jax.experimental.pallas import tpu as pltpu


LANE = 128  # TPU lane width; classifier output is padded to this width.


# ----------------------------------------------------------------------------
# Fused forward kernel
# ----------------------------------------------------------------------------

def _layernorm(x, g, b, eps):
    mu = jnp.mean(x, axis=-1, keepdims=True)
    xc = x - mu
    var = jnp.mean(xc * xc, axis=-1, keepdims=True)
    return xc * jax.lax.rsqrt(var + eps) * g + b


def _fused_forward_kernel(
    # inputs
    emb_ref, mask_ref,
    emb_g_ref, emb_b_ref,
    qkv_w_ref, qkv_b_ref,
    ao_w_ref, ao_b_ref,
    ln1_g_ref, ln1_b_ref,
    i_w_ref, i_b_ref,
    o_w_ref, o_b_ref,
    ln2_g_ref, ln2_b_ref,
    dw_ref, db_ref,
    ow_ref, ob_ref,
    # output
    o_ref,
    # scratch
    ctx_scratch,
    *, B, S, H, nH, Dh, L, eps, layers_use_from_last, method_for_layers,
):
    scale = 1.0 / (Dh ** 0.5)
    first_sel = (L + 1) - layers_use_from_last   # first hidden-state index used
    cls_acc = [None] * B                         # per-batch CLS accumulators

    def collect_cls(x, hs_index):
        if hs_index >= first_sel:
            for b in range(B):
                row = x[b * S:b * S + 1, :]      # CLS token of example b, [1, H]
                cls_acc[b] = row if cls_acc[b] is None else cls_acc[b] + row

    # ---- embeddings LayerNorm (hidden_states[0]) ----------------------------
    x = _layernorm(emb_ref[...], emb_g_ref[...], emb_b_ref[...], eps)
    collect_cls(x, 0)

    # ---- encoder layers (fully unrolled; L is small & static) ---------------
    for l in range(L):
        # Fused QKV projection: [B*S, 3H] in one MXU pass.
        qkv = jnp.dot(x, qkv_w_ref[l], preferred_element_type=jnp.float32) + qkv_b_ref[l]

        # Per (batch, head) attention with pure 2-D ops; contexts are written
        # into VMEM scratch laid out [B*S, H] so the output projection below
        # is a single matmul over all heads.
        for b in range(B):
            rows = slice(b * S, (b + 1) * S)
            mask_b = mask_ref[b:b + 1, :]                         # [1, S] additive bias
            for h in range(nH):
                q = qkv[rows, h * Dh:(h + 1) * Dh]                # [S, Dh]
                k = qkv[rows, H + h * Dh:H + (h + 1) * Dh]        # [S, Dh]
                v = qkv[rows, 2 * H + h * Dh:2 * H + (h + 1) * Dh]
                s = jax.lax.dot_general(                          # q @ k^T
                    q, k, (((1,), (1,)), ((), ())),
                    preferred_element_type=jnp.float32) * scale
                s = s + mask_b
                s = s - jnp.max(s, axis=-1, keepdims=True)
                p = jnp.exp(s)
                p = p * pl.reciprocal(jnp.sum(p, axis=-1, keepdims=True), approx=True)
                ctx = jnp.dot(p, v, preferred_element_type=jnp.float32)  # [S, Dh]
                ctx_scratch[rows, h * Dh:(h + 1) * Dh] = ctx

        attn = (jnp.dot(ctx_scratch[...], ao_w_ref[l],
                        preferred_element_type=jnp.float32) + ao_b_ref[l])
        x = _layernorm(x + attn, ln1_g_ref[l], ln1_b_ref[l], eps)

        # Fused FFN: intermediate activation stays in VMEM.
        inter = jnp.dot(x, i_w_ref[l], preferred_element_type=jnp.float32) + i_b_ref[l]
        # TODO(synk): HF BERT default is exact erf-GELU; tanh approximation used
        # here since it lowers cleanly to the TPU EUP.
        inter = jax.nn.gelu(inter, approximate=True)
        ffn = jnp.dot(inter, o_w_ref[l], preferred_element_type=jnp.float32) + o_b_ref[l]
        x = _layernorm(x + ffn, ln2_g_ref[l], ln2_b_ref[l], eps)

        collect_cls(x, l + 1)

    # ---- layer combine + classification head (dropout == identity) ----------
    inv_L = 1.0 / layers_use_from_last
    for b in range(B):
        comb = cls_acc[b]
        if method_for_layers != "sum":          # PyTorch: sum if 'sum' else mean
            comb = comb * inv_L
        ctx_scratch[b:b + 1, :] = comb          # reuse scratch to batch the head
    comb_all = ctx_scratch[0:B, :]                                   # [B, H]
    hdn = jnp.tanh(jnp.dot(comb_all, dw_ref[...],
                           preferred_element_type=jnp.float32) + db_ref[...])
    logits = jnp.dot(hdn, ow_ref[...],
                     preferred_element_type=jnp.float32) + ob_ref[...]   # [B, 128]
    o_ref[...] = logits.astype(o_ref.dtype)     # lane-dense full store


# ----------------------------------------------------------------------------
# Wrapper: glue (embedding gathers, weight packing) + one pallas_call
# ----------------------------------------------------------------------------

def banabert_for_seq_classifier(params, cfg, input_ids, token_type_ids,
                                attention_mask, layers_use_from_last,
                                method_for_layers, num_classes):
    B, S = input_ids.shape
    H, I = cfg.hidden_size, cfg.intermediate_size
    nH = cfg.num_attention_heads
    Dh = H // nH
    L = cfg.num_hidden_layers

    # Embedding gathers (data-dependent; plain-JAX glue) + additive mask bias.
    emb = (params["word_emb"][input_ids]
           + params["pos_emb"][jnp.arange(S)][None, :, :]
           + params["type_emb"][token_type_ids]).reshape(B * S, H)
    mask_bias = (1.0 - attention_mask.astype(jnp.float32)) * -1e9        # [B, S]

    # One-time weight packing: fuse Q/K/V, stack layers, 2-D biases.
    layers = params["layers"]
    qkv_w = jnp.stack([jnp.concatenate([lp["q_w"], lp["k_w"], lp["v_w"]], axis=1)
                       for lp in layers])                                # [L, H, 3H]
    qkv_b = jnp.stack([jnp.concatenate([lp["q_b"], lp["k_b"], lp["v_b"]])[None, :]
                       for lp in layers])                                # [L, 1, 3H]
    ao_w = jnp.stack([lp["ao_w"] for lp in layers])                      # [L, H, H]
    ao_b = jnp.stack([lp["ao_b"][None, :] for lp in layers])             # [L, 1, H]
    ln1_g = jnp.stack([lp["ln1_g"][None, :] for lp in layers])
    ln1_b = jnp.stack([lp["ln1_b"][None, :] for lp in layers])
    i_w = jnp.stack([lp["i_w"] for lp in layers])                        # [L, H, I]
    i_b = jnp.stack([lp["i_b"][None, :] for lp in layers])               # [L, 1, I]
    o_w = jnp.stack([lp["o_w"] for lp in layers])                        # [L, I, H]
    o_b = jnp.stack([lp["o_b"][None, :] for lp in layers])               # [L, 1, H]
    ln2_g = jnp.stack([lp["ln2_g"][None, :] for lp in layers])
    ln2_b = jnp.stack([lp["ln2_b"][None, :] for lp in layers])

    # Lane-dense classifier output: pad num_classes -> LANE, slice afterwards.
    ow_pad = jnp.zeros((H, LANE), jnp.float32).at[:, :num_classes].set(params["cls_out_w"])
    ob_pad = jnp.zeros((1, LANE), jnp.float32).at[:, :num_classes].set(params["cls_out_b"])

    kernel = functools.partial(
        _fused_forward_kernel,
        B=B, S=S, H=H, nH=nH, Dh=Dh, L=L,
        eps=cfg.layer_norm_eps,
        layers_use_from_last=layers_use_from_last,
        method_for_layers=method_for_layers,
    )

    logits_pad = pl.pallas_call(
        kernel,
        out_shape=jax.ShapeDtypeStruct((B, LANE), jnp.float32),
        scratch_shapes=[pltpu.VMEM((B * S, H), jnp.float32)],
    )(emb, mask_bias,
      params["emb_ln_g"][None, :], params["emb_ln_b"][None, :],
      qkv_w, qkv_b, ao_w, ao_b, ln1_g, ln1_b,
      i_w, i_b, o_w, o_b, ln2_g, ln2_b,
      params["cls_dense_w"], params["cls_dense_b"][None, :],
      ow_pad, ob_pad)

    return logits_pad[:, :num_classes]


# ----------------------------------------------------------------------------
# Config / params
# ----------------------------------------------------------------------------

class Config:
    vocab_size = 50
    type_vocab_size = 2
    max_position_embeddings = 16
    hidden_size = 32
    num_attention_heads = 4
    intermediate_size = 64
    num_hidden_layers = 3
    layer_norm_eps = 1e-12


def init_params(key, cfg, num_classes):
    std = 0.02

    def nrm(k, shape):
        return std * jax.random.normal(k, shape, dtype=jnp.float32)

    keys = iter(jax.random.split(key, 8 + 12 * cfg.num_hidden_layers))
    H, I = cfg.hidden_size, cfg.intermediate_size
    params = {
        "word_emb": nrm(next(keys), (cfg.vocab_size, H)),
        "pos_emb": nrm(next(keys), (cfg.max_position_embeddings, H)),
        "type_emb": nrm(next(keys), (cfg.type_vocab_size, H)),
        "emb_ln_g": jnp.ones((H,), jnp.float32),
        "emb_ln_b": jnp.zeros((H,), jnp.float32),
        "layers": [],
    }
    for _ in range(cfg.num_hidden_layers):
        params["layers"].append({
            "q_w": nrm(next(keys), (H, H)), "q_b": jnp.zeros((H,), jnp.float32),
            "k_w": nrm(next(keys), (H, H)), "k_b": jnp.zeros((H,), jnp.float32),
            "v_w": nrm(next(keys), (H, H)), "v_b": jnp.zeros((H,), jnp.float32),
            "ao_w": nrm(next(keys), (H, H)), "ao_b": jnp.zeros((H,), jnp.float32),
            "ln1_g": jnp.ones((H,), jnp.float32), "ln1_b": jnp.zeros((H,), jnp.float32),
            "i_w": nrm(next(keys), (H, I)), "i_b": jnp.zeros((I,), jnp.float32),
            "o_w": nrm(next(keys), (I, H)), "o_b": jnp.zeros((H,), jnp.float32),
            "ln2_g": jnp.ones((H,), jnp.float32), "ln2_b": jnp.zeros((H,), jnp.float32),
        })
    params["cls_dense_w"] = nrm(next(keys), (H, H))
    params["cls_dense_b"] = jnp.zeros((H,), jnp.float32)
    params["cls_out_w"] = nrm(next(keys), (H, num_classes))
    params["cls_out_b"] = jnp.zeros((num_classes,), jnp.float32)
    return params


# ----------------------------------------------------------------------------
# Main
# ----------------------------------------------------------------------------

if __name__ == "__main__":
    cfg = Config()
    num_classes = 3
    layers_use_from_last = 2
    method_for_layers = "mean"   # PyTorch semantics: 'sum' sums, anything else means

    key = jax.random.PRNGKey(0)
    pkey, ikey = jax.random.split(key)
    params = init_params(pkey, cfg, num_classes)

    batch, seq = 2, 8
    input_ids = jax.random.randint(ikey, (batch, seq), 0, cfg.vocab_size, dtype=jnp.int32)
    token_type_ids = jnp.zeros((batch, seq), dtype=jnp.int32)
    attention_mask = jnp.ones((batch, seq), dtype=jnp.int32)

    logits = banabert_for_seq_classifier(params, cfg, input_ids, token_type_ids,
                                         attention_mask, layers_use_from_last,
                                         method_for_layers, num_classes)
    logits = jax.block_until_ready(logits)
    assert logits.shape == (batch, num_classes)
    print("KERNEL_OK")
</pallas_src>

<mosaic_0001>
module attributes {stable_mosaic.version = 11 : i64} {
  func.func @_fused_forward_kernel(%arg0: memref<16x32xf32, #tpu.memory_space<vmem>>, %arg1: memref<2x8xf32, #tpu.memory_space<vmem>>, %arg2: memref<1x32xf32, #tpu.memory_space<vmem>>, %arg3: memref<1x32xf32, #tpu.memory_space<vmem>>, %arg4: memref<3x32x96xf32, #tpu.memory_space<vmem>>, %arg5: memref<3x1x96xf32, #tpu.memory_space<vmem>>, %arg6: memref<3x32x32xf32, #tpu.memory_space<vmem>>, %arg7: memref<3x1x32xf32, #tpu.memory_space<vmem>>, %arg8: memref<3x1x32xf32, #tpu.memory_space<vmem>>, %arg9: memref<3x1x32xf32, #tpu.memory_space<vmem>>, %arg10: memref<3x32x64xf32, #tpu.memory_space<vmem>>, %arg11: memref<3x1x64xf32, #tpu.memory_space<vmem>>, %arg12: memref<3x64x32xf32, #tpu.memory_space<vmem>>, %arg13: memref<3x1x32xf32, #tpu.memory_space<vmem>>, %arg14: memref<3x1x32xf32, #tpu.memory_space<vmem>>, %arg15: memref<3x1x32xf32, #tpu.memory_space<vmem>>, %arg16: memref<32x32xf32, #tpu.memory_space<vmem>>, %arg17: memref<1x32xf32, #tpu.memory_space<vmem>>, %arg18: memref<32x128xf32, #tpu.memory_space<vmem>>, %arg19: memref<1x128xf32, #tpu.memory_space<vmem>>, %arg20: memref<2x128xf32, #tpu.memory_space<vmem>>, %arg21: memref<16x32xf32, #tpu.memory_space<vmem>>) attributes {dimension_semantics = [], scalar_prefetch = 0 : i64, scratch_operands = 1 : i64, tpu.core_type = #tpu.core_type<tc>} {
    %c0 = arith.constant 0 : index
    %c0_0 = arith.constant 0 : index
    %0 = vector.load %arg0[%c0, %c0_0] : memref<16x32xf32, #tpu.memory_space<vmem>>, vector<16x32xf32>
    %c0_1 = arith.constant 0 : index
    %c0_2 = arith.constant 0 : index
    %1 = vector.load %arg2[%c0_1, %c0_2] : memref<1x32xf32, #tpu.memory_space<vmem>>, vector<1x32xf32>
    %c0_3 = arith.constant 0 : index
    %c0_4 = arith.constant 0 : index
    %2 = vector.load %arg3[%c0_3, %c0_4] : memref<1x32xf32, #tpu.memory_space<vmem>>, vector<1x32xf32>
    %cst = arith.constant dense<0.000000e+00> : vector<16xf32>
    %3 = vector.multi_reduction <add>, %0, %cst [1] : vector<16x32xf32> to vector<16xf32>
    %4 = vector.shape_cast %3 : vector<16xf32> to vector<16x1xf32>
    %cst_5 = arith.constant 3.200000e+01 : f32
    %5 = vector.broadcast %cst_5 : f32 to vector<16x1xf32>
    %6 = arith.divf %4, %5 : vector<16x1xf32>
    %7 = vector.broadcast %6 : vector<16x1xf32> to vector<16x32xf32>
    %8 = arith.subf %0, %7 : vector<16x32xf32>
    %9 = arith.mulf %8, %8 : vector<16x32xf32>
    %cst_6 = arith.constant dense<0.000000e+00> : vector<16xf32>
    %10 = vector.multi_reduction <add>, %9, %cst_6 [1] : vector<16x32xf32> to vector<16xf32>
    %11 = vector.shape_cast %10 : vector<16xf32> to vector<16x1xf32>
    %cst_7 = arith.constant 3.200000e+01 : f32
    %12 = vector.broadcast %cst_7 : f32 to vector<16x1xf32>
    %13 = arith.divf %11, %12 : vector<16x1xf32>
    %cst_8 = arith.constant 9.99999996E-13 : f32
    %14 = vector.broadcast %cst_8 : f32 to vector<16x1xf32>
    %15 = arith.addf %13, %14 : vector<16x1xf32>
    %16 = math.rsqrt %15 : vector<16x1xf32>
    %17 = vector.broadcast %16 : vector<16x1xf32> to vector<16x32xf32>
    %18 = arith.mulf %8, %17 : vector<16x32xf32>
    %19 = vector.broadcast %1 : vector<1x32xf32> to vector<16x32xf32>
    %20 = arith.mulf %18, %19 : vector<16x32xf32>
    %21 = vector.broadcast %2 : vector<1x32xf32> to vector<16x32xf32>
    %22 = arith.addf %20, %21 : vector<16x32xf32>
    %c0_9 = arith.constant 0 : index
    %c0_10 = arith.constant 0 : index
    %c0_11 = arith.constant 0 : index
    %23 = vector.load %arg4[%c0_9, %c0_10, %c0_11] : memref<3x32x96xf32, #tpu.memory_space<vmem>>, vector<1x32x96xf32>
    %24 = vector.shape_cast %23 : vector<1x32x96xf32> to vector<32x96xf32>
    %cst_12 = arith.constant dense<0.000000e+00> : vector<16x96xf32>
    %25 = tpu.matmul %22, %24, %cst_12 {dimension_numbers = #tpu.dot_dimension_numbers<[1], [0], [0], [1], [0, 0, 1, 1], [], []>} : vector<16x32xf32>, vector<32x96xf32>, vector<16x96xf32> -> vector<16x96xf32>
    %c0_13 = arith.constant 0 : index
    %c0_14 = arith.constant 0 : index
    %c0_15 = arith.constant 0 : index
    %26 = vector.load %arg5[%c0_13, %c0_14, %c0_15] : memref<3x1x96xf32, #tpu.memory_space<vmem>>, vector<1x1x96xf32>
    %27 = vector.shape_cast %26 : vector<1x1x96xf32> to vector<1x96xf32>
    %28 = vector.broadcast %27 : vector<1x96xf32> to vector<16x96xf32>
    %29 = arith.addf %25, %28 : vector<16x96xf32>
    %c0_16 = arith.constant 0 : index
    %c0_17 = arith.constant 0 : index
    %30 = vector.load %arg1[%c0_16, %c0_17] : memref<2x8xf32, #tpu.memory_space<vmem>>, vector<1x8xf32>
    %31 = vector.extract_strided_slice %29 {offsets = [0, 0], sizes = [8, 8], strides = [1, 1]} : vector<16x96xf32> to vector<8x8xf32>
    %32 = vector.extract_strided_slice %29 {offsets = [0, 32], sizes = [8, 8], strides = [1, 1]} : vector<16x96xf32> to vector<8x8xf32>
    %33 = vector.extract_strided_slice %29 {offsets = [0, 64], sizes = [8, 8], strides = [1, 1]} : vector<16x96xf32> to vector<8x8xf32>
    %cst_18 = arith.constant dense<0.000000e+00> : vector<8x8xf32>
    %34 = tpu.matmul %31, %32, %cst_18 {dimension_numbers = #tpu.dot_dimension_numbers<[1], [1], [0], [0], [0, 0, 1, 0], [], []>} : vector<8x8xf32>, vector<8x8xf32>, vector<8x8xf32> -> vector<8x8xf32>
    %cst_19 = arith.constant 0.353553385 : f32
    %35 = vector.broadcast %cst_19 : f32 to vector<8x8xf32>
    %36 = arith.mulf %34, %35 : vector<8x8xf32>
    %37 = vector.broadcast %30 : vector<1x8xf32> to vector<8x8xf32>
    %38 = arith.addf %36, %37 : vector<8x8xf32>
    %cst_20 = arith.constant dense<0xFF800000> : vector<8xf32>
    %39 = vector.multi_reduction <maximumf>, %38, %cst_20 [1] : vector<8x8xf32> to vector<8xf32>
    %40 = vector.shape_cast %39 : vector<8xf32> to vector<8x1xf32>
    %41 = vector.broadcast %40 : vector<8x1xf32> to vector<8x8xf32>
    %42 = arith.subf %38, %41 : vector<8x8xf32>
    %43 = math.exp %42 : vector<8x8xf32>
    %cst_21 = arith.constant dense<0.000000e+00> : vector<8xf32>
    %44 = vector.multi_reduction <add>, %43, %cst_21 [1] : vector<8x8xf32> to vector<8xf32>
    %45 = vector.shape_cast %44 : vector<8xf32> to vector<8x1xf32>
    %46 = tpu.reciprocal %45 {approx = true} : vector<8x1xf32> -> vector<8x1xf32>
    %47 = vector.broadcast %46 : vector<8x1xf32> to vector<8x8xf32>
    %48 = arith.mulf %43, %47 : vector<8x8xf32>
    %cst_22 = arith.constant dense<0.000000e+00> : vector<8x8xf32>
    %49 = tpu.matmul %48, %33, %cst_22 {dimension_numbers = #tpu.dot_dimension_numbers<[1], [0], [0], [1], [0, 0, 1, 1], [], []>} : vector<8x8xf32>, vector<8x8xf32>, vector<8x8xf32> -> vector<8x8xf32>
    %c0_23 = arith.constant 0 : index
    %c0_24 = arith.constant 0 : index
    %50 = vector.load %arg21[%c0_23, %c0_24] : memref<16x32xf32, #tpu.memory_space<vmem>>, vector<8x8xf32>
    tpu.vector_store %arg21[%c0_23, %c0_24], %49 {strides = array<i32>} : memref<16x32xf32, #tpu.memory_space<vmem>>, vector<8x8xf32>,
    %51 = vector.extract_strided_slice %29 {offsets = [0, 8], sizes = [8, 8], strides = [1, 1]} : vector<16x96xf32> to vector<8x8xf32>
    %52 = vector.extract_strided_slice %29 {offsets = [0, 40], sizes = [8, 8], strides = [1, 1]} : vector<16x96xf32> to vector<8x8xf32>
    %53 = vector.extract_strided_slice %29 {offsets = [0, 72], sizes = [8, 8], strides = [1, 1]} : vector<16x96xf32> to vector<8x8xf32>
    %cst_25 = arith.constant dense<0.000000e+00> : vector<8x8xf32>
    %54 = tpu.matmul %51, %52, %cst_25 {dimension_numbers = #tpu.dot_dimension_numbers<[1], [1], [0], [0], [0, 0, 1, 0], [], []>} : vector<8x8xf32>, vector<8x8xf32>, vector<8x8xf32> -> vector<8x8xf32>
    %cst_26 = arith.constant 0.353553385 : f32
    %55 = vector.broadcast %cst_26 : f32 to vector<8x8xf32>
    %56 = arith.mulf %54, %55 : vector<8x8xf32>
    %57 = vector.broadcast %30 : vector<1x8xf32> to vector<8x8xf32>
    %58 = arith.addf %56, %57 : vector<8x8xf32>
    %cst_27 = arith.constant dense<0xFF800000> : vector<8xf32>
    %59 = vector.multi_reduction <maximumf>, %58, %cst_27 [1] : vector<8x8xf32> to vector<8xf32>
    %60 = vector.shape_cast %59 : vector<8xf32> to vector<8x1xf32>
    %61 = vector.broadcast %60 : vector<8x1xf32> to vector<8x8xf32>
    %62 = arith.subf %58, %61 : vector<8x8xf32>
    %63 = math.exp %62 : vector<8x8xf32>
    %cst_28 = arith.constant dense<0.000000e+00> : vector<8xf32>
    %64 = vector.multi_reduction <add>, %63, %cst_28 [1] : vector<8x8xf32> to vector<8xf32>
    %65 = vector.shape_cast %64 : vector<8xf32> to vector<8x1xf32>
    %66 = tpu.reciprocal %65 {approx = true} : vector<8x1xf32> -> vector<8x1xf32>
    %67 = vector.broadcast %66 : vector<8x1xf32> to vector<8x8xf32>
    %68 = arith.mulf %63, %67 : vector<8x8xf32>
    %cst_29 = arith.constant dense<0.000000e+00> : vector<8x8xf32>
    %69 = tpu.matmul %68, %53, %cst_29 {dimension_numbers = #tpu.dot_dimension_numbers<[1], [0], [0], [1], [0, 0, 1, 1], [], []>} : vector<8x8xf32>, vector<8x8xf32>, vector<8x8xf32> -> vector<8x8xf32>
    %c0_30 = arith.constant 0 : index
    %c8 = arith.constant 8 : index
    %70 = vector.load %arg21[%c0_30, %c8] : memref<16x32xf32, #tpu.memory_space<vmem>>, vector<8x8xf32>
    tpu.vector_store %arg21[%c0_30, %c8], %69 {strides = array<i32>} : memref<16x32xf32, #tpu.memory_space<vmem>>, vector<8x8xf32>,
    %71 = vector.extract_strided_slice %29 {offsets = [0, 16], sizes = [8, 8], strides = [1, 1]} : vector<16x96xf32> to vector<8x8xf32>
    %72 = vector.extract_strided_slice %29 {offsets = [0, 48], sizes = [8, 8], strides = [1, 1]} : vector<16x96xf32> to vector<8x8xf32>
    %73 = vector.extract_strided_slice %29 {offsets = [0, 80], sizes = [8, 8], strides = [1, 1]} : vector<16x96xf32> to vector<8x8xf32>
    %cst_31 = arith.constant dense<0.000000e+00> : vector<8x8xf32>
    %74 = tpu.matmul %71, %72, %cst_31 {dimension_numbers = #tpu.dot_dimension_numbers<[1], [1], [0], [0], [0, 0, 1, 0], [], []>} : vector<8x8xf32>, vector<8x8xf32>, vector<8x8xf32> -> vector<8x8xf32>
    %cst_32 = arith.constant 0.353553385 : f32
    %75 = vector.broadcast %cst_32 : f32 to vector<8x8xf32>
    %76 = arith.mulf %74, %75 : vector<8x8xf32>
    %77 = vector.broadcast %30 : vector<1x8xf32> to vector<8x8xf32>
    %78 = arith.addf %76, %77 : vector<8x8xf32>
    %cst_33 = arith.constant dense<0xFF800000> : vector<8xf32>
    %79 = vector.multi_reduction <maximumf>, %78, %cst_33 [1] : vector<8x8xf32> to vector<8xf32>
    %80 = vector.shape_cast %79 : vector<8xf32> to vector<8x1xf32>
    %81 = vector.broadcast %80 : vector<8x1xf32> to vector<8x8xf32>
    %82 = arith.subf %78, %81 : vector<8x8xf32>
    %83 = math.exp %82 : vector<8x8xf32>
    %cst_34 = arith.constant dense<0.000000e+00> : vector<8xf32>
    %84 = vector.multi_reduction <add>, %83, %cst_34 [1] : vector<8x8xf32> to vector<8xf32>
    %85 = vector.shape_cast %84 : vector<8xf32> to vector<8x1xf32>
    %86 = tpu.reciprocal %85 {approx = true} : vector<8x1xf32> -> vector<8x1xf32>
    %87 = vector.broadcast %86 : vector<8x1xf32> to vector<8x8xf32>
    %88 = arith.mulf %83, %87 : vector<8x8xf32>
    %cst_35 = arith.constant dense<0.000000e+00> : vector<8x8xf32>
    %89 = tpu.matmul %88, %73, %cst_35 {dimension_numbers = #tpu.dot_dimension_numbers<[1], [0], [0], [1], [0, 0, 1, 1], [], []>} : vector<8x8xf32>, vector<8x8xf32>, vector<8x8xf32> -> vector<8x8xf32>
    %c0_36 = arith.constant 0 : index
    %c16 = arith.constant 16 : index
    %90 = vector.load %arg21[%c0_36, %c16] : memref<16x32xf32, #tpu.memory_space<vmem>>, vector<8x8xf32>
    tpu.vector_store %arg21[%c0_36, %c16], %89 {strides = array<i32>} : memref<16x32xf32, #tpu.memory_space<vmem>>, vector<8x8xf32>,
    %91 = vector.extract_strided_slice %29 {offsets = [0, 24], sizes = [8, 8], strides = [1, 1]} : vector<16x96xf32> to vector<8x8xf32>
    %92 = vector.extract_strided_slice %29 {offsets = [0, 56], sizes = [8, 8], strides = [1, 1]} : vector<16x96xf32> to vector<8x8xf32>
    %93 = vector.extract_strided_slice %29 {offsets = [0, 88], sizes = [8, 8], strides = [1, 1]} : vector<16x96xf32> to vector<8x8xf32>
    %cst_37 = arith.constant dense<0.000000e+00> : vector<8x8xf32>
    %94 = tpu.matmul %91, %92, %cst_37 {dimension_numbers = #tpu.dot_dimension_numbers<[1], [1], [0], [0], [0, 0, 1, 0], [], []>} : vector<8x8xf32>, vector<8x8xf32>, vector<8x8xf32> -> vector<8x8xf32>
    %cst_38 = arith.constant 0.353553385 : f32
    %95 = vector.broadcast %cst_38 : f32 to vector<8x8xf32>
    %96 = arith.mulf %94, %95 : vector<8x8xf32>
    %97 = vector.broadcast %30 : vector<1x8xf32> to vector<8x8xf32>
    %98 = arith.addf %96, %97 : vector<8x8xf32>
    %cst_39 = arith.constant dense<0xFF800000> : vector<8xf32>
    %99 = vector.multi_reduction <maximumf>, %98, %cst_39 [1] : vector<8x8xf32> to vector<8xf32>
    %100 = vector.shape_cast %99 : vector<8xf32> to vector<8x1xf32>
    %101 = vector.broadcast %100 : vector<8x1xf32> to vector<8x8xf32>
    %102 = arith.subf %98, %101 : vector<8x8xf32>
    %103 = math.exp %102 : vector<8x8xf32>
    %cst_40 = arith.constant dense<0.000000e+00> : vector<8xf32>
    %104 = vector.multi_reduction <add>, %103, %cst_40 [1] : vector<8x8xf32> to vector<8xf32>
    %105 = vector.shape_cast %104 : vector<8xf32> to vector<8x1xf32>
    %106 = tpu.reciprocal %105 {approx = true} : vector<8x1xf32> -> vector<8x1xf32>
    %107 = vector.broadcast %106 : vector<8x1xf32> to vector<8x8xf32>
    %108 = arith.mulf %103, %107 : vector<8x8xf32>
    %cst_41 = arith.constant dense<0.000000e+00> : vector<8x8xf32>
    %109 = tpu.matmul %108, %93, %cst_41 {dimension_numbers = #tpu.dot_dimension_numbers<[1], [0], [0], [1], [0, 0, 1, 1], [], []>} : vector<8x8xf32>, vector<8x8xf32>, vector<8x8xf32> -> vector<8x8xf32>
    %c0_42 = arith.constant 0 : index
    %c24 = arith.constant 24 : index
    %110 = vector.load %arg21[%c0_42, %c24] : memref<16x32xf32, #tpu.memory_space<vmem>>, vector<8x8xf32>
    tpu.vector_store %arg21[%c0_42, %c24], %109 {strides = array<i32>} : memref<16x32xf32, #tpu.memory_space<vmem>>, vector<8x8xf32>,
    %c1 = arith.constant 1 : index
    %c0_43 = arith.constant 0 : index
    %111 = vector.load %arg1[%c1, %c0_43] : memref<2x8xf32, #tpu.memory_space<vmem>>, vector<1x8xf32>
    %112 = vector.extract_strided_slice %29 {offsets = [8, 0], sizes = [8, 8], strides = [1, 1]} : vector<16x96xf32> to vector<8x8xf32>
    %113 = vector.extract_strided_slice %29 {offsets = [8, 32], sizes = [8, 8], strides = [1, 1]} : vector<16x96xf32> to vector<8x8xf32>
    %114 = vector.extract_strided_slice %29 {offsets = [8, 64], sizes = [8, 8], strides = [1, 1]} : vector<16x96xf32> to vector<8x8xf32>
    %cst_44 = arith.constant dense<0.000000e+00> : vector<8x8xf32>
    %115 = tpu.matmul %112, %113, %cst_44 {dimension_numbers = #tpu.dot_dimension_numbers<[1], [1], [0], [0], [0, 0, 1, 0], [], []>} : vector<8x8xf32>, vector<8x8xf32>, vector<8x8xf32> -> vector<8x8xf32>
    %cst_45 = arith.constant 0.353553385 : f32
    %116 = vector.broadcast %cst_45 : f32 to vector<8x8xf32>
    %117 = arith.mulf %115, %116 : vector<8x8xf32>
    %118 = vector.broadcast %111 : vector<1x8xf32> to vector<8x8xf32>
    %119 = arith.addf %117, %118 : vector<8x8xf32>
    %cst_46 = arith.constant dense<0xFF800000> : vector<8xf32>
    %120 = vector.multi_reduction <maximumf>, %119, %cst_46 [1] : vector<8x8xf32> to vector<8xf32>
    %121 = vector.shape_cast %120 : vector<8xf32> to vector<8x1xf32>
    %122 = vector.broadcast %121 : vector<8x1xf32> to vector<8x8xf32>
    %123 = arith.subf %119, %122 : vector<8x8xf32>
    %124 = math.exp %123 : vector<8x8xf32>
    %cst_47 = arith.constant dense<0.000000e+00> : vector<8xf32>
    %125 = vector.multi_reduction <add>, %124, %cst_47 [1] : vector<8x8xf32> to vector<8xf32>
    %126 = vector.shape_cast %125 : vector<8xf32> to vector<8x1xf32>
    %127 = tpu.reciprocal %126 {approx = true} : vector<8x1xf32> -> vector<8x1xf32>
    %128 = vector.broadcast %127 : vector<8x1xf32> to vector<8x8xf32>
    %129 = arith.mulf %124, %128 : vector<8x8xf32>
    %cst_48 = arith.constant dense<0.000000e+00> : vector<8x8xf32>
    %130 = tpu.matmul %129, %114, %cst_48 {dimension_numbers = #tpu.dot_dimension_numbers<[1], [0], [0], [1], [0, 0, 1, 1], [], []>} : vector<8x8xf32>, vector<8x8xf32>, vector<8x8xf32> -> vector<8x8xf32>
    %c8_49 = arith.constant 8 : index
    %c0_50 = arith.constant 0 : index
    %131 = vector.load %arg21[%c8_49, %c0_50] : memref<16x32xf32, #tpu.memory_space<vmem>>, vector<8x8xf32>
    tpu.vector_store %arg21[%c8_49, %c0_50], %130 {strides = array<i32>} : memref<16x32xf32, #tpu.memory_space<vmem>>, vector<8x8xf32>,
    %132 = vector.extract_strided_slice %29 {offsets = [8, 8], sizes = [8, 8], strides = [1, 1]} : vector<16x96xf32> to vector<8x8xf32>
    %133 = vector.extract_strided_slice %29 {offsets = [8, 40], sizes = [8, 8], strides = [1, 1]} : vector<16x96xf32> to vector<8x8xf32>
    %134 = vector.extract_strided_slice %29 {offsets = [8, 72], sizes = [8, 8], strides = [1, 1]} : vector<16x96xf32> to vector<8x8xf32>
    %cst_51 = arith.constant dense<0.000000e+00> : vector<8x8xf32>
    %135 = tpu.matmul %132, %133, %cst_51 {dimension_numbers = #tpu.dot_dimension_numbers<[1], [1], [0], [0], [0, 0, 1, 0], [], []>} : vector<8x8xf32>, vector<8x8xf32>, vector<8x8xf32> -> vector<8x8xf32>
    %cst_52 = arith.constant 0.353553385 : f32
    %136 = vector.broadcast %cst_52 : f32 to vector<8x8xf32>
    %137 = arith.mulf %135, %136 : vector<8x8xf32>
    %138 = vector.broadcast %111 : vector<1x8xf32> to vector<8x8xf32>
    %139 = arith.addf %137, %138 : vector<8x8xf32>
    %cst_53 = arith.constant dense<0xFF800000> : vector<8xf32>
    %140 = vector.multi_reduction <maximumf>, %139, %cst_53 [1] : vector<8x8xf32> to vector<8xf32>
    %141 = vector.shape_cast %140 : vector<8xf32> to vector<8x1xf32>
    %142 = vector.broadcast %141 : vector<8x1xf32> to vector<8x8xf32>
    %143 = arith.subf %139, %142 : vector<8x8xf32>
    %144 = math.exp %143 : vector<8x8xf32>
    %cst_54 = arith.constant dense<0.000000e+00> : vector<8xf32>
    %145 = vector.multi_reduction <add>, %144, %cst_54 [1] : vector<8x8xf32> to vector<8xf32>
    %146 = vector.shape_cast %145 : vector<8xf32> to vector<8x1xf32>
    %147 = tpu.reciprocal %146 {approx = true} : vector<8x1xf32> -> vector<8x1xf32>
    %148 = vector.broadcast %147 : vector<8x1xf32> to vector<8x8xf32>
    %149 = arith.mulf %144, %148 : vector<8x8xf32>
    %cst_55 = arith.constant dense<0.000000e+00> : vector<8x8xf32>
    %150 = tpu.matmul %149, %134, %cst_55 {dimension_numbers = #tpu.dot_dimension_numbers<[1], [0], [0], [1], [0, 0, 1, 1], [], []>} : vector<8x8xf32>, vector<8x8xf32>, vector<8x8xf32> -> vector<8x8xf32>
    %c8_56 = arith.constant 8 : index
    %c8_57 = arith.constant 8 : index
    %151 = vector.load %arg21[%c8_56, %c8_57] : memref<16x32xf32, #tpu.memory_space<vmem>>, vector<8x8xf32>
    tpu.vector_store %arg21[%c8_56, %c8_57], %150 {strides = array<i32>} : memref<16x32xf32, #tpu.memory_space<vmem>>, vector<8x8xf32>,
    %152 = vector.extract_strided_slice %29 {offsets = [8, 16], sizes = [8, 8], strides = [1, 1]} : vector<16x96xf32> to vector<8x8xf32>
    %153 = vector.extract_strided_slice %29 {offsets = [8, 48], sizes = [8, 8], strides = [1, 1]} : vector<16x96xf32> to vector<8x8xf32>
    %154 = vector.extract_strided_slice %29 {offsets = [8, 80], sizes = [8, 8], strides = [1, 1]} : vector<16x96xf32> to vector<8x8xf32>
    %cst_58 = arith.constant dense<0.000000e+00> : vector<8x8xf32>
    %155 = tpu.matmul %152, %153, %cst_58 {dimension_numbers = #tpu.dot_dimension_numbers<[1], [1], [0], [0], [0, 0, 1, 0], [], []>} : vector<8x8xf32>, vector<8x8xf32>, vector<8x8xf32> -> vector<8x8xf32>
    %cst_59 = arith.constant 0.353553385 : f32
    %156 = vector.broadcast %cst_59 : f32 to vector<8x8xf32>
    %157 = arith.mulf %155, %156 : vector<8x8xf32>
    %158 = vector.broadcast %111 : vector<1x8xf32> to vector<8x8xf32>
    %159 = arith.addf %157, %158 : vector<8x8xf32>
    %cst_60 = arith.constant dense<0xFF800000> : vector<8xf32>
    %160 = vector.multi_reduction <maximumf>, %159, %cst_60 [1] : vector<8x8xf32> to vector<8xf32>
    %161 = vector.shape_cast %160 : vector<8xf32> to vector<8x1xf32>
    %162 = vector.broadcast %161 : vector<8x1xf32> to vector<8x8xf32>
    %163 = arith.subf %159, %162 : vector<8x8xf32>
    %164 = math.exp %163 : vector<8x8xf32>
    %cst_61 = arith.constant dense<0.000000e+00> : vector<8xf32>
    %165 = vector.multi_reduction <add>, %164, %cst_61 [1] : vector<8x8xf32> to vector<8xf32>
    %166 = vector.shape_cast %165 : vector<8xf32> to vector<8x1xf32>
    %167 = tpu.reciprocal %166 {approx = true} : vector<8x1xf32> -> vector<8x1xf32>
    %168 = vector.broadcast %167 : vector<8x1xf32> to vector<8x8xf32>
    %169 = arith.mulf %164, %168 : vector<8x8xf32>
    %cst_62 = arith.constant dense<0.000000e+00> : vector<8x8xf32>
    %170 = tpu.matmul %169, %154, %cst_62 {dimension_numbers = #tpu.dot_dimension_numbers<[1], [0], [0], [1], [0, 0, 1, 1], [], []>} : vector<8x8xf32>, vector<8x8xf32>, vector<8x8xf32> -> vector<8x8xf32>
    %c8_63 = arith.constant 8 : index
    %c16_64 = arith.constant 16 : index
    %171 = vector.load %arg21[%c8_63, %c16_64] : memref<16x32xf32, #tpu.memory_space<vmem>>, vector<8x8xf32>
    tpu.vector_store %arg21[%c8_63, %c16_64], %170 {strides = array<i32>} : memref<16x32xf32, #tpu.memory_space<vmem>>, vector<8x8xf32>,
    %172 = vector.extract_strided_slice %29 {offsets = [8, 24], sizes = [8, 8], strides = [1, 1]} : vector<16x96xf32> to vector<8x8xf32>
    %173 = vector.extract_strided_slice %29 {offsets = [8, 56], sizes = [8, 8], strides = [1, 1]} : vector<16x96xf32> to vector<8x8xf32>
    %174 = vector.extract_strided_slice %29 {offsets = [8, 88], sizes = [8, 8], strides = [1, 1]} : vector<16x96xf32> to vector<8x8xf32>
    %cst_65 = arith.constant dense<0.000000e+00> : vector<8x8xf32>
    %175 = tpu.matmul %172, %173, %cst_65 {dimension_numbers = #tpu.dot_dimension_numbers<[1], [1], [0], [0], [0, 0, 1, 0], [], []>} : vector<8x8xf32>, vector<8x8xf32>, vector<8x8xf32> -> vector<8x8xf32>
    %cst_66 = arith.constant 0.353553385 : f32
    %176 = vector.broadcast %cst_66 : f32 to vector<8x8xf32>
    %177 = arith.mulf %175, %176 : vector<8x8xf32>
    %178 = vector.broadcast %111 : vector<1x8xf32> to vector<8x8xf32>
    %179 = arith.addf %177, %178 : vector<8x8xf32>
    %cst_67 = arith.constant dense<0xFF800000> : vector<8xf32>
    %180 = vector.multi_reduction <maximumf>, %179, %cst_67 [1] : vector<8x8xf32> to vector<8xf32>
    %181 = vector.shape_cast %180 : vector<8xf32> to vector<8x1xf32>
    %182 = vector.broadcast %181 : vector<8x1xf32> to vector<8x8xf32>
    %183 = arith.subf %179, %182 : vector<8x8xf32>
    %184 = math.exp %183 : vector<8x8xf32>
    %cst_68 = arith.constant dense<0.000000e+00> : vector<8xf32>
    %185 = vector.multi_reduction <add>, %184, %cst_68 [1] : vector<8x8xf32> to vector<8xf32>
    %186 = vector.shape_cast %185 : vector<8xf32> to vector<8x1xf32>
    %187 = tpu.reciprocal %186 {approx = true} : vector<8x1xf32> -> vector<8x1xf32>
    %188 = vector.broadcast %187 : vector<8x1xf32> to vector<8x8xf32>
    %189 = arith.mulf %184, %188 : vector<8x8xf32>
    %cst_69 = arith.constant dense<0.000000e+00> : vector<8x8xf32>
    %190 = tpu.matmul %189, %174, %cst_69 {dimension_numbers = #tpu.dot_dimension_numbers<[1], [0], [0], [1], [0, 0, 1, 1], [], []>} : vector<8x8xf32>, vector<8x8xf32>, vector<8x8xf32> -> vector<8x8xf32>
    %c8_70 = arith.constant 8 : index
    %c24_71 = arith.constant 24 : index
    %191 = vector.load %arg21[%c8_70, %c24_71] : memref<16x32xf32, #tpu.memory_space<vmem>>, vector<8x8xf32>
    tpu.vector_store %arg21[%c8_70, %c24_71], %190 {strides = array<i32>} : memref<16x32xf32, #tpu.memory_space<vmem>>, vector<8x8xf32>,
    %c0_72 = arith.constant 0 : index
    %c0_73 = arith.constant 0 : index
    %192 = vector.load %arg21[%c0_72, %c0_73] : memref<16x32xf32, #tpu.memory_space<vmem>>, vector<16x32xf32>
    %c0_74 = arith.constant 0 : index
    %c0_75 = arith.constant 0 : index
    %c0_76 = arith.constant 0 : index
    %193 = vector.load %arg6[%c0_74, %c0_75, %c0_76] : memref<3x32x32xf32, #tpu.memory_space<vmem>>, vector<1x32x32xf32>
    %194 = vector.shape_cast %193 : vector<1x32x32xf32> to vector<32x32xf32>
    %cst_77 = arith.constant dense<0.000000e+00> : vector<16x32xf32>
    %195 = tpu.matmul %192, %194, %cst_77 {dimension_numbers = #tpu.dot_dimension_numbers<[1], [0], [0], [1], [0, 0, 1, 1], [], []>} : vector<16x32xf32>, vector<32x32xf32>, vector<16x32xf32> -> vector<16x32xf32>
    %c0_78 = arith.constant 0 : index
    %c0_79 = arith.constant 0 : index
    %c0_80 = arith.constant 0 : index
    %196 = vector.load %arg7[%c0_78, %c0_79, %c0_80] : memref<3x1x32xf32, #tpu.memory_space<vmem>>, vector<1x1x32xf32>
    %197 = vector.shape_cast %196 : vector<1x1x32xf32> to vector<1x32xf32>
    %198 = vector.broadcast %197 : vector<1x32xf32> to vector<16x32xf32>
    %199 = arith.addf %195, %198 : vector<16x32xf32>
    %200 = arith.addf %22, %199 : vector<16x32xf32>
    %c0_81 = arith.constant 0 : index
    %c0_82 = arith.constant 0 : index
    %c0_83 = arith.constant 0 : index
    %201 = vector.load %arg8[%c0_81, %c0_82, %c0_83] : memref<3x1x32xf32, #tpu.memory_space<vmem>>, vector<1x1x32xf32>
    %202 = vector.shape_cast %201 : vector<1x1x32xf32> to vector<1x32xf32>
    %c0_84 = arith.constant 0 : index
    %c0_85 = arith.constant 0 : index
    %c0_86 = arith.constant 0 : index
    %203 = vector.load %arg9[%c0_84, %c0_85, %c0_86] : memref<3x1x32xf32, #tpu.memory_space<vmem>>, vector<1x1x32xf32>
    %204 = vector.shape_cast %203 : vector<1x1x32xf32> to vector<1x32xf32>
    %cst_87 = arith.constant dense<0.000000e+00> : vector<16xf32>
    %205 = vector.multi_reduction <add>, %200, %cst_87 [1] : vector<16x32xf32> to vector<16xf32>
    %206 = vector.shape_cast %205 : vector<16xf32> to vector<16x1xf32>
    %cst_88 = arith.constant 3.200000e+01 : f32
    %207 = vector.broadcast %cst_88 : f32 to vector<16x1xf32>
    %208 = arith.divf %206, %207 : vector<16x1xf32>
    %209 = vector.broadcast %208 : vector<16x1xf32> to vector<16x32xf32>
    %210 = arith.subf %200, %209 : vector<16x32xf32>
    %211 = arith.mulf %210, %210 : vector<16x32xf32>
    %cst_89 = arith.constant dense<0.000000e+00> : vector<16xf32>
    %212 = vector.multi_reduction <add>, %211, %cst_89 [1] : vector<16x32xf32> to vector<16xf32>
    %213 = vector.shape_cast %212 : vector<16xf32> to vector<16x1xf32>
    %cst_90 = arith.constant 3.200000e+01 : f32
    %214 = vector.broadcast %cst_90 : f32 to vector<16x1xf32>
    %215 = arith.divf %213, %214 : vector<16x1xf32>
    %cst_91 = arith.constant 9.99999996E-13 : f32
    %216 = vector.broadcast %cst_91 : f32 to vector<16x1xf32>
    %217 = arith.addf %215, %216 : vector<16x1xf32>
    %218 = math.rsqrt %217 : vector<16x1xf32>
    %219 = vector.broadcast %218 : vector<16x1xf32> to vector<16x32xf32>
    %220 = arith.mulf %210, %219 : vector<16x32xf32>
    %221 = vector.broadcast %202 : vector<1x32xf32> to vector<16x32xf32>
    %222 = arith.mulf %220, %221 : vector<16x32xf32>
    %223 = vector.broadcast %204 : vector<1x32xf32> to vector<16x32xf32>
    %224 = arith.addf %222, %223 : vector<16x32xf32>
    %c0_92 = arith.constant 0 : index
    %c0_93 = arith.constant 0 : index
    %c0_94 = arith.constant 0 : index
    %225 = vector.load %arg10[%c0_92, %c0_93, %c0_94] : memref<3x32x64xf32, #tpu.memory_space<vmem>>, vector<1x32x64xf32>
    %226 = vector.shape_cast %225 : vector<1x32x64xf32> to vector<32x64xf32>
    %cst_95 = arith.constant dense<0.000000e+00> : vector<16x64xf32>
    %227 = tpu.matmul %224, %226, %cst_95 {dimension_numbers = #tpu.dot_dimension_numbers<[1], [0], [0], [1], [0, 0, 1, 1], [], []>} : vector<16x32xf32>, vector<32x64xf32>, vector<16x64xf32> -> vector<16x64xf32>
    %c0_96 = arith.constant 0 : index
    %c0_97 = arith.constant 0 : index
    %c0_98 = arith.constant 0 : index
    %228 = vector.load %arg11[%c0_96, %c0_97, %c0_98] : memref<3x1x64xf32, #tpu.memory_space<vmem>>, vector<1x1x64xf32>
    %229 = vector.shape_cast %228 : vector<1x1x64xf32> to vector<1x64xf32>
    %230 = vector.broadcast %229 : vector<1x64xf32> to vector<16x64xf32>
    %231 = arith.addf %227, %230 : vector<16x64xf32>
    %232 = arith.mulf %231, %231 : vector<16x64xf32>
    %233 = arith.mulf %231, %232 : vector<16x64xf32>
    %cst_99 = arith.constant 4.471500e-02 : f32
    %234 = vector.broadcast %cst_99 : f32 to vector<16x64xf32>
    %235 = arith.mulf %234, %233 : vector<16x64xf32>
    %236 = arith.addf %231, %235 : vector<16x64xf32>
    %cst_100 = arith.constant 0.797884583 : f32
    %237 = vector.broadcast %cst_100 : f32 to vector<16x64xf32>
    %238 = arith.mulf %237, %236 : vector<16x64xf32>
    %239 = math.tanh %238 : vector<16x64xf32>
    %cst_101 = arith.constant 1.000000e+00 : f32
    %240 = vector.broadcast %cst_101 : f32 to vector<16x64xf32>
    %241 = arith.addf %240, %239 : vector<16x64xf32>
    %cst_102 = arith.constant 5.000000e-01 : f32
    %242 = vector.broadcast %cst_102 : f32 to vector<16x64xf32>
    %243 = arith.mulf %242, %241 : vector<16x64xf32>
    %244 = arith.mulf %231, %243 : vector<16x64xf32>
    %c0_103 = arith.constant 0 : index
    %c0_104 = arith.constant 0 : index
    %c0_105 = arith.constant 0 : index
    %245 = vector.load %arg12[%c0_103, %c0_104, %c0_105] : memref<3x64x32xf32, #tpu.memory_space<vmem>>, vector<1x64x32xf32>
    %246 = vector.shape_cast %245 : vector<1x64x32xf32> to vector<64x32xf32>
    %cst_106 = arith.constant dense<0.000000e+00> : vector<16x32xf32>
    %247 = tpu.matmul %244, %246, %cst_106 {dimension_numbers = #tpu.dot_dimension_numbers<[1], [0], [0], [1], [0, 0, 1, 1], [], []>} : vector<16x64xf32>, vector<64x32xf32>, vector<16x32xf32> -> vector<16x32xf32>
    %c0_107 = arith.constant 0 : index
    %c0_108 = arith.constant 0 : index
    %c0_109 = arith.constant 0 : index
    %248 = vector.load %arg13[%c0_107, %c0_108, %c0_109] : memref<3x1x32xf32, #tpu.memory_space<vmem>>, vector<1x1x32xf32>
    %249 = vector.shape_cast %248 : vector<1x1x32xf32> to vector<1x32xf32>
    %250 = vector.broadcast %249 : vector<1x32xf32> to vector<16x32xf32>
    %251 = arith.addf %247, %250 : vector<16x32xf32>
    %252 = arith.addf %224, %251 : vector<16x32xf32>
    %c0_110 = arith.constant 0 : index
    %c0_111 = arith.constant 0 : index
    %c0_112 = arith.constant 0 : index
    %253 = vector.load %arg14[%c0_110, %c0_111, %c0_112] : memref<3x1x32xf32, #tpu.memory_space<vmem>>, vector<1x1x32xf32>
    %254 = vector.shape_cast %253 : vector<1x1x32xf32> to vector<1x32xf32>
    %c0_113 = arith.constant 0 : index
    %c0_114 = arith.constant 0 : index
    %c0_115 = arith.constant 0 : index
    %255 = vector.load %arg15[%c0_113, %c0_114, %c0_115] : memref<3x1x32xf32, #tpu.memory_space<vmem>>, vector<1x1x32xf32>
    %256 = vector.shape_cast %255 : vector<1x1x32xf32> to vector<1x32xf32>
    %cst_116 = arith.constant dense<0.000000e+00> : vector<16xf32>
    %257 = vector.multi_reduction <add>, %252, %cst_116 [1] : vector<16x32xf32> to vector<16xf32>
    %258 = vector.shape_cast %257 : vector<16xf32> to vector<16x1xf32>
    %cst_117 = arith.constant 3.200000e+01 : f32
    %259 = vector.broadcast %cst_117 : f32 to vector<16x1xf32>
    %260 = arith.divf %258, %259 : vector<16x1xf32>
    %261 = vector.broadcast %260 : vector<16x1xf32> to vector<16x32xf32>
    %262 = arith.subf %252, %261 : vector<16x32xf32>
    %263 = arith.mulf %262, %262 : vector<16x32xf32>
    %cst_118 = arith.constant dense<0.000000e+00> : vector<16xf32>
    %264 = vector.multi_reduction <add>, %263, %cst_118 [1] : vector<16x32xf32> to vector<16xf32>
    %265 = vector.shape_cast %264 : vector<16xf32> to vector<16x1xf32>
    %cst_119 = arith.constant 3.200000e+01 : f32
    %266 = vector.broadcast %cst_119 : f32 to vector<16x1xf32>
    %267 = arith.divf %265, %266 : vector<16x1xf32>
    %cst_120 = arith.constant 9.99999996E-13 : f32
    %268 = vector.broadcast %cst_120 : f32 to vector<16x1xf32>
    %269 = arith.addf %267, %268 : vector<16x1xf32>
    %270 = math.rsqrt %269 : vector<16x1xf32>
    %271 = vector.broadcast %270 : vector<16x1xf32> to vector<16x32xf32>
    %272 = arith.mulf %262, %271 : vector<16x32xf32>
    %273 = vector.broadcast %254 : vector<1x32xf32> to vector<16x32xf32>
    %274 = arith.mulf %272, %273 : vector<16x32xf32>
    %275 = vector.broadcast %256 : vector<1x32xf32> to vector<16x32xf32>
    %276 = arith.addf %274, %275 : vector<16x32xf32>
    %c1_121 = arith.constant 1 : index
    %c0_122 = arith.constant 0 : index
    %c0_123 = arith.constant 0 : index
    %277 = vector.load %arg4[%c1_121, %c0_122, %c0_123] : memref<3x32x96xf32, #tpu.memory_space<vmem>>, vector<1x32x96xf32>
    %278 = vector.shape_cast %277 : vector<1x32x96xf32> to vector<32x96xf32>
    %cst_124 = arith.constant dense<0.000000e+00> : vector<16x96xf32>
    %279 = tpu.matmul %276, %278, %cst_124 {dimension_numbers = #tpu.dot_dimension_numbers<[1], [0], [0], [1], [0, 0, 1, 1], [], []>} : vector<16x32xf32>, vector<32x96xf32>, vector<16x96xf32> -> vector<16x96xf32>
    %c1_125 = arith.constant 1 : index
    %c0_126 = arith.constant 0 : index
    %c0_127 = arith.constant 0 : index
    %280 = vector.load %arg5[%c1_125, %c0_126, %c0_127] : memref<3x1x96xf32, #tpu.memory_space<vmem>>, vector<1x1x96xf32>
    %281 = vector.shape_cast %280 : vector<1x1x96xf32> to vector<1x96xf32>
    %282 = vector.broadcast %281 : vector<1x96xf32> to vector<16x96xf32>
    %283 = arith.addf %279, %282 : vector<16x96xf32>
    %c0_128 = arith.constant 0 : index
    %c0_129 = arith.constant 0 : index
    %284 = vector.load %arg1[%c0_128, %c0_129] : memref<2x8xf32, #tpu.memory_space<vmem>>, vector<1x8xf32>
    %285 = vector.extract_strided_slice %283 {offsets = [0, 0], sizes = [8, 8], strides = [1, 1]} : vector<16x96xf32> to vector<8x8xf32>
    %286 = vector.extract_strided_slice %283 {offsets = [0, 32], sizes = [8, 8], strides = [1, 1]} : vector<16x96xf32> to vector<8x8xf32>
    %287 = vector.extract_strided_slice %283 {offsets = [0, 64], sizes = [8, 8], strides = [1, 1]} : vector<16x96xf32> to vector<8x8xf32>
    %cst_130 = arith.constant dense<0.000000e+00> : vector<8x8xf32>
    %288 = tpu.matmul %285, %286, %cst_130 {dimension_numbers = #tpu.dot_dimension_numbers<[1], [1], [0], [0], [0, 0, 1, 0], [], []>} : vector<8x8xf32>, vector<8x8xf32>, vector<8x8xf32> -> vector<8x8xf32>
    %cst_131 = arith.constant 0.353553385 : f32
    %289 = vector.broadcast %cst_131 : f32 to vector<8x8xf32>
    %290 = arith.mulf %288, %289 : vector<8x8xf32>
    %291 = vector.broadcast %284 : vector<1x8xf32> to vector<8x8xf32>
    %292 = arith.addf %290, %291 : vector<8x8xf32>
    %cst_132 = arith.constant dense<0xFF800000> : vector<8xf32>
    %293 = vector.multi_reduction <maximumf>, %292, %cst_132 [1] : vector<8x8xf32> to vector<8xf32>
    %294 = vector.shape_cast %293 : vector<8xf32> to vector<8x1xf32>
    %295 = vector.broadcast %294 : vector<8x1xf32> to vector<8x8xf32>
    %296 = arith.subf %292, %295 : vector<8x8xf32>
    %297 = math.exp %296 : vector<8x8xf32>
    %cst_133 = arith.constant dense<0.000000e+00> : vector<8xf32>
    %298 = vector.multi_reduction <add>, %297, %cst_133 [1] : vector<8x8xf32> to vector<8xf32>
    %299 = vector.shape_cast %298 : vector<8xf32> to vector<8x1xf32>
    %300 = tpu.reciprocal %299 {approx = true} : vector<8x1xf32> -> vector<8x1xf32>
    %301 = vector.broadcast %300 : vector<8x1xf32> to vector<8x8xf32>
    %302 = arith.mulf %297, %301 : vector<8x8xf32>
    %cst_134 = arith.constant dense<0.000000e+00> : vector<8x8xf32>
    %303 = tpu.matmul %302, %287, %cst_134 {dimension_numbers = #tpu.dot_dimension_numbers<[1], [0], [0], [1], [0, 0, 1, 1], [], []>} : vector<8x8xf32>, vector<8x8xf32>, vector<8x8xf32> -> vector<8x8xf32>
    %c0_135 = arith.constant 0 : index
    %c0_136 = arith.constant 0 : index
    %304 = vector.load %arg21[%c0_135, %c0_136] : memref<16x32xf32, #tpu.memory_space<vmem>>, vector<8x8xf32>
    tpu.vector_store %arg21[%c0_135, %c0_136], %303 {strides = array<i32>} : memref<16x32xf32, #tpu.memory_space<vmem>>, vector<8x8xf32>,
    %305 = vector.extract_strided_slice %283 {offsets = [0, 8], sizes = [8, 8], strides = [1, 1]} : vector<16x96xf32> to vector<8x8xf32>
    %306 = vector.extract_strided_slice %283 {offsets = [0, 40], sizes = [8, 8], strides = [1, 1]} : vector<16x96xf32> to vector<8x8xf32>
    %307 = vector.extract_strided_slice %283 {offsets = [0, 72], sizes = [8, 8], strides = [1, 1]} : vector<16x96xf32> to vector<8x8xf32>
    %cst_137 = arith.constant dense<0.000000e+00> : vector<8x8xf32>
    %308 = tpu.matmul %305, %306, %cst_137 {dimension_numbers = #tpu.dot_dimension_numbers<[1], [1], [0], [0], [0, 0, 1, 0], [], []>} : vector<8x8xf32>, vector<8x8xf32>, vector<8x8xf32> -> vector<8x8xf32>
    %cst_138 = arith.constant 0.353553385 : f32
    %309 = vector.broadcast %cst_138 : f32 to vector<8x8xf32>
    %310 = arith.mulf %308, %309 : vector<8x8xf32>
    %311 = vector.broadcast %284 : vector<1x8xf32> to vector<8x8xf32>
    %312 = arith.addf %310, %311 : vector<8x8xf32>
    %cst_139 = arith.constant dense<0xFF800000> : vector<8xf32>
    %313 = vector.multi_reduction <maximumf>, %312, %cst_139 [1] : vector<8x8xf32> to vector<8xf32>
    %314 = vector.shape_cast %313 : vector<8xf32> to vector<8x1xf32>
    %315 = vector.broadcast %314 : vector<8x1xf32> to vector<8x8xf32>
    %316 = arith.subf %312, %315 : vector<8x8xf32>
    %317 = math.exp %316 : vector<8x8xf32>
    %cst_140 = arith.constant dense<0.000000e+00> : vector<8xf32>
    %318 = vector.multi_reduction <add>, %317, %cst_140 [1] : vector<8x8xf32> to vector<8xf32>
    %319 = vector.shape_cast %318 : vector<8xf32> to vector<8x1xf32>
    %320 = tpu.reciprocal %319 {approx = true} : vector<8x1xf32> -> vector<8x1xf32>
    %321 = vector.broadcast %320 : vector<8x1xf32> to vector<8x8xf32>
    %322 = arith.mulf %317, %321 : vector<8x8xf32>
    %cst_141 = arith.constant dense<0.000000e+00> : vector<8x8xf32>
    %323 = tpu.matmul %322, %307, %cst_141 {dimension_numbers = #tpu.dot_dimension_numbers<[1], [0], [0], [1], [0, 0, 1, 1], [], []>} : vector<8x8xf32>, vector<8x8xf32>, vector<8x8xf32> -> vector<8x8xf32>
    %c0_142 = arith.constant 0 : index
    %c8_143 = arith.constant 8 : index
    %324 = vector.load %arg21[%c0_142, %c8_143] : memref<16x32xf32, #tpu.memory_space<vmem>>, vector<8x8xf32>
    tpu.vector_store %arg21[%c0_142, %c8_143], %323 {strides = array<i32>} : memref<16x32xf32, #tpu.memory_space<vmem>>, vector<8x8xf32>,
    %325 = vector.extract_strided_slice %283 {offsets = [0, 16], sizes = [8, 8], strides = [1, 1]} : vector<16x96xf32> to vector<8x8xf32>
    %326 = vector.extract_strided_slice %283 {offsets = [0, 48], sizes = [8, 8], strides = [1, 1]} : vector<16x96xf32> to vector<8x8xf32>
    %327 = vector.extract_strided_slice %283 {offsets = [0, 80], sizes = [8, 8], strides = [1, 1]} : vector<16x96xf32> to vector<8x8xf32>
    %cst_144 = arith.constant dense<0.000000e+00> : vector<8x8xf32>
    %328 = tpu.matmul %325, %326, %cst_144 {dimension_numbers = #tpu.dot_dimension_numbers<[1], [1], [0], [0], [0, 0, 1, 0], [], []>} : vector<8x8xf32>, vector<8x8xf32>, vector<8x8xf32> -> vector<8x8xf32>
    %cst_145 = arith.constant 0.353553385 : f32
    %329 = vector.broadcast %cst_145 : f32 to vector<8x8xf32>
    %330 = arith.mulf %328, %329 : vector<8x8xf32>
    %331 = vector.broadcast %284 : vector<1x8xf32> to vector<8x8xf32>
    %332 = arith.addf %330, %331 : vector<8x8xf32>
    %cst_146 = arith.constant dense<0xFF800000> : vector<8xf32>
    %333 = vector.multi_reduction <maximumf>, %332, %cst_146 [1] : vector<8x8xf32> to vector<8xf32>
    %334 = vector.shape_cast %333 : vector<8xf32> to vector<8x1xf32>
    %335 = vector.broadcast %334 : vector<8x1xf32> to vector<8x8xf32>
    %336 = arith.subf %332, %335 : vector<8x8xf32>
    %337 = math.exp %336 : vector<8x8xf32>
    %cst_147 = arith.constant dense<0.000000e+00> : vector<8xf32>
    %338 = vector.multi_reduction <add>, %337, %cst_147 [1] : vector<8x8xf32> to vector<8xf32>
    %339 = vector.shape_cast %338 : vector<8xf32> to vector<8x1xf32>
    %340 = tpu.reciprocal %339 {approx = true} : vector<8x1xf32> -> vector<8x1xf32>
    %341 = vector.broadcast %340 : vector<8x1xf32> to vector<8x8xf32>
    %342 = arith.mulf %337, %341 : vector<8x8xf32>
    %cst_148 = arith.constant dense<0.000000e+00> : vector<8x8xf32>
    %343 = tpu.matmul %342, %327, %cst_148 {dimension_numbers = #tpu.dot_dimension_numbers<[1], [0], [0], [1], [0, 0, 1, 1], [], []>} : vector<8x8xf32>, vector<8x8xf32>, vector<8x8xf32> -> vector<8x8xf32>
    %c0_149 = arith.constant 0 : index
    %c16_150 = arith.constant 16 : index
    %344 = vector.load %arg21[%c0_149, %c16_150] : memref<16x32xf32, #tpu.memory_space<vmem>>, vector<8x8xf32>
    tpu.vector_store %arg21[%c0_149, %c16_150], %343 {strides = array<i32>} : memref<16x32xf32, #tpu.memory_space<vmem>>, vector<8x8xf32>,
    %345 = vector.extract_strided_slice %283 {offsets = [0, 24], sizes = [8, 8], strides = [1, 1]} : vector<16x96xf32> to vector<8x8xf32>
    %346 = vector.extract_strided_slice %283 {offsets = [0, 56], sizes = [8, 8], strides = [1, 1]} : vector<16x96xf32> to vector<8x8xf32>
    %347 = vector.extract_strided_slice %283 {offsets = [0, 88], sizes = [8, 8], strides = [1, 1]} : vector<16x96xf32> to vector<8x8xf32>
    %cst_151 = arith.constant dense<0.000000e+00> : vector<8x8xf32>
    %348 = tpu.matmul %345, %346, %cst_151 {dimension_numbers = #tpu.dot_dimension_numbers<[1], [1], [0], [0], [0, 0, 1, 0], [], []>} : vector<8x8xf32>, vector<8x8xf32>, vector<8x8xf32> -> vector<8x8xf32>
    %cst_152 = arith.constant 0.353553385 : f32
    %349 = vector.broadcast %cst_152 : f32 to vector<8x8xf32>
    %350 = arith.mulf %348, %349 : vector<8x8xf32>
    %351 = vector.broadcast %284 : vector<1x8xf32> to vector<8x8xf32>
    %352 = arith.addf %350, %351 : vector<8x8xf32>
    %cst_153 = arith.constant dense<0xFF800000> : vector<8xf32>
    %353 = vector.multi_reduction <maximumf>, %352, %cst_153 [1] : vector<8x8xf32> to vector<8xf32>
    %354 = vector.shape_cast %353 : vector<8xf32> to vector<8x1xf32>
    %355 = vector.broadcast %354 : vector<8x1xf32> to vector<8x8xf32>
    %356 = arith.subf %352, %355 : vector<8x8xf32>
    %357 = math.exp %356 : vector<8x8xf32>
    %cst_154 = arith.constant dense<0.000000e+00> : vector<8xf32>
    %358 = vector.multi_reduction <add>, %357, %cst_154 [1] : vector<8x8xf32> to vector<8xf32>
    %359 = vector.shape_cast %358 : vector<8xf32> to vector<8x1xf32>
    %360 = tpu.reciprocal %359 {approx = true} : vector<8x1xf32> -> vector<8x1xf32>
    %361 = vector.broadcast %360 : vector<8x1xf32> to vector<8x8xf32>
    %362 = arith.mulf %357, %361 : vector<8x8xf32>
    %cst_155 = arith.constant dense<0.000000e+00> : vector<8x8xf32>
    %363 = tpu.matmul %362, %347, %cst_155 {dimension_numbers = #tpu.dot_dimension_numbers<[1], [0], [0], [1], [0, 0, 1, 1], [], []>} : vector<8x8xf32>, vector<8x8xf32>, vector<8x8xf32> -> vector<8x8xf32>
    %c0_156 = arith.constant 0 : index
    %c24_157 = arith.constant 24 : index
    %364 = vector.load %arg21[%c0_156, %c24_157] : memref<16x32xf32, #tpu.memory_space<vmem>>, vector<8x8xf32>
    tpu.vector_store %arg21[%c0_156, %c24_157], %363 {strides = array<i32>} : memref<16x32xf32, #tpu.memory_space<vmem>>, vector<8x8xf32>,
    %c1_158 = arith.constant 1 : index
    %c0_159 = arith.constant 0 : index
    %365 = vector.load %arg1[%c1_158, %c0_159] : memref<2x8xf32, #tpu.memory_space<vmem>>, vector<1x8xf32>
    %366 = vector.extract_strided_slice %283 {offsets = [8, 0], sizes = [8, 8], strides = [1, 1]} : vector<16x96xf32> to vector<8x8xf32>
    %367 = vector.extract_strided_slice %283 {offsets = [8, 32], sizes = [8, 8], strides = [1, 1]} : vector<16x96xf32> to vector<8x8xf32>
    %368 = vector.extract_strided_slice %283 {offsets = [8, 64], sizes = [8, 8], strides = [1, 1]} : vector<16x96xf32> to vector<8x8xf32>
    %cst_160 = arith.constant dense<0.000000e+00> : vector<8x8xf32>
    %369 = tpu.matmul %366, %367, %cst_160 {dimension_numbers = #tpu.dot_dimension_numbers<[1], [1], [0], [0], [0, 0, 1, 0], [], []>} : vector<8x8xf32>, vector<8x8xf32>, vector<8x8xf32> -> vector<8x8xf32>
    %cst_161 = arith.constant 0.353553385 : f32
    %370 = vector.broadcast %cst_161 : f32 to vector<8x8xf32>
    %371 = arith.mulf %369, %370 : vector<8x8xf32>
    %372 = vector.broadcast %365 : vector<1x8xf32> to vector<8x8xf32>
    %373 = arith.addf %371, %372 : vector<8x8xf32>
    %cst_162 = arith.constant dense<0xFF800000> : vector<8xf32>
    %374 = vector.multi_reduction <maximumf>, %373, %cst_162 [1] : vector<8x8xf32> to vector<8xf32>
    %375 = vector.shape_cast %374 : vector<8xf32> to vector<8x1xf32>
    %376 = vector.broadcast %375 : vector<8x1xf32> to vector<8x8xf32>
    %377 = arith.subf %373, %376 : vector<8x8xf32>
    %378 = math.exp %377 : vector<8x8xf32>
    %cst_163 = arith.constant dense<0.000000e+00> : vector<8xf32>
    %379 = vector.multi_reduction <add>, %378, %cst_163 [1] : vector<8x8xf32> to vector<8xf32>
    %380 = vector.shape_cast %379 : vector<8xf32> to vector<8x1xf32>
    %381 = tpu.reciprocal %380 {approx = true} : vector<8x1xf32> -> vector<8x1xf32>
    %382 = vector.broadcast %381 : vector<8x1xf32> to vector<8x8xf32>
    %383 = arith.mulf %378, %382 : vector<8x8xf32>
    %cst_164 = arith.constant dense<0.000000e+00> : vector<8x8xf32>
    %384 = tpu.matmul %383, %368, %cst_164 {dimension_numbers = #tpu.dot_dimension_numbers<[1], [0], [0], [1], [0, 0, 1, 1], [], []>} : vector<8x8xf32>, vector<8x8xf32>, vector<8x8xf32> -> vector<8x8xf32>
    %c8_165 = arith.constant 8 : index
    %c0_166 = arith.constant 0 : index
    %385 = vector.load %arg21[%c8_165, %c0_166] : memref<16x32xf32, #tpu.memory_space<vmem>>, vector<8x8xf32>
    tpu.vector_store %arg21[%c8_165, %c0_166], %384 {strides = array<i32>} : memref<16x32xf32, #tpu.memory_space<vmem>>, vector<8x8xf32>,
    %386 = vector.extract_strided_slice %283 {offsets = [8, 8], sizes = [8, 8], strides = [1, 1]} : vector<16x96xf32> to vector<8x8xf32>
    %387 = vector.extract_strided_slice %283 {offsets = [8, 40], sizes = [8, 8], strides = [1, 1]} : vector<16x96xf32> to vector<8x8xf32>
    %388 = vector.extract_strided_slice %283 {offsets = [8, 72], sizes = [8, 8], strides = [1, 1]} : vector<16x96xf32> to vector<8x8xf32>
    %cst_167 = arith.constant dense<0.000000e+00> : vector<8x8xf32>
    %389 = tpu.matmul %386, %387, %cst_167 {dimension_numbers = #tpu.dot_dimension_numbers<[1], [1], [0], [0], [0, 0, 1, 0], [], []>} : vector<8x8xf32>, vector<8x8xf32>, vector<8x8xf32> -> vector<8x8xf32>
    %cst_168 = arith.constant 0.353553385 : f32
    %390 = vector.broadcast %cst_168 : f32 to vector<8x8xf32>
    %391 = arith.mulf %389, %390 : vector<8x8xf32>
    %392 = vector.broadcast %365 : vector<1x8xf32> to vector<8x8xf32>
    %393 = arith.addf %391, %392 : vector<8x8xf32>
    %cst_169 = arith.constant dense<0xFF800000> : vector<8xf32>
    %394 = vector.multi_reduction <maximumf>, %393, %cst_169 [1] : vector<8x8xf32> to vector<8xf32>
    %395 = vector.shape_cast %394 : vector<8xf32> to vector<8x1xf32>
    %396 = vector.broadcast %395 : vector<8x1xf32> to vector<8x8xf32>
    %397 = arith.subf %393, %396 : vector<8x8xf32>
    %398 = math.exp %397 : vector<8x8xf32>
    %cst_170 = arith.constant dense<0.000000e+00> : vector<8xf32>
    %399 = vector.multi_reduction <add>, %398, %cst_170 [1] : vector<8x8xf32> to vector<8xf32>
    %400 = vector.shape_cast %399 : vector<8xf32> to vector<8x1xf32>
    %401 = tpu.reciprocal %400 {approx = true} : vector<8x1xf32> -> vector<8x1xf32>
    %402 = vector.broadcast %401 : vector<8x1xf32> to vector<8x8xf32>
    %403 = arith.mulf %398, %402 : vector<8x8xf32>
    %cst_171 = arith.constant dense<0.000000e+00> : vector<8x8xf32>
    %404 = tpu.matmul %403, %388, %cst_171 {dimension_numbers = #tpu.dot_dimension_numbers<[1], [0], [0], [1], [0, 0, 1, 1], [], []>} : vector<8x8xf32>, vector<8x8xf32>, vector<8x8xf32> -> vector<8x8xf32>
    %c8_172 = arith.constant 8 : index
    %c8_173 = arith.constant 8 : index
    %405 = vector.load %arg21[%c8_172, %c8_173] : memref<16x32xf32, #tpu.memory_space<vmem>>, vector<8x8xf32>
    tpu.vector_store %arg21[%c8_172, %c8_173], %404 {strides = array<i32>} : memref<16x32xf32, #tpu.memory_space<vmem>>, vector<8x8xf32>,
    %406 = vector.extract_strided_slice %283 {offsets = [8, 16], sizes = [8, 8], strides = [1, 1]} : vector<16x96xf32> to vector<8x8xf32>
    %407 = vector.extract_strided_slice %283 {offsets = [8, 48], sizes = [8, 8], strides = [1, 1]} : vector<16x96xf32> to vector<8x8xf32>
    %408 = vector.extract_strided_slice %283 {offsets = [8, 80], sizes = [8, 8], strides = [1, 1]} : vector<16x96xf32> to vector<8x8xf32>
    %cst_174 = arith.constant dense<0.000000e+00> : vector<8x8xf32>
    %409 = tpu.matmul %406, %407, %cst_174 {dimension_numbers = #tpu.dot_dimension_numbers<[1], [1], [0], [0], [0, 0, 1, 0], [], []>} : vector<8x8xf32>, vector<8x8xf32>, vector<8x8xf32> -> vector<8x8xf32>
    %cst_175 = arith.constant 0.353553385 : f32
    %410 = vector.broadcast %cst_175 : f32 to vector<8x8xf32>
    %411 = arith.mulf %409, %410 : vector<8x8xf32>
    %412 = vector.broadcast %365 : vector<1x8xf32> to vector<8x8xf32>
    %413 = arith.addf %411, %412 : vector<8x8xf32>
    %cst_176 = arith.constant dense<0xFF800000> : vector<8xf32>
    %414 = vector.multi_reduction <maximumf>, %413, %cst_176 [1] : vector<8x8xf32> to vector<8xf32>
    %415 = vector.shape_cast %414 : vector<8xf32> to vector<8x1xf32>
    %416 = vector.broadcast %415 : vector<8x1xf32> to vector<8x8xf32>
    %417 = arith.subf %413, %416 : vector<8x8xf32>
    %418 = math.exp %417 : vector<8x8xf32>
    %cst_177 = arith.constant dense<0.000000e+00> : vector<8xf32>
    %419 = vector.multi_reduction <add>, %418, %cst_177 [1] : vector<8x8xf32> to vector<8xf32>
    %420 = vector.shape_cast %419 : vector<8xf32> to vector<8x1xf32>
    %421 = tpu.reciprocal %420 {approx = true} : vector<8x1xf32> -> vector<8x1xf32>
    %422 = vector.broadcast %421 : vector<8x1xf32> to vector<8x8xf32>
    %423 = arith.mulf %418, %422 : vector<8x8xf32>
    %cst_178 = arith.constant dense<0.000000e+00> : vector<8x8xf32>
    %424 = tpu.matmul %423, %408, %cst_178 {dimension_numbers = #tpu.dot_dimension_numbers<[1], [0], [0], [1], [0, 0, 1, 1], [], []>} : vector<8x8xf32>, vector<8x8xf32>, vector<8x8xf32> -> vector<8x8xf32>
    %c8_179 = arith.constant 8 : index
    %c16_180 = arith.constant 16 : index
    %425 = vector.load %arg21[%c8_179, %c16_180] : memref<16x32xf32, #tpu.memory_space<vmem>>, vector<8x8xf32>
    tpu.vector_store %arg21[%c8_179, %c16_180], %424 {strides = array<i32>} : memref<16x32xf32, #tpu.memory_space<vmem>>, vector<8x8xf32>,
    %426 = vector.extract_strided_slice %283 {offsets = [8, 24], sizes = [8, 8], strides = [1, 1]} : vector<16x96xf32> to vector<8x8xf32>
    %427 = vector.extract_strided_slice %283 {offsets = [8, 56], sizes = [8, 8], strides = [1, 1]} : vector<16x96xf32> to vector<8x8xf32>
    %428 = vector.extract_strided_slice %283 {offsets = [8, 88], sizes = [8, 8], strides = [1, 1]} : vector<16x96xf32> to vector<8x8xf32>
    %cst_181 = arith.constant dense<0.000000e+00> : vector<8x8xf32>
    %429 = tpu.matmul %426, %427, %cst_181 {dimension_numbers = #tpu.dot_dimension_numbers<[1], [1], [0], [0], [0, 0, 1, 0], [], []>} : vector<8x8xf32>, vector<8x8xf32>, vector<8x8xf32> -> vector<8x8xf32>
    %cst_182 = arith.constant 0.353553385 : f32
    %430 = vector.broadcast %cst_182 : f32 to vector<8x8xf32>
    %431 = arith.mulf %429, %430 : vector<8x8xf32>
    %432 = vector.broadcast %365 : vector<1x8xf32> to vector<8x8xf32>
    %433 = arith.addf %431, %432 : vector<8x8xf32>
    %cst_183 = arith.constant dense<0xFF800000> : vector<8xf32>
    %434 = vector.multi_reduction <maximumf>, %433, %cst_183 [1] : vector<8x8xf32> to vector<8xf32>
    %435 = vector.shape_cast %434 : vector<8xf32> to vector<8x1xf32>
    %436 = vector.broadcast %435 : vector<8x1xf32> to vector<8x8xf32>
    %437 = arith.subf %433, %436 : vector<8x8xf32>
    %438 = math.exp %437 : vector<8x8xf32>
    %cst_184 = arith.constant dense<0.000000e+00> : vector<8xf32>
    %439 = vector.multi_reduction <add>, %438, %cst_184 [1] : vector<8x8xf32> to vector<8xf32>
    %440 = vector.shape_cast %439 : vector<8xf32> to vector<8x1xf32>
    %441 = tpu.reciprocal %440 {approx = true} : vector<8x1xf32> -> vector<8x1xf32>
    %442 = vector.broadcast %441 : vector<8x1xf32> to vector<8x8xf32>
    %443 = arith.mulf %438, %442 : vector<8x8xf32>
    %cst_185 = arith.constant dense<0.000000e+00> : vector<8x8xf32>
    %444 = tpu.matmul %443, %428, %cst_185 {dimension_numbers = #tpu.dot_dimension_numbers<[1], [0], [0], [1], [0, 0, 1, 1], [], []>} : vector<8x8xf32>, vector<8x8xf32>, vector<8x8xf32> -> vector<8x8xf32>
    %c8_186 = arith.constant 8 : index
    %c24_187 = arith.constant 24 : index
    %445 = vector.load %arg21[%c8_186, %c24_187] : memref<16x32xf32, #tpu.memory_space<vmem>>, vector<8x8xf32>
    tpu.vector_store %arg21[%c8_186, %c24_187], %444 {strides = array<i32>} : memref<16x32xf32, #tpu.memory_space<vmem>>, vector<8x8xf32>,
    %c0_188 = arith.constant 0 : index
    %c0_189 = arith.constant 0 : index
    %446 = vector.load %arg21[%c0_188, %c0_189] : memref<16x32xf32, #tpu.memory_space<vmem>>, vector<16x32xf32>
    %c1_190 = arith.constant 1 : index
    %c0_191 = arith.constant 0 : index
    %c0_192 = arith.constant 0 : index
    %447 = vector.load %arg6[%c1_190, %c0_191, %c0_192] : memref<3x32x32xf32, #tpu.memory_space<vmem>>, vector<1x32x32xf32>
    %448 = vector.shape_cast %447 : vector<1x32x32xf32> to vector<32x32xf32>
    %cst_193 = arith.constant dense<0.000000e+00> : vector<16x32xf32>
    %449 = tpu.matmul %446, %448, %cst_193 {dimension_numbers = #tpu.dot_dimension_numbers<[1], [0], [0], [1], [0, 0, 1, 1], [], []>} : vector<16x32xf32>, vector<32x32xf32>, vector<16x32xf32> -> vector<16x32xf32>
    %c1_194 = arith.constant 1 : index
    %c0_195 = arith.constant 0 : index
    %c0_196 = arith.constant 0 : index
    %450 = vector.load %arg7[%c1_194, %c0_195, %c0_196] : memref<3x1x32xf32, #tpu.memory_space<vmem>>, vector<1x1x32xf32>
    %451 = vector.shape_cast %450 : vector<1x1x32xf32> to vector<1x32xf32>
    %452 = vector.broadcast %451 : vector<1x32xf32> to vector<16x32xf32>
    %453 = arith.addf %449, %452 : vector<16x32xf32>
    %454 = arith.addf %276, %453 : vector<16x32xf32>
    %c1_197 = arith.constant 1 : index
    %c0_198 = arith.constant 0 : index
    %c0_199 = arith.constant 0 : index
    %455 = vector.load %arg8[%c1_197, %c0_198, %c0_199] : memref<3x1x32xf32, #tpu.memory_space<vmem>>, vector<1x1x32xf32>
    %456 = vector.shape_cast %455 : vector<1x1x32xf32> to vector<1x32xf32>
    %c1_200 = arith.constant 1 : index
    %c0_201 = arith.constant 0 : index
    %c0_202 = arith.constant 0 : index
    %457 = vector.load %arg9[%c1_200, %c0_201, %c0_202] : memref<3x1x32xf32, #tpu.memory_space<vmem>>, vector<1x1x32xf32>
    %458 = vector.shape_cast %457 : vector<1x1x32xf32> to vector<1x32xf32>
    %cst_203 = arith.constant dense<0.000000e+00> : vector<16xf32>
    %459 = vector.multi_reduction <add>, %454, %cst_203 [1] : vector<16x32xf32> to vector<16xf32>
    %460 = vector.shape_cast %459 : vector<16xf32> to vector<16x1xf32>
    %cst_204 = arith.constant 3.200000e+01 : f32
    %461 = vector.broadcast %cst_204 : f32 to vector<16x1xf32>
    %462 = arith.divf %460, %461 : vector<16x1xf32>
    %463 = vector.broadcast %462 : vector<16x1xf32> to vector<16x32xf32>
    %464 = arith.subf %454, %463 : vector<16x32xf32>
    %465 = arith.mulf %464, %464 : vector<16x32xf32>
    %cst_205 = arith.constant dense<0.000000e+00> : vector<16xf32>
    %466 = vector.multi_reduction <add>, %465, %cst_205 [1] : vector<16x32xf32> to vector<16xf32>
    %467 = vector.shape_cast %466 : vector<16xf32> to vector<16x1xf32>
    %cst_206 = arith.constant 3.200000e+01 : f32
    %468 = vector.broadcast %cst_206 : f32 to vector<16x1xf32>
    %469 = arith.divf %467, %468 : vector<16x1xf32>
    %cst_207 = arith.constant 9.99999996E-13 : f32
    %470 = vector.broadcast %cst_207 : f32 to vector<16x1xf32>
    %471 = arith.addf %469, %470 : vector<16x1xf32>
    %472 = math.rsqrt %471 : vector<16x1xf32>
    %473 = vector.broadcast %472 : vector<16x1xf32> to vector<16x32xf32>
    %474 = arith.mulf %464, %473 : vector<16x32xf32>
    %475 = vector.broadcast %456 : vector<1x32xf32> to vector<16x32xf32>
    %476 = arith.mulf %474, %475 : vector<16x32xf32>
    %477 = vector.broadcast %458 : vector<1x32xf32> to vector<16x32xf32>
    %478 = arith.addf %476, %477 : vector<16x32xf32>
    %c1_208 = arith.constant 1 : index
    %c0_209 = arith.constant 0 : index
    %c0_210 = arith.constant 0 : index
    %479 = vector.load %arg10[%c1_208, %c0_209, %c0_210] : memref<3x32x64xf32, #tpu.memory_space<vmem>>, vector<1x32x64xf32>
    %480 = vector.shape_cast %479 : vector<1x32x64xf32> to vector<32x64xf32>
    %cst_211 = arith.constant dense<0.000000e+00> : vector<16x64xf32>
    %481 = tpu.matmul %478, %480, %cst_211 {dimension_numbers = #tpu.dot_dimension_numbers<[1], [0], [0], [1], [0, 0, 1, 1], [], []>} : vector<16x32xf32>, vector<32x64xf32>, vector<16x64xf32> -> vector<16x64xf32>
    %c1_212 = arith.constant 1 : index
    %c0_213 = arith.constant 0 : index
    %c0_214 = arith.constant 0 : index
    %482 = vector.load %arg11[%c1_212, %c0_213, %c0_214] : memref<3x1x64xf32, #tpu.memory_space<vmem>>, vector<1x1x64xf32>
    %483 = vector.shape_cast %482 : vector<1x1x64xf32> to vector<1x64xf32>
    %484 = vector.broadcast %483 : vector<1x64xf32> to vector<16x64xf32>
    %485 = arith.addf %481, %484 : vector<16x64xf32>
    %486 = arith.mulf %485, %485 : vector<16x64xf32>
    %487 = arith.mulf %485, %486 : vector<16x64xf32>
    %cst_215 = arith.constant 4.471500e-02 : f32
    %488 = vector.broadcast %cst_215 : f32 to vector<16x64xf32>
    %489 = arith.mulf %488, %487 : vector<16x64xf32>
    %490 = arith.addf %485, %489 : vector<16x64xf32>
    %cst_216 = arith.constant 0.797884583 : f32
    %491 = vector.broadcast %cst_216 : f32 to vector<16x64xf32>
    %492 = arith.mulf %491, %490 : vector<16x64xf32>
    %493 = math.tanh %492 : vector<16x64xf32>
    %cst_217 = arith.constant 1.000000e+00 : f32
    %494 = vector.broadcast %cst_217 : f32 to vector<16x64xf32>
    %495 = arith.addf %494, %493 : vector<16x64xf32>
    %cst_218 = arith.constant 5.000000e-01 : f32
    %496 = vector.broadcast %cst_218 : f32 to vector<16x64xf32>
    %497 = arith.mulf %496, %495 : vector<16x64xf32>
    %498 = arith.mulf %485, %497 : vector<16x64xf32>
    %c1_219 = arith.constant 1 : index
    %c0_220 = arith.constant 0 : index
    %c0_221 = arith.constant 0 : index
    %499 = vector.load %arg12[%c1_219, %c0_220, %c0_221] : memref<3x64x32xf32, #tpu.memory_space<vmem>>, vector<1x64x32xf32>
    %500 = vector.shape_cast %499 : vector<1x64x32xf32> to vector<64x32xf32>
    %cst_222 = arith.constant dense<0.000000e+00> : vector<16x32xf32>
    %501 = tpu.matmul %498, %500, %cst_222 {dimension_numbers = #tpu.dot_dimension_numbers<[1], [0], [0], [1], [0, 0, 1, 1], [], []>} : vector<16x64xf32>, vector<64x32xf32>, vector<16x32xf32> -> vector<16x32xf32>
    %c1_223 = arith.constant 1 : index
    %c0_224 = arith.constant 0 : index
    %c0_225 = arith.constant 0 : index
    %502 = vector.load %arg13[%c1_223, %c0_224, %c0_225] : memref<3x1x32xf32, #tpu.memory_space<vmem>>, vector<1x1x32xf32>
    %503 = vector.shape_cast %502 : vector<1x1x32xf32> to vector<1x32xf32>
    %504 = vector.broadcast %503 : vector<1x32xf32> to vector<16x32xf32>
    %505 = arith.addf %501, %504 : vector<16x32xf32>
    %506 = arith.addf %478, %505 : vector<16x32xf32>
    %c1_226 = arith.constant 1 : index
    %c0_227 = arith.constant 0 : index
    %c0_228 = arith.constant 0 : index
    %507 = vector.load %arg14[%c1_226, %c0_227, %c0_228] : memref<3x1x32xf32, #tpu.memory_space<vmem>>, vector<1x1x32xf32>
    %508 = vector.shape_cast %507 : vector<1x1x32xf32> to vector<1x32xf32>
    %c1_229 = arith.constant 1 : index
    %c0_230 = arith.constant 0 : index
    %c0_231 = arith.constant 0 : index
    %509 = vector.load %arg15[%c1_229, %c0_230, %c0_231] : memref<3x1x32xf32, #tpu.memory_space<vmem>>, vector<1x1x32xf32>
    %510 = vector.shape_cast %509 : vector<1x1x32xf32> to vector<1x32xf32>
    %cst_232 = arith.constant dense<0.000000e+00> : vector<16xf32>
    %511 = vector.multi_reduction <add>, %506, %cst_232 [1] : vector<16x32xf32> to vector<16xf32>
    %512 = vector.shape_cast %511 : vector<16xf32> to vector<16x1xf32>
    %cst_233 = arith.constant 3.200000e+01 : f32
    %513 = vector.broadcast %cst_233 : f32 to vector<16x1xf32>
    %514 = arith.divf %512, %513 : vector<16x1xf32>
    %515 = vector.broadcast %514 : vector<16x1xf32> to vector<16x32xf32>
    %516 = arith.subf %506, %515 : vector<16x32xf32>
    %517 = arith.mulf %516, %516 : vector<16x32xf32>
    %cst_234 = arith.constant dense<0.000000e+00> : vector<16xf32>
    %518 = vector.multi_reduction <add>, %517, %cst_234 [1] : vector<16x32xf32> to vector<16xf32>
    %519 = vector.shape_cast %518 : vector<16xf32> to vector<16x1xf32>
    %cst_235 = arith.constant 3.200000e+01 : f32
    %520 = vector.broadcast %cst_235 : f32 to vector<16x1xf32>
    %521 = arith.divf %519, %520 : vector<16x1xf32>
    %cst_236 = arith.constant 9.99999996E-13 : f32
    %522 = vector.broadcast %cst_236 : f32 to vector<16x1xf32>
    %523 = arith.addf %521, %522 : vector<16x1xf32>
    %524 = math.rsqrt %523 : vector<16x1xf32>
    %525 = vector.broadcast %524 : vector<16x1xf32> to vector<16x32xf32>
    %526 = arith.mulf %516, %525 : vector<16x32xf32>
    %527 = vector.broadcast %508 : vector<1x32xf32> to vector<16x32xf32>
    %528 = arith.mulf %526, %527 : vector<16x32xf32>
    %529 = vector.broadcast %510 : vector<1x32xf32> to vector<16x32xf32>
    %530 = arith.addf %528, %529 : vector<16x32xf32>
    %531 = vector.extract_strided_slice %530 {offsets = [0, 0], sizes = [1, 32], strides = [1, 1]} : vector<16x32xf32> to vector<1x32xf32>
    %532 = vector.extract_strided_slice %530 {offsets = [8, 0], sizes = [1, 32], strides = [1, 1]} : vector<16x32xf32> to vector<1x32xf32>
    %c2 = arith.constant 2 : index
    %c0_237 = arith.constant 0 : index
    %c0_238 = arith.constant 0 : index
    %533 = vector.load %arg4[%c2, %c0_237, %c0_238] : memref<3x32x96xf32, #tpu.memory_space<vmem>>, vector<1x32x96xf32>
    %534 = vector.shape_cast %533 : vector<1x32x96xf32> to vector<32x96xf32>
    %cst_239 = arith.constant dense<0.000000e+00> : vector<16x96xf32>
    %535 = tpu.matmul %530, %534, %cst_239 {dimension_numbers = #tpu.dot_dimension_numbers<[1], [0], [0], [1], [0, 0, 1, 1], [], []>} : vector<16x32xf32>, vector<32x96xf32>, vector<16x96xf32> -> vector<16x96xf32>
    %c2_240 = arith.constant 2 : index
    %c0_241 = arith.constant 0 : index
    %c0_242 = arith.constant 0 : index
    %536 = vector.load %arg5[%c2_240, %c0_241, %c0_242] : memref<3x1x96xf32, #tpu.memory_space<vmem>>, vector<1x1x96xf32>
    %537 = vector.shape_cast %536 : vector<1x1x96xf32> to vector<1x96xf32>
    %538 = vector.broadcast %537 : vector<1x96xf32> to vector<16x96xf32>
    %539 = arith.addf %535, %538 : vector<16x96xf32>
    %c0_243 = arith.constant 0 : index
    %c0_244 = arith.constant 0 : index
    %540 = vector.load %arg1[%c0_243, %c0_244] : memref<2x8xf32, #tpu.memory_space<vmem>>, vector<1x8xf32>
    %541 = vector.extract_strided_slice %539 {offsets = [0, 0], sizes = [8, 8], strides = [1, 1]} : vector<16x96xf32> to vector<8x8xf32>
    %542 = vector.extract_strided_slice %539 {offsets = [0, 32], sizes = [8, 8], strides = [1, 1]} : vector<16x96xf32> to vector<8x8xf32>
    %543 = vector.extract_strided_slice %539 {offsets = [0, 64], sizes = [8, 8], strides = [1, 1]} : vector<16x96xf32> to vector<8x8xf32>
    %cst_245 = arith.constant dense<0.000000e+00> : vector<8x8xf32>
    %544 = tpu.matmul %541, %542, %cst_245 {dimension_numbers = #tpu.dot_dimension_numbers<[1], [1], [0], [0], [0, 0, 1, 0], [], []>} : vector<8x8xf32>, vector<8x8xf32>, vector<8x8xf32> -> vector<8x8xf32>
    %cst_246 = arith.constant 0.353553385 : f32
    %545 = vector.broadcast %cst_246 : f32 to vector<8x8xf32>
    %546 = arith.mulf %544, %545 : vector<8x8xf32>
    %547 = vector.broadcast %540 : vector<1x8xf32> to vector<8x8xf32>
    %548 = arith.addf %546, %547 : vector<8x8xf32>
    %cst_247 = arith.constant dense<0xFF800000> : vector<8xf32>
    %549 = vector.multi_reduction <maximumf>, %548, %cst_247 [1] : vector<8x8xf32> to vector<8xf32>
    %550 = vector.shape_cast %549 : vector<8xf32> to vector<8x1xf32>
    %551 = vector.broadcast %550 : vector<8x1xf32> to vector<8x8xf32>
    %552 = arith.subf %548, %551 : vector<8x8xf32>
    %553 = math.exp %552 : vector<8x8xf32>
    %cst_248 = arith.constant dense<0.000000e+00> : vector<8xf32>
    %554 = vector.multi_reduction <add>, %553, %cst_248 [1] : vector<8x8xf32> to vector<8xf32>
    %555 = vector.shape_cast %554 : vector<8xf32> to vector<8x1xf32>
    %556 = tpu.reciprocal %555 {approx = true} : vector<8x1xf32> -> vector<8x1xf32>
    %557 = vector.broadcast %556 : vector<8x1xf32> to vector<8x8xf32>
    %558 = arith.mulf %553, %557 : vector<8x8xf32>
    %cst_249 = arith.constant dense<0.000000e+00> : vector<8x8xf32>
    %559 = tpu.matmul %558, %543, %cst_249 {dimension_numbers = #tpu.dot_dimension_numbers<[1], [0], [0], [1], [0, 0, 1, 1], [], []>} : vector<8x8xf32>, vector<8x8xf32>, vector<8x8xf32> -> vector<8x8xf32>
    %c0_250 = arith.constant 0 : index
    %c0_251 = arith.constant 0 : index
    %560 = vector.load %arg21[%c0_250, %c0_251] : memref<16x32xf32, #tpu.memory_space<vmem>>, vector<8x8xf32>
    tpu.vector_store %arg21[%c0_250, %c0_251], %559 {strides = array<i32>} : memref<16x32xf32, #tpu.memory_space<vmem>>, vector<8x8xf32>,
    %561 = vector.extract_strided_slice %539 {offsets = [0, 8], sizes = [8, 8], strides = [1, 1]} : vector<16x96xf32> to vector<8x8xf32>
    %562 = vector.extract_strided_slice %539 {offsets = [0, 40], sizes = [8, 8], strides = [1, 1]} : vector<16x96xf32> to vector<8x8xf32>
    %563 = vector.extract_strided_slice %539 {offsets = [0, 72], sizes = [8, 8], strides = [1, 1]} : vector<16x96xf32> to vector<8x8xf32>
    %cst_252 = arith.constant dense<0.000000e+00> : vector<8x8xf32>
    %564 = tpu.matmul %561, %562, %cst_252 {dimension_numbers = #tpu.dot_dimension_numbers<[1], [1], [0], [0], [0, 0, 1, 0], [], []>} : vector<8x8xf32>, vector<8x8xf32>, vector<8x8xf32> -> vector<8x8xf32>
    %cst_253 = arith.constant 0.353553385 : f32
    %565 = vector.broadcast %cst_253 : f32 to vector<8x8xf32>
    %566 = arith.mulf %564, %565 : vector<8x8xf32>
    %567 = vector.broadcast %540 : vector<1x8xf32> to vector<8x8xf32>
    %568 = arith.addf %566, %567 : vector<8x8xf32>
    %cst_254 = arith.constant dense<0xFF800000> : vector<8xf32>
    %569 = vector.multi_reduction <maximumf>, %568, %cst_254 [1] : vector<8x8xf32> to vector<8xf32>
    %570 = vector.shape_cast %569 : vector<8xf32> to vector<8x1xf32>
    %571 = vector.broadcast %570 : vector<8x1xf32> to vector<8x8xf32>
    %572 = arith.subf %568, %571 : vector<8x8xf32>
    %573 = math.exp %572 : vector<8x8xf32>
    %cst_255 = arith.constant dense<0.000000e+00> : vector<8xf32>
    %574 = vector.multi_reduction <add>, %573, %cst_255 [1] : vector<8x8xf32> to vector<8xf32>
    %575 = vector.shape_cast %574 : vector<8xf32> to vector<8x1xf32>
    %576 = tpu.reciprocal %575 {approx = true} : vector<8x1xf32> -> vector<8x1xf32>
    %577 = vector.broadcast %576 : vector<8x1xf32> to vector<8x8xf32>
    %578 = arith.mulf %573, %577 : vector<8x8xf32>
    %cst_256 = arith.constant dense<0.000000e+00> : vector<8x8xf32>
    %579 = tpu.matmul %578, %563, %cst_256 {dimension_numbers = #tpu.dot_dimension_numbers<[1], [0], [0], [1], [0, 0, 1, 1], [], []>} : vector<8x8xf32>, vector<8x8xf32>, vector<8x8xf32> -> vector<8x8xf32>
    %c0_257 = arith.constant 0 : index
    %c8_258 = arith.constant 8 : index
    %580 = vector.load %arg21[%c0_257, %c8_258] : memref<16x32xf32, #tpu.memory_space<vmem>>, vector<8x8xf32>
    tpu.vector_store %arg21[%c0_257, %c8_258], %579 {strides = array<i32>} : memref<16x32xf32, #tpu.memory_space<vmem>>, vector<8x8xf32>,
    %581 = vector.extract_strided_slice %539 {offsets = [0, 16], sizes = [8, 8], strides = [1, 1]} : vector<16x96xf32> to vector<8x8xf32>
    %582 = vector.extract_strided_slice %539 {offsets = [0, 48], sizes = [8, 8], strides = [1, 1]} : vector<16x96xf32> to vector<8x8xf32>
    %583 = vector.extract_strided_slice %539 {offsets = [0, 80], sizes = [8, 8], strides = [1, 1]} : vector<16x96xf32> to vector<8x8xf32>
    %cst_259 = arith.constant dense<0.000000e+00> : vector<8x8xf32>
    %584 = tpu.matmul %581, %582, %cst_259 {dimension_numbers = #tpu.dot_dimension_numbers<[1], [1], [0], [0], [0, 0, 1, 0], [], []>} : vector<8x8xf32>, vector<8x8xf32>, vector<8x8xf32> -> vector<8x8xf32>
    %cst_260 = arith.constant 0.353553385 : f32
    %585 = vector.broadcast %cst_260 : f32 to vector<8x8xf32>
    %586 = arith.mulf %584, %585 : vector<8x8xf32>
    %587 = vector.broadcast %540 : vector<1x8xf32> to vector<8x8xf32>
    %588 = arith.addf %586, %587 : vector<8x8xf32>
    %cst_261 = arith.constant dense<0xFF800000> : vector<8xf32>
    %589 = vector.multi_reduction <maximumf>, %588, %cst_261 [1] : vector<8x8xf32> to vector<8xf32>
    %590 = vector.shape_cast %589 : vector<8xf32> to vector<8x1xf32>
    %591 = vector.broadcast %590 : vector<8x1xf32> to vector<8x8xf32>
    %592 = arith.subf %588, %591 : vector<8x8xf32>
    %593 = math.exp %592 : vector<8x8xf32>
    %cst_262 = arith.constant dense<0.000000e+00> : vector<8xf32>
    %594 = vector.multi_reduction <add>, %593, %cst_262 [1] : vector<8x8xf32> to vector<8xf32>
    %595 = vector.shape_cast %594 : vector<8xf32> to vector<8x1xf32>
    %596 = tpu.reciprocal %595 {approx = true} : vector<8x1xf32> -> vector<8x1xf32>
    %597 = vector.broadcast %596 : vector<8x1xf32> to vector<8x8xf32>
    %598 = arith.mulf %593, %597 : vector<8x8xf32>
    %cst_263 = arith.constant dense<0.000000e+00> : vector<8x8xf32>
    %599 = tpu.matmul %598, %583, %cst_263 {dimension_numbers = #tpu.dot_dimension_numbers<[1], [0], [0], [1], [0, 0, 1, 1], [], []>} : vector<8x8xf32>, vector<8x8xf32>, vector<8x8xf32> -> vector<8x8xf32>
    %c0_264 = arith.constant 0 : index
    %c16_265 = arith.constant 16 : index
    %600 = vector.load %arg21[%c0_264, %c16_265] : memref<16x32xf32, #tpu.memory_space<vmem>>, vector<8x8xf32>
    tpu.vector_store %arg21[%c0_264, %c16_265], %599 {strides = array<i32>} : memref<16x32xf32, #tpu.memory_space<vmem>>, vector<8x8xf32>,
    %601 = vector.extract_strided_slice %539 {offsets = [0, 24], sizes = [8, 8], strides = [1, 1]} : vector<16x96xf32> to vector<8x8xf32>
    %602 = vector.extract_strided_slice %539 {offsets = [0, 56], sizes = [8, 8], strides = [1, 1]} : vector<16x96xf32> to vector<8x8xf32>
    %603 = vector.extract_strided_slice %539 {offsets = [0, 88], sizes = [8, 8], strides = [1, 1]} : vector<16x96xf32> to vector<8x8xf32>
    %cst_266 = arith.constant dense<0.000000e+00> : vector<8x8xf32>
    %604 = tpu.matmul %601, %602, %cst_266 {dimension_numbers = #tpu.dot_dimension_numbers<[1], [1], [0], [0], [0, 0, 1, 0], [], []>} : vector<8x8xf32>, vector<8x8xf32>, vector<8x8xf32> -> vector<8x8xf32>
    %cst_267 = arith.constant 0.353553385 : f32
    %605 = vector.broadcast %cst_267 : f32 to vector<8x8xf32>
    %606 = arith.mulf %604, %605 : vector<8x8xf32>
    %607 = vector.broadcast %540 : vector<1x8xf32> to vector<8x8xf32>
    %608 = arith.addf %606, %607 : vector<8x8xf32>
    %cst_268 = arith.constant dense<0xFF800000> : vector<8xf32>
    %609 = vector.multi_reduction <maximumf>, %608, %cst_268 [1] : vector<8x8xf32> to vector<8xf32>
    %610 = vector.shape_cast %609 : vector<8xf32> to vector<8x1xf32>
    %611 = vector.broadcast %610 : vector<8x1xf32> to vector<8x8xf32>
    %612 = arith.subf %608, %611 : vector<8x8xf32>
    %613 = math.exp %612 : vector<8x8xf32>
    %cst_269 = arith.constant dense<0.000000e+00> : vector<8xf32>
    %614 = vector.multi_reduction <add>, %613, %cst_269 [1] : vector<8x8xf32> to vector<8xf32>
    %615 = vector.shape_cast %614 : vector<8xf32> to vector<8x1xf32>
    %616 = tpu.reciprocal %615 {approx = true} : vector<8x1xf32> -> vector<8x1xf32>
    %617 = vector.broadcast %616 : vector<8x1xf32> to vector<8x8xf32>
    %618 = arith.mulf %613, %617 : vector<8x8xf32>
    %cst_270 = arith.constant dense<0.000000e+00> : vector<8x8xf32>
    %619 = tpu.matmul %618, %603, %cst_270 {dimension_numbers = #tpu.dot_dimension_numbers<[1], [0], [0], [1], [0, 0, 1, 1], [], []>} : vector<8x8xf32>, vector<8x8xf32>, vector<8x8xf32> -> vector<8x8xf32>
    %c0_271 = arith.constant 0 : index
    %c24_272 = arith.constant 24 : index
    %620 = vector.load %arg21[%c0_271, %c24_272] : memref<16x32xf32, #tpu.memory_space<vmem>>, vector<8x8xf32>
    tpu.vector_store %arg21[%c0_271, %c24_272], %619 {strides = array<i32>} : memref<16x32xf32, #tpu.memory_space<vmem>>, vector<8x8xf32>,
    %c1_273 = arith.constant 1 : index
    %c0_274 = arith.constant 0 : index
    %621 = vector.load %arg1[%c1_273, %c0_274] : memref<2x8xf32, #tpu.memory_space<vmem>>, vector<1x8xf32>
    %622 = vector.extract_strided_slice %539 {offsets = [8, 0], sizes = [8, 8], strides = [1, 1]} : vector<16x96xf32> to vector<8x8xf32>
    %623 = vector.extract_strided_slice %539 {offsets = [8, 32], sizes = [8, 8], strides = [1, 1]} : vector<16x96xf32> to vector<8x8xf32>
    %624 = vector.extract_strided_slice %539 {offsets = [8, 64], sizes = [8, 8], strides = [1, 1]} : vector<16x96xf32> to vector<8x8xf32>
    %cst_275 = arith.constant dense<0.000000e+00> : vector<8x8xf32>
    %625 = tpu.matmul %622, %623, %cst_275 {dimension_numbers = #tpu.dot_dimension_numbers<[1], [1], [0], [0], [0, 0, 1, 0], [], []>} : vector<8x8xf32>, vector<8x8xf32>, vector<8x8xf32> -> vector<8x8xf32>
    %cst_276 = arith.constant 0.353553385 : f32
    %626 = vector.broadcast %cst_276 : f32 to vector<8x8xf32>
    %627 = arith.mulf %625, %626 : vector<8x8xf32>
    %628 = vector.broadcast %621 : vector<1x8xf32> to vector<8x8xf32>
    %629 = arith.addf %627, %628 : vector<8x8xf32>
    %cst_277 = arith.constant dense<0xFF800000> : vector<8xf32>
    %630 = vector.multi_reduction <maximumf>, %629, %cst_277 [1] : vector<8x8xf32> to vector<8xf32>
    %631 = vector.shape_cast %630 : vector<8xf32> to vector<8x1xf32>
    %632 = vector.broadcast %631 : vector<8x1xf32> to vector<8x8xf32>
    %633 = arith.subf %629, %632 : vector<8x8xf32>
    %634 = math.exp %633 : vector<8x8xf32>
    %cst_278 = arith.constant dense<0.000000e+00> : vector<8xf32>
    %635 = vector.multi_reduction <add>, %634, %cst_278 [1] : vector<8x8xf32> to vector<8xf32>
    %636 = vector.shape_cast %635 : vector<8xf32> to vector<8x1xf32>
    %637 = tpu.reciprocal %636 {approx = true} : vector<8x1xf32> -> vector<8x1xf32>
    %638 = vector.broadcast %637 : vector<8x1xf32> to vector<8x8xf32>
    %639 = arith.mulf %634, %638 : vector<8x8xf32>
    %cst_279 = arith.constant dense<0.000000e+00> : vector<8x8xf32>
    %640 = tpu.matmul %639, %624, %cst_279 {dimension_numbers = #tpu.dot_dimension_numbers<[1], [0], [0], [1], [0, 0, 1, 1], [], []>} : vector<8x8xf32>, vector<8x8xf32>, vector<8x8xf32> -> vector<8x8xf32>
    %c8_280 = arith.constant 8 : index
    %c0_281 = arith.constant 0 : index
    %641 = vector.load %arg21[%c8_280, %c0_281] : memref<16x32xf32, #tpu.memory_space<vmem>>, vector<8x8xf32>
    tpu.vector_store %arg21[%c8_280, %c0_281], %640 {strides = array<i32>} : memref<16x32xf32, #tpu.memory_space<vmem>>, vector<8x8xf32>,
    %642 = vector.extract_strided_slice %539 {offsets = [8, 8], sizes = [8, 8], strides = [1, 1]} : vector<16x96xf32> to vector<8x8xf32>
    %643 = vector.extract_strided_slice %539 {offsets = [8, 40], sizes = [8, 8], strides = [1, 1]} : vector<16x96xf32> to vector<8x8xf32>
    %644 = vector.extract_strided_slice %539 {offsets = [8, 72], sizes = [8, 8], strides = [1, 1]} : vector<16x96xf32> to vector<8x8xf32>
    %cst_282 = arith.constant dense<0.000000e+00> : vector<8x8xf32>
    %645 = tpu.matmul %642, %643, %cst_282 {dimension_numbers = #tpu.dot_dimension_numbers<[1], [1], [0], [0], [0, 0, 1, 0], [], []>} : vector<8x8xf32>, vector<8x8xf32>, vector<8x8xf32> -> vector<8x8xf32>
    %cst_283 = arith.constant 0.353553385 : f32
    %646 = vector.broadcast %cst_283 : f32 to vector<8x8xf32>
    %647 = arith.mulf %645, %646 : vector<8x8xf32>
    %648 = vector.broadcast %621 : vector<1x8xf32> to vector<8x8xf32>
    %649 = arith.addf %647, %648 : vector<8x8xf32>
    %cst_284 = arith.constant dense<0xFF800000> : vector<8xf32>
    %650 = vector.multi_reduction <maximumf>, %649, %cst_284 [1] : vector<8x8xf32> to vector<8xf32>
    %651 = vector.shape_cast %650 : vector<8xf32> to vector<8x1xf32>
    %652 = vector.broadcast %651 : vector<8x1xf32> to vector<8x8xf32>
    %653 = arith.subf %649, %652 : vector<8x8xf32>
    %654 = math.exp %653 : vector<8x8xf32>
    %cst_285 = arith.constant dense<0.000000e+00> : vector<8xf32>
    %655 = vector.multi_reduction <add>, %654, %cst_285 [1] : vector<8x8xf32> to vector<8xf32>
    %656 = vector.shape_cast %655 : vector<8xf32> to vector<8x1xf32>
    %657 = tpu.reciprocal %656 {approx = true} : vector<8x1xf32> -> vector<8x1xf32>
    %658 = vector.broadcast %657 : vector<8x1xf32> to vector<8x8xf32>
    %659 = arith.mulf %654, %658 : vector<8x8xf32>
    %cst_286 = arith.constant dense<0.000000e+00> : vector<8x8xf32>
    %660 = tpu.matmul %659, %644, %cst_286 {dimension_numbers = #tpu.dot_dimension_numbers<[1], [0], [0], [1], [0, 0, 1, 1], [], []>} : vector<8x8xf32>, vector<8x8xf32>, vector<8x8xf32> -> vector<8x8xf32>
    %c8_287 = arith.constant 8 : index
    %c8_288 = arith.constant 8 : index
    %661 = vector.load %arg21[%c8_287, %c8_288] : memref<16x32xf32, #tpu.memory_space<vmem>>, vector<8x8xf32>
    tpu.vector_store %arg21[%c8_287, %c8_288], %660 {strides = array<i32>} : memref<16x32xf32, #tpu.memory_space<vmem>>, vector<8x8xf32>,
    %662 = vector.extract_strided_slice %539 {offsets = [8, 16], sizes = [8, 8], strides = [1, 1]} : vector<16x96xf32> to vector<8x8xf32>
    %663 = vector.extract_strided_slice %539 {offsets = [8, 48], sizes = [8, 8], strides = [1, 1]} : vector<16x96xf32> to vector<8x8xf32>
    %664 = vector.extract_strided_slice %539 {offsets = [8, 80], sizes = [8, 8], strides = [1, 1]} : vector<16x96xf32> to vector<8x8xf32>
    %cst_289 = arith.constant dense<0.000000e+00> : vector<8x8xf32>
    %665 = tpu.matmul %662, %663, %cst_289 {dimension_numbers = #tpu.dot_dimension_numbers<[1], [1], [0], [0], [0, 0, 1, 0], [], []>} : vector<8x8xf32>, vector<8x8xf32>, vector<8x8xf32> -> vector<8x8xf32>
    %cst_290 = arith.constant 0.353553385 : f32
    %666 = vector.broadcast %cst_290 : f32 to vector<8x8xf32>
    %667 = arith.mulf %665, %666 : vector<8x8xf32>
    %668 = vector.broadcast %621 : vector<1x8xf32> to vector<8x8xf32>
    %669 = arith.addf %667, %668 : vector<8x8xf32>
    %cst_291 = arith.constant dense<0xFF800000> : vector<8xf32>
    %670 = vector.multi_reduction <maximumf>, %669, %cst_291 [1] : vector<8x8xf32> to vector<8xf32>
    %671 = vector.shape_cast %670 : vector<8xf32> to vector<8x1xf32>
    %672 = vector.broadcast %671 : vector<8x1xf32> to vector<8x8xf32>
    %673 = arith.subf %669, %672 : vector<8x8xf32>
    %674 = math.exp %673 : vector<8x8xf32>
    %cst_292 = arith.constant dense<0.000000e+00> : vector<8xf32>
    %675 = vector.multi_reduction <add>, %674, %cst_292 [1] : vector<8x8xf32> to vector<8xf32>
    %676 = vector.shape_cast %675 : vector<8xf32> to vector<8x1xf32>
    %677 = tpu.reciprocal %676 {approx = true} : vector<8x1xf32> -> vector<8x1xf32>
    %678 = vector.broadcast %677 : vector<8x1xf32> to vector<8x8xf32>
    %679 = arith.mulf %674, %678 : vector<8x8xf32>
    %cst_293 = arith.constant dense<0.000000e+00> : vector<8x8xf32>
    %680 = tpu.matmul %679, %664, %cst_293 {dimension_numbers = #tpu.dot_dimension_numbers<[1], [0], [0], [1], [0, 0, 1, 1], [], []>} : vector<8x8xf32>, vector<8x8xf32>, vector<8x8xf32> -> vector<8x8xf32>
    %c8_294 = arith.constant 8 : index
    %c16_295 = arith.constant 16 : index
    %681 = vector.load %arg21[%c8_294, %c16_295] : memref<16x32xf32, #tpu.memory_space<vmem>>, vector<8x8xf32>
    tpu.vector_store %arg21[%c8_294, %c16_295], %680 {strides = array<i32>} : memref<16x32xf32, #tpu.memory_space<vmem>>, vector<8x8xf32>,
    %682 = vector.extract_strided_slice %539 {offsets = [8, 24], sizes = [8, 8], strides = [1, 1]} : vector<16x96xf32> to vector<8x8xf32>
    %683 = vector.extract_strided_slice %539 {offsets = [8, 56], sizes = [8, 8], strides = [1, 1]} : vector<16x96xf32> to vector<8x8xf32>
    %684 = vector.extract_strided_slice %539 {offsets = [8, 88], sizes = [8, 8], strides = [1, 1]} : vector<16x96xf32> to vector<8x8xf32>
    %cst_296 = arith.constant dense<0.000000e+00> : vector<8x8xf32>
    %685 = tpu.matmul %682, %683, %cst_296 {dimension_numbers = #tpu.dot_dimension_numbers<[1], [1], [0], [0], [0, 0, 1, 0], [], []>} : vector<8x8xf32>, vector<8x8xf32>, vector<8x8xf32> -> vector<8x8xf32>
    %cst_297 = arith.constant 0.353553385 : f32
    %686 = vector.broadcast %cst_297 : f32 to vector<8x8xf32>
    %687 = arith.mulf %685, %686 : vector<8x8xf32>
    %688 = vector.broadcast %621 : vector<1x8xf32> to vector<8x8xf32>
    %689 = arith.addf %687, %688 : vector<8x8xf32>
    %cst_298 = arith.constant dense<0xFF800000> : vector<8xf32>
    %690 = vector.multi_reduction <maximumf>, %689, %cst_298 [1] : vector<8x8xf32> to vector<8xf32>
    %691 = vector.shape_cast %690 : vector<8xf32> to vector<8x1xf32>
    %692 = vector.broadcast %691 : vector<8x1xf32> to vector<8x8xf32>
    %693 = arith.subf %689, %692 : vector<8x8xf32>
    %694 = math.exp %693 : vector<8x8xf32>
    %cst_299 = arith.constant dense<0.000000e+00> : vector<8xf32>
    %695 = vector.multi_reduction <add>, %694, %cst_299 [1] : vector<8x8xf32> to vector<8xf32>
    %696 = vector.shape_cast %695 : vector<8xf32> to vector<8x1xf32>
    %697 = tpu.reciprocal %696 {approx = true} : vector<8x1xf32> -> vector<8x1xf32>
    %698 = vector.broadcast %697 : vector<8x1xf32> to vector<8x8xf32>
    %699 = arith.mulf %694, %698 : vector<8x8xf32>
    %cst_300 = arith.constant dense<0.000000e+00> : vector<8x8xf32>
    %700 = tpu.matmul %699, %684, %cst_300 {dimension_numbers = #tpu.dot_dimension_numbers<[1], [0], [0], [1], [0, 0, 1, 1], [], []>} : vector<8x8xf32>, vector<8x8xf32>, vector<8x8xf32> -> vector<8x8xf32>
    %c8_301 = arith.constant 8 : index
    %c24_302 = arith.constant 24 : index
    %701 = vector.load %arg21[%c8_301, %c24_302] : memref<16x32xf32, #tpu.memory_space<vmem>>, vector<8x8xf32>
    tpu.vector_store %arg21[%c8_301, %c24_302], %700 {strides = array<i32>} : memref<16x32xf32, #tpu.memory_space<vmem>>, vector<8x8xf32>,
    %c0_303 = arith.constant 0 : index
    %c0_304 = arith.constant 0 : index
    %702 = vector.load %arg21[%c0_303, %c0_304] : memref<16x32xf32, #tpu.memory_space<vmem>>, vector<16x32xf32>
    %c2_305 = arith.constant 2 : index
    %c0_306 = arith.constant 0 : index
    %c0_307 = arith.constant 0 : index
    %703 = vector.load %arg6[%c2_305, %c0_306, %c0_307] : memref<3x32x32xf32, #tpu.memory_space<vmem>>, vector<1x32x32xf32>
    %704 = vector.shape_cast %703 : vector<1x32x32xf32> to vector<32x32xf32>
    %cst_308 = arith.constant dense<0.000000e+00> : vector<16x32xf32>
    %705 = tpu.matmul %702, %704, %cst_308 {dimension_numbers = #tpu.dot_dimension_numbers<[1], [0], [0], [1], [0, 0, 1, 1], [], []>} : vector<16x32xf32>, vector<32x32xf32>, vector<16x32xf32> -> vector<16x32xf32>
    %c2_309 = arith.constant 2 : index
    %c0_310 = arith.constant 0 : index
    %c0_311 = arith.constant 0 : index
    %706 = vector.load %arg7[%c2_309, %c0_310, %c0_311] : memref<3x1x32xf32, #tpu.memory_space<vmem>>, vector<1x1x32xf32>
    %707 = vector.shape_cast %706 : vector<1x1x32xf32> to vector<1x32xf32>
    %708 = vector.broadcast %707 : vector<1x32xf32> to vector<16x32xf32>
    %709 = arith.addf %705, %708 : vector<16x32xf32>
    %710 = arith.addf %530, %709 : vector<16x32xf32>
    %c2_312 = arith.constant 2 : index
    %c0_313 = arith.constant 0 : index
    %c0_314 = arith.constant 0 : index
    %711 = vector.load %arg8[%c2_312, %c0_313, %c0_314] : memref<3x1x32xf32, #tpu.memory_space<vmem>>, vector<1x1x32xf32>
    %712 = vector.shape_cast %711 : vector<1x1x32xf32> to vector<1x32xf32>
    %c2_315 = arith.constant 2 : index
    %c0_316 = arith.constant 0 : index
    %c0_317 = arith.constant 0 : index
    %713 = vector.load %arg9[%c2_315, %c0_316, %c0_317] : memref<3x1x32xf32, #tpu.memory_space<vmem>>, vector<1x1x32xf32>
    %714 = vector.shape_cast %713 : vector<1x1x32xf32> to vector<1x32xf32>
    %cst_318 = arith.constant dense<0.000000e+00> : vector<16xf32>
    %715 = vector.multi_reduction <add>, %710, %cst_318 [1] : vector<16x32xf32> to vector<16xf32>
    %716 = vector.shape_cast %715 : vector<16xf32> to vector<16x1xf32>
    %cst_319 = arith.constant 3.200000e+01 : f32
    %717 = vector.broadcast %cst_319 : f32 to vector<16x1xf32>
    %718 = arith.divf %716, %717 : vector<16x1xf32>
    %719 = vector.broadcast %718 : vector<16x1xf32> to vector<16x32xf32>
    %720 = arith.subf %710, %719 : vector<16x32xf32>
    %721 = arith.mulf %720, %720 : vector<16x32xf32>
    %cst_320 = arith.constant dense<0.000000e+00> : vector<16xf32>
    %722 = vector.multi_reduction <add>, %721, %cst_320 [1] : vector<16x32xf32> to vector<16xf32>
    %723 = vector.shape_cast %722 : vector<16xf32> to vector<16x1xf32>
    %cst_321 = arith.constant 3.200000e+01 : f32
    %724 = vector.broadcast %cst_321 : f32 to vector<16x1xf32>
    %725 = arith.divf %723, %724 : vector<16x1xf32>
    %cst_322 = arith.constant 9.99999996E-13 : f32
    %726 = vector.broadcast %cst_322 : f32 to vector<16x1xf32>
    %727 = arith.addf %725, %726 : vector<16x1xf32>
    %728 = math.rsqrt %727 : vector<16x1xf32>
    %729 = vector.broadcast %728 : vector<16x1xf32> to vector<16x32xf32>
    %730 = arith.mulf %720, %729 : vector<16x32xf32>
    %731 = vector.broadcast %712 : vector<1x32xf32> to vector<16x32xf32>
    %732 = arith.mulf %730, %731 : vector<16x32xf32>
    %733 = vector.broadcast %714 : vector<1x32xf32> to vector<16x32xf32>
    %734 = arith.addf %732, %733 : vector<16x32xf32>
    %c2_323 = arith.constant 2 : index
    %c0_324 = arith.constant 0 : index
    %c0_325 = arith.constant 0 : index
    %735 = vector.load %arg10[%c2_323, %c0_324, %c0_325] : memref<3x32x64xf32, #tpu.memory_space<vmem>>, vector<1x32x64xf32>
    %736 = vector.shape_cast %735 : vector<1x32x64xf32> to vector<32x64xf32>
    %cst_326 = arith.constant dense<0.000000e+00> : vector<16x64xf32>
    %737 = tpu.matmul %734, %736, %cst_326 {dimension_numbers = #tpu.dot_dimension_numbers<[1], [0], [0], [1], [0, 0, 1, 1], [], []>} : vector<16x32xf32>, vector<32x64xf32>, vector<16x64xf32> -> vector<16x64xf32>
    %c2_327 = arith.constant 2 : index
    %c0_328 = arith.constant 0 : index
    %c0_329 = arith.constant 0 : index
    %738 = vector.load %arg11[%c2_327, %c0_328, %c0_329] : memref<3x1x64xf32, #tpu.memory_space<vmem>>, vector<1x1x64xf32>
    %739 = vector.shape_cast %738 : vector<1x1x64xf32> to vector<1x64xf32>
    %740 = vector.broadcast %739 : vector<1x64xf32> to vector<16x64xf32>
    %741 = arith.addf %737, %740 : vector<16x64xf32>
    %742 = arith.mulf %741, %741 : vector<16x64xf32>
    %743 = arith.mulf %741, %742 : vector<16x64xf32>
    %cst_330 = arith.constant 4.471500e-02 : f32
    %744 = vector.broadcast %cst_330 : f32 to vector<16x64xf32>
    %745 = arith.mulf %744, %743 : vector<16x64xf32>
    %746 = arith.addf %741, %745 : vector<16x64xf32>
    %cst_331 = arith.constant 0.797884583 : f32
    %747 = vector.broadcast %cst_331 : f32 to vector<16x64xf32>
    %748 = arith.mulf %747, %746 : vector<16x64xf32>
    %749 = math.tanh %748 : vector<16x64xf32>
    %cst_332 = arith.constant 1.000000e+00 : f32
    %750 = vector.broadcast %cst_332 : f32 to vector<16x64xf32>
    %751 = arith.addf %750, %749 : vector<16x64xf32>
    %cst_333 = arith.constant 5.000000e-01 : f32
    %752 = vector.broadcast %cst_333 : f32 to vector<16x64xf32>
    %753 = arith.mulf %752, %751 : vector<16x64xf32>
    %754 = arith.mulf %741, %753 : vector<16x64xf32>
    %c2_334 = arith.constant 2 : index
    %c0_335 = arith.constant 0 : index
    %c0_336 = arith.constant 0 : index
    %755 = vector.load %arg12[%c2_334, %c0_335, %c0_336] : memref<3x64x32xf32, #tpu.memory_space<vmem>>, vector<1x64x32xf32>
    %756 = vector.shape_cast %755 : vector<1x64x32xf32> to vector<64x32xf32>
    %cst_337 = arith.constant dense<0.000000e+00> : vector<16x32xf32>
    %757 = tpu.matmul %754, %756, %cst_337 {dimension_numbers = #tpu.dot_dimension_numbers<[1], [0], [0], [1], [0, 0, 1, 1], [], []>} : vector<16x64xf32>, vector<64x32xf32>, vector<16x32xf32> -> vector<16x32xf32>
    %c2_338 = arith.constant 2 : index
    %c0_339 = arith.constant 0 : index
    %c0_340 = arith.constant 0 : index
    %758 = vector.load %arg13[%c2_338, %c0_339, %c0_340] : memref<3x1x32xf32, #tpu.memory_space<vmem>>, vector<1x1x32xf32>
    %759 = vector.shape_cast %758 : vector<1x1x32xf32> to vector<1x32xf32>
    %760 = vector.broadcast %759 : vector<1x32xf32> to vector<16x32xf32>
    %761 = arith.addf %757, %760 : vector<16x32xf32>
    %762 = arith.addf %734, %761 : vector<16x32xf32>
    %c2_341 = arith.constant 2 : index
    %c0_342 = arith.constant 0 : index
    %c0_343 = arith.constant 0 : index
    %763 = vector.load %arg14[%c2_341, %c0_342, %c0_343] : memref<3x1x32xf32, #tpu.memory_space<vmem>>, vector<1x1x32xf32>
    %764 = vector.shape_cast %763 : vector<1x1x32xf32> to vector<1x32xf32>
    %c2_344 = arith.constant 2 : index
    %c0_345 = arith.constant 0 : index
    %c0_346 = arith.constant 0 : index
    %765 = vector.load %arg15[%c2_344, %c0_345, %c0_346] : memref<3x1x32xf32, #tpu.memory_space<vmem>>, vector<1x1x32xf32>
    %766 = vector.shape_cast %765 : vector<1x1x32xf32> to vector<1x32xf32>
    %cst_347 = arith.constant dense<0.000000e+00> : vector<16xf32>
    %767 = vector.multi_reduction <add>, %762, %cst_347 [1] : vector<16x32xf32> to vector<16xf32>
    %768 = vector.shape_cast %767 : vector<16xf32> to vector<16x1xf32>
    %cst_348 = arith.constant 3.200000e+01 : f32
    %769 = vector.broadcast %cst_348 : f32 to vector<16x1xf32>
    %770 = arith.divf %768, %769 : vector<16x1xf32>
    %771 = vector.broadcast %770 : vector<16x1xf32> to vector<16x32xf32>
    %772 = arith.subf %762, %771 : vector<16x32xf32>
    %773 = arith.mulf %772, %772 : vector<16x32xf32>
    %cst_349 = arith.constant dense<0.000000e+00> : vector<16xf32>
    %774 = vector.multi_reduction <add>, %773, %cst_349 [1] : vector<16x32xf32> to vector<16xf32>
    %775 = vector.shape_cast %774 : vector<16xf32> to vector<16x1xf32>
    %cst_350 = arith.constant 3.200000e+01 : f32
    %776 = vector.broadcast %cst_350 : f32 to vector<16x1xf32>
    %777 = arith.divf %775, %776 : vector<16x1xf32>
    %cst_351 = arith.constant 9.99999996E-13 : f32
    %778 = vector.broadcast %cst_351 : f32 to vector<16x1xf32>
    %779 = arith.addf %777, %778 : vector<16x1xf32>
    %780 = math.rsqrt %779 : vector<16x1xf32>
    %781 = vector.broadcast %780 : vector<16x1xf32> to vector<16x32xf32>
    %782 = arith.mulf %772, %781 : vector<16x32xf32>
    %783 = vector.broadcast %764 : vector<1x32xf32> to vector<16x32xf32>
    %784 = arith.mulf %782, %783 : vector<16x32xf32>
    %785 = vector.broadcast %766 : vector<1x32xf32> to vector<16x32xf32>
    %786 = arith.addf %784, %785 : vector<16x32xf32>
    %787 = vector.extract_strided_slice %786 {offsets = [0, 0], sizes = [1, 32], strides = [1, 1]} : vector<16x32xf32> to vector<1x32xf32>
    %788 = arith.addf %531, %787 : vector<1x32xf32>
    %789 = vector.extract_strided_slice %786 {offsets = [8, 0], sizes = [1, 32], strides = [1, 1]} : vector<16x32xf32> to vector<1x32xf32>
    %790 = arith.addf %532, %789 : vector<1x32xf32>
    %cst_352 = arith.constant 5.000000e-01 : f32
    %791 = vector.broadcast %cst_352 : f32 to vector<1x32xf32>
    %792 = arith.mulf %788, %791 : vector<1x32xf32>
    %c0_353 = arith.constant 0 : index
    %c0_354 = arith.constant 0 : index
    %793 = vector.load %arg21[%c0_353, %c0_354] : memref<16x32xf32, #tpu.memory_space<vmem>>, vector<1x32xf32>
    tpu.vector_store %arg21[%c0_353, %c0_354], %792 {strides = array<i32>} : memref<16x32xf32, #tpu.memory_space<vmem>>, vector<1x32xf32>,
    %cst_355 = arith.constant 5.000000e-01 : f32
    %794 = vector.broadcast %cst_355 : f32 to vector<1x32xf32>
    %795 = arith.mulf %790, %794 : vector<1x32xf32>
    %c1_356 = arith.constant 1 : index
    %c0_357 = arith.constant 0 : index
    %796 = vector.load %arg21[%c1_356, %c0_357] : memref<16x32xf32, #tpu.memory_space<vmem>>, vector<1x32xf32>
    tpu.vector_store %arg21[%c1_356, %c0_357], %795 {strides = array<i32>} : memref<16x32xf32, #tpu.memory_space<vmem>>, vector<1x32xf32>,
    %c0_358 = arith.constant 0 : index
    %c0_359 = arith.constant 0 : index
    %797 = vector.load %arg21[%c0_358, %c0_359] : memref<16x32xf32, #tpu.memory_space<vmem>>, vector<2x32xf32>
    %c0_360 = arith.constant 0 : index
    %c0_361 = arith.constant 0 : index
    %798 = vector.load %arg16[%c0_360, %c0_361] : memref<32x32xf32, #tpu.memory_space<vmem>>, vector<32x32xf32>
    %cst_362 = arith.constant dense<0.000000e+00> : vector<2x32xf32>
    %799 = tpu.matmul %797, %798, %cst_362 {dimension_numbers = #tpu.dot_dimension_numbers<[1], [0], [0], [1], [0, 0, 1, 1], [], []>} : vector<2x32xf32>, vector<32x32xf32>, vector<2x32xf32> -> vector<2x32xf32>
    %c0_363 = arith.constant 0 : index
    %c0_364 = arith.constant 0 : index
    %800 = vector.load %arg17[%c0_363, %c0_364] : memref<1x32xf32, #tpu.memory_space<vmem>>, vector<1x32xf32>
    %801 = vector.broadcast %800 : vector<1x32xf32> to vector<2x32xf32>
    %802 = arith.addf %799, %801 : vector<2x32xf32>
    %803 = math.tanh %802 : vector<2x32xf32>
    %c0_365 = arith.constant 0 : index
    %c0_366 = arith.constant 0 : index
    %804 = vector.load %arg18[%c0_365, %c0_366] : memref<32x128xf32, #tpu.memory_space<vmem>>, vector<32x128xf32>
    %cst_367 = arith.constant dense<0.000000e+00> : vector<2x128xf32>
    %805 = tpu.matmul %803, %804, %cst_367 {dimension_numbers = #tpu.dot_dimension_numbers<[1], [0], [0], [1], [0, 0, 1, 1], [], []>} : vector<2x32xf32>, vector<32x128xf32>, vector<2x128xf32> -> vector<2x128xf32>
    %c0_368 = arith.constant 0 : index
    %c0_369 = arith.constant 0 : index
    %806 = vector.load %arg19[%c0_368, %c0_369] : memref<1x128xf32, #tpu.memory_space<vmem>>, vector<1x128xf32>
    %807 = vector.broadcast %806 : vector<1x128xf32> to vector<2x128xf32>
    %808 = arith.addf %805, %807 : vector<2x128xf32>
    %c0_370 = arith.constant 0 : index
    %c0_371 = arith.constant 0 : index
    %809 = vector.load %arg20[%c0_370, %c0_371] : memref<2x128xf32, #tpu.memory_space<vmem>>, vector<2x128xf32>
    tpu.vector_store %arg20[%c0_370, %c0_371], %808 {strides = array<i32>} : memref<2x128xf32, #tpu.memory_space<vmem>>, vector<2x128xf32>,
    return
  }
}

</mosaic_0001>

<llo_original>
// kernel: tpu_custom_call.1
$region0: #{tpu_custom_call.1}
  #allocation0 [shape = 'u32[]', space=smem, size = 0x4, offset = 0x4, fixed_abs, tag = 'smem constant byte address 0x4 - core index']
  #allocation1 [shape = 'u32[72,128]{1,0:T(1,128)}', space=vmem, size = 0x9000, scoped, tag = 'internal scratch']
  #allocation2 [shape = 'f32[16,32]{1,0:T(8,128)}', space=vmem, size = 0x2000, scoped, tag = 'scratch operand']
  %s0 = inlined_call_operand.hbm [shape: f32[16,32], index: 0, kind: input, shape index: {}]
  %s1 = inlined_call_operand.hbm [shape: f32[2,8], index: 1, kind: input, shape index: {}]
  %s2 = inlined_call_operand.hbm [shape: f32[1,32], index: 2, kind: input, shape index: {}]
  %s3 = inlined_call_operand.hbm [shape: f32[1,32], index: 3, kind: input, shape index: {}]
  %s4 = inlined_call_operand.vmem [shape: f32[3,32,96], index: 4, kind: input, shape index: {}]
  %s5 = inlined_call_operand.vmem [shape: f32[3,1,96], index: 5, kind: input, shape index: {}]
  %s6 = inlined_call_operand.vmem [shape: f32[3,32,32], index: 6, kind: input, shape index: {}]
  %s7 = inlined_call_operand.hbm [shape: f32[3,1,32], index: 7, kind: input, shape index: {}]
  %s8 = inlined_call_operand.vmem [shape: f32[3,1,32], index: 8, kind: input, shape index: {}]
  %s9 = inlined_call_operand.hbm [shape: f32[3,1,32], index: 9, kind: input, shape index: {}]
  %s10 = inlined_call_operand.vmem [shape: f32[3,32,64], index: 10, kind: input, shape index: {}]
  %s11 = inlined_call_operand.hbm [shape: f32[3,1,64], index: 11, kind: input, shape index: {}]
  %s12 = inlined_call_operand.vmem [shape: f32[3,64,32], index: 12, kind: input, shape index: {}]
  %s13 = inlined_call_operand.vmem [shape: f32[3,1,32], index: 13, kind: input, shape index: {}]
  %s14 = inlined_call_operand.hbm [shape: f32[3,1,32], index: 14, kind: input, shape index: {}]
  %s15 = inlined_call_operand.hbm [shape: f32[3,1,32], index: 15, kind: input, shape index: {}]
  %s16 = inlined_call_operand.hbm [shape: f32[32,32], index: 16, kind: input, shape index: {}]
  %s17 = inlined_call_operand.vmem [shape: f32[1,32], index: 17, kind: input, shape index: {}]
  %s18 = inlined_call_operand.hbm [shape: f32[32,128], index: 18, kind: input, shape index: {}]
  %s19 = inlined_call_operand.vmem [shape: f32[1,128], index: 19, kind: input, shape index: {}]
  %s20 = inlined_call_operand.hbm [shape: f32[2,128], index: 20, kind: output, shape index: {}]
  %s21 = sld [smem:[#allocation0]]
  $region134: #{tpu_custom_call.1} parent=0
    _
  %s23 = ssub.s32 1, %s21
  %s24 = scalar_select 0, %s23, %s21
  $region1: #{tpu_custom_call.1} parent=0
    #allocation3 [shape = 'u8[8192]{0}', space=vmem, size = 0x2000, scoped, tag = 'input window, operand 0, single buffered']
    #allocation4 [shape = 's32[1]{0}', space=sflag, size = 0x4, scoped, tag = 'scoped memory for tpu_custom_call.1']
    #allocation5 [shape = 's32[1]{0}', space=sflag, size = 0x4, scoped, tag = 'scoped memory for tpu_custom_call.1']
    #allocation6 [shape = 'u8[1024]{0}', space=vmem, size = 0x400, scoped, tag = 'input window, operand 1, single buffered']
    #allocation7 [shape = 's32[1]{0}', space=sflag, size = 0x4, scoped, tag = 'scoped memory for tpu_custom_call.1']
    #allocation8 [shape = 'u8[512]{0}', space=vmem, size = 0x400, scoped, tag = 'input window, operand 2, single buffered']
    #allocation9 [shape = 'u8[512]{0}', space=vmem, size = 0x400, scoped, tag = 'input window, operand 3, single buffered']
    #allocation10 [shape = 's32[1]{0}', space=sflag, size = 0x4, scoped, tag = 'scoped memory for tpu_custom_call.1']
    #allocation11 [shape = 'u8[1536]{0}', space=vmem, size = 0x800, scoped, tag = 'input window, operand 7, single buffered']
    #allocation12 [shape = 'u8[1536]{0}', space=vmem, size = 0x800, scoped, tag = 'input window, operand 9, single buffered']
    #allocation13 [shape = 's32[1]{0}', space=sflag, size = 0x4, scoped, tag = 'scoped memory for tpu_custom_call.1']
    #allocation14 [shape = 'u8[1536]{0}', space=vmem, size = 0x800, scoped, tag = 'input window, operand 11, single buffered']
    #allocation15 [shape = 'u8[1536]{0}', space=vmem, size = 0x800, scoped, tag = 'input window, operand 14, single buffered']
    #allocation16 [shape = 's32[1]{0}', space=sflag, size = 0x4, scoped, tag = 'scoped memory for tpu_custom_call.1']
    #allocation17 [shape = 'u8[1536]{0}', space=vmem, size = 0x800, scoped, tag = 'input window, operand 15, single buffered']
    #allocation18 [shape = 'u8[16384]{0}', space=vmem, size = 0x4000, scoped, tag = 'input window, operand 16, single buffered']
    #allocation19 [shape = 's32[1]{0}', space=sflag, size = 0x4, scoped, tag = 'scoped memory for tpu_custom_call.1']
    #allocation20 [shape = 'u8[16384]{0}', space=vmem, size = 0x4000, scoped, tag = 'input window, operand 18, single buffered']
    #allocation21 [shape = 'u8[1024]{0}', space=vmem, size = 0x400, scoped, tag = 'output window, operand 0, single buffered']
    %25 = vsyncpa [#allocation4], 0
    %26 = vsyncpa [#allocation7], 0
    %27 = vsyncpa [#allocation10], 0
    %28 = vsyncpa [#allocation13], 0
    %29 = vsyncpa [#allocation16], 0
    %30 = vsyncpa [#allocation19], 0
    %31 = vsyncpa [#allocation5], 0
    // Predicated region
    $region2: #{tpu_custom_call.1} parent=1 // pred_check
      _
    $region3: #{tpu_custom_call.1} parent=1 // pred_check_branch
      %33 = sbr.rel (0) target = $region5
    $region4: #{tpu_custom_call.1} parent=1 // pred_region
      %35 = vsyncadd [#allocation4], 0
      %s36 = sshll.u32 %s0, 4
      %s37 = int_to_ptr.hbm [resolvable:$true] %s36
      %s38 = sshll.u32 [#allocation3], 4
      %s39 = int_to_ptr.vmem [resolvable:$true] %s38
      %44 = dma.hbm_to_vmem [thread:$0]  %s37, 256, %s39, [#allocation4], 128, 128, 8
    $region5: #{tpu_custom_call.1} parent=1 // pred_fallthru
      _
    // Predicated region
    $region6: #{tpu_custom_call.1} parent=1 // pred_check
      _
    $region7: #{tpu_custom_call.1} parent=1 // pred_check_branch
      %46 = sbr.rel (0) target = $region9
    $region8: #{tpu_custom_call.1} parent=1 // pred_region
      %48 = vsyncadd [#allocation7], 0
      %s50 = sshll.u32 %s1, 4
      %s51 = int_to_ptr.hbm [resolvable:$true] %s50
      %s52 = sshll.u32 [#allocation6], 4
      %s53 = int_to_ptr.vmem [resolvable:$true] %s52
      %55 = dma.hbm_to_vmem [thread:$0]  %s51, 32, %s53, [#allocation7]
    $region9: #{tpu_custom_call.1} parent=1 // pred_fallthru
      _
    // Predicated region
    $region10: #{tpu_custom_call.1} parent=1 // pred_check
      _
    $region11: #{tpu_custom_call.1} parent=1 // pred_check_branch
      %57 = sbr.rel (0) target = $region13
    $region12: #{tpu_custom_call.1} parent=1 // pred_region
      %59 = vsyncadd [#allocation7], 0
      %s61 = sshll.u32 %s2, 4
      %s62 = int_to_ptr.hbm [resolvable:$true] %s61
      %s63 = sshll.u32 [#allocation8], 4
      %s64 = int_to_ptr.vmem [resolvable:$true] %s63
      %66 = dma.hbm_to_vmem [thread:$0]  %s62, 16, %s64, [#allocation7]
    $region13: #{tpu_custom_call.1} parent=1 // pred_fallthru
      _
    // Predicated region
    $region14: #{tpu_custom_call.1} parent=1 // pred_check
      _
    $region15: #{tpu_custom_call.1} parent=1 // pred_check_branch
      %68 = sbr.rel (0) target = $region17
    $region16: #{tpu_custom_call.1} parent=1 // pred_region
      %70 = vsyncadd [#allocation10], 0
      %s72 = sshll.u32 %s3, 4
      %s73 = int_to_ptr.hbm [resolvable:$true] %s72
      %s74 = sshll.u32 [#allocation9], 4
      %s75 = int_to_ptr.vmem [resolvable:$true] %s74
      %77 = dma.hbm_to_vmem [thread:$0]  %s73, 16, %s75, [#allocation10]
    $region17: #{tpu_custom_call.1} parent=1 // pred_fallthru
      _
    // Predicated region
    $region18: #{tpu_custom_call.1} parent=1 // pred_check
      _
    $region19: #{tpu_custom_call.1} parent=1 // pred_check_branch
      %79 = sbr.rel (0) target = $region21
    $region20: #{tpu_custom_call.1} parent=1 // pred_region
      _
    $region21: #{tpu_custom_call.1} parent=1 // pred_fallthru
      _
    // Predicated region
    $region22: #{tpu_custom_call.1} parent=1 // pred_check
      _
    $region23: #{tpu_custom_call.1} parent=1 // pred_check_branch
      %81 = sbr.rel (0) target = $region25
    $region24: #{tpu_custom_call.1} parent=1 // pred_region
      _
    $region25: #{tpu_custom_call.1} parent=1 // pred_fallthru
      _
    // Predicated region
    $region26: #{tpu_custom_call.1} parent=1 // pred_check
      _
    $region27: #{tpu_custom_call.1} parent=1 // pred_check_branch
      %83 = sbr.rel (0) target = $region29
    $region28: #{tpu_custom_call.1} parent=1 // pred_region
      _
    $region29: #{tpu_custom_call.1} parent=1 // pred_fallthru
      _
    // Predicated region
    $region30: #{tpu_custom_call.1} parent=1 // pred_check
      _
    $region31: #{tpu_custom_call.1} parent=1 // pred_check_branch
      %85 = sbr.rel (0) target = $region33
    $region32: #{tpu_custom_call.1} parent=1 // pred_region
      %87 = vsyncadd [#allocation10], 0
      %s88 = sshll.u32 %s7, 4
      %s89 = int_to_ptr.hbm [resolvable:$true] %s88
      %s90 = sshll.u32 [#allocation11], 4
      %s91 = int_to_ptr.vmem [resolvable:$true] %s90
      %96 = dma.hbm_to_vmem [thread:$0]  %s89, 48, %s91, [#allocation10], 16, 16, 1
    $region33: #{tpu_custom_call.1} parent=1 // pred_fallthru
      _
    // Predicated region
    $region34: #{tpu_custom_call.1} parent=1 // pred_check
      _
    $region35: #{tpu_custom_call.1} parent=1 // pred_check_branch
      %98 = sbr.rel (0) target = $region37
    $region36: #{tpu_custom_call.1} parent=1 // pred_region
      _
    $region37: #{tpu_custom_call.1} parent=1 // pred_fallthru
      _
    // Predicated region
    $region38: #{tpu_custom_call.1} parent=1 // pred_check
      _
    $region39: #{tpu_custom_call.1} parent=1 // pred_check_branch
      %100 = sbr.rel (0) target = $region41
    $region40: #{tpu_custom_call.1} parent=1 // pred_region
      %102 = vsyncadd [#allocation13], 0
      %s103 = sshll.u32 %s9, 4
      %s104 = int_to_ptr.hbm [resolvable:$true] %s103
      %s105 = sshll.u32 [#allocation12], 4
      %s106 = int_to_ptr.vmem [resolvable:$true] %s105
      %111 = dma.hbm_to_vmem [thread:$0]  %s104, 48, %s106, [#allocation13], 16, 16, 1
    $region41: #{tpu_custom_call.1} parent=1 // pred_fallthru
      _
    // Predicated region
    $region42: #{tpu_custom_call.1} parent=1 // pred_check
      _
    $region43: #{tpu_custom_call.1} parent=1 // pred_check_branch
      %113 = sbr.rel (0) target = $region45
    $region44: #{tpu_custom_call.1} parent=1 // pred_region
      _
    $region45: #{tpu_custom_call.1} parent=1 // pred_fallthru
      _
    // Predicated region
    $region46: #{tpu_custom_call.1} parent=1 // pred_check
      _
    $region47: #{tpu_custom_call.1} parent=1 // pred_check_branch
      %115 = sbr.rel (0) target = $region49
    $region48: #{tpu_custom_call.1} parent=1 // pred_region
      %117 = vsyncadd [#allocation13], 0
      %s118 = sshll.u32 %s11, 4
      %s119 = int_to_ptr.hbm [resolvable:$true] %s118
      %s120 = sshll.u32 [#allocation14], 4
      %s121 = int_to_ptr.vmem [resolvable:$true] %s120
      %126 = dma.hbm_to_vmem [thread:$0]  %s119, 48, %s121, [#allocation13], 16, 16, 1
    $region49: #{tpu_custom_call.1} parent=1 // pred_fallthru
      _
    // Predicated region
    $region50: #{tpu_custom_call.1} parent=1 // pred_check
      _
    $region51: #{tpu_custom_call.1} parent=1 // pred_check_branch
      %128 = sbr.rel (0) target = $region53
    $region52: #{tpu_custom_call.1} parent=1 // pred_region
      _
    $region53: #{tpu_custom_call.1} parent=1 // pred_fallthru
      _
    // Predicated region
    $region54: #{tpu_custom_call.1} parent=1 // pred_check
      _
    $region55: #{tpu_custom_call.1} parent=1 // pred_check_branch
      %130 = sbr.rel (0) target = $region57
    $region56: #{tpu_custom_call.1} parent=1 // pred_region
      _
    $region57: #{tpu_custom_call.1} parent=1 // pred_fallthru
      _
    // Predicated region
    $region58: #{tpu_custom_call.1} parent=1 // pred_check
      _
    $region59: #{tpu_custom_call.1} parent=1 // pred_check_branch
      %132 = sbr.rel (0) target = $region61
    $region60: #{tpu_custom_call.1} parent=1 // pred_region
      %134 = vsyncadd [#allocation16], 0
      %s135 = sshll.u32 %s14, 4
      %s136 = int_to_ptr.hbm [resolvable:$true] %s135
      %s137 = sshll.u32 [#allocation15], 4
      %s138 = int_to_ptr.vmem [resolvable:$true] %s137
      %143 = dma.hbm_to_vmem [thread:$0]  %s136, 48, %s138, [#allocation16], 16, 16, 1
    $region61: #{tpu_custom_call.1} parent=1 // pred_fallthru
      _
    // Predicated region
    $region62: #{tpu_custom_call.1} parent=1 // pred_check
      _
    $region63: #{tpu_custom_call.1} parent=1 // pred_check_branch
      %145 = sbr.rel (0) target = $region65
    $region64: #{tpu_custom_call.1} parent=1 // pred_region
      %147 = vsyncadd [#allocation16], 0
      %s148 = sshll.u32 %s15, 4
      %s149 = int_to_ptr.hbm [resolvable:$true] %s148
      %s150 = sshll.u32 [#allocation17], 4
      %s151 = int_to_ptr.vmem [resolvable:$true] %s150
      %156 = dma.hbm_to_vmem [thread:$0]  %s149, 48, %s151, [#allocation16], 16, 16, 1
    $region65: #{tpu_custom_call.1} parent=1 // pred_fallthru
      _
    // Predicated region
    $region66: #{tpu_custom_call.1} parent=1 // pred_check
      _
    $region67: #{tpu_custom_call.1} parent=1 // pred_check_branch
      %158 = sbr.rel (0) target = $region69
    $region68: #{tpu_custom_call.1} parent=1 // pred_region
      %160 = vsyncadd [#allocation19], 0
      %s161 = sshll.u32 %s16, 4
      %s162 = int_to_ptr.hbm [resolvable:$true] %s161
      %s163 = sshll.u32 [#allocation18], 4
      %s164 = int_to_ptr.vmem [resolvable:$true] %s163
      %169 = dma.hbm_to_vmem [thread:$0]  %s162, 512, %s164, [#allocation19], 128, 128, 8
    $region69: #{tpu_custom_call.1} parent=1 // pred_fallthru
      _
    // Predicated region
    $region70: #{tpu_custom_call.1} parent=1 // pred_check
      _
    $region71: #{tpu_custom_call.1} parent=1 // pred_check_branch
      %171 = sbr.rel (0) target = $region73
    $region72: #{tpu_custom_call.1} parent=1 // pred_region
      _
    $region73: #{tpu_custom_call.1} parent=1 // pred_fallthru
      _
    // Predicated region
    $region74: #{tpu_custom_call.1} parent=1 // pred_check
      _
    $region75: #{tpu_custom_call.1} parent=1 // pred_check_branch
      %173 = sbr.rel (0) target = $region77
    $region76: #{tpu_custom_call.1} parent=1 // pred_region
      %175 = vsyncadd [#allocation19], 0
      %s176 = sshll.u32 %s18, 4
      %s177 = int_to_ptr.hbm [resolvable:$true] %s176
      %s178 = sshll.u32 [#allocation20], 4
      %s179 = int_to_ptr.vmem [resolvable:$true] %s178
      %184 = dma.hbm_to_vmem [thread:$0]  %s177, 512, %s179, [#allocation19], 128, 128, 8
    $region77: #{tpu_custom_call.1} parent=1 // pred_fallthru
      _
    // Predicated region
    $region78: #{tpu_custom_call.1} parent=1 // pred_check
      _
    $region79: #{tpu_custom_call.1} parent=1 // pred_check_branch
      %186 = sbr.rel (0) target = $region81
    $region80: #{tpu_custom_call.1} parent=1 // pred_region
      _
    $region81: #{tpu_custom_call.1} parent=1 // pred_fallthru
      _
    // Predicated region
    $region82: #{tpu_custom_call.1} parent=1 // pred_check
      _
    $region83: #{tpu_custom_call.1} parent=1 // pred_check_branch
      %188 = sbr.rel (0) target = $region85
    $region84: #{tpu_custom_call.1} parent=1 // pred_region
      %190 = dma.done [#allocation4], 256
    $region85: #{tpu_custom_call.1} parent=1 // pred_fallthru
      _
    // Predicated region
    $region86: #{tpu_custom_call.1} parent=1 // pred_check
      _
    $region87: #{tpu_custom_call.1} parent=1 // pred_check_branch
      %192 = sbr.rel (0) target = $region89
    $region88: #{tpu_custom_call.1} parent=1 // pred_region
      %194 = dma.done [#allocation7], 32
    $region89: #{tpu_custom_call.1} parent=1 // pred_fallthru
      _
    // Predicated region
    $region90: #{tpu_custom_call.1} parent=1 // pred_check
      _
    $region91: #{tpu_custom_call.1} parent=1 // pred_check_branch
      %196 = sbr.rel (0) target = $region93
    $region92: #{tpu_custom_call.1} parent=1 // pred_region
      %198 = dma.done [#allocation7], 16
    $region93: #{tpu_custom_call.1} parent=1 // pred_fallthru
      _
    // Predicated region
    $region94: #{tpu_custom_call.1} parent=1 // pred_check
      _
    $region95: #{tpu_custom_call.1} parent=1 // pred_check_branch
      %200 = sbr.rel (0) target = $region97
    $region96: #{tpu_custom_call.1} parent=1 // pred_region
      %202 = dma.done [#allocation10], 16
    $region97: #{tpu_custom_call.1} parent=1 // pred_fallthru
      _
    // Predicated region
    $region98: #{tpu_custom_call.1} parent=1 // pred_check
      _
    $region99: #{tpu_custom_call.1} parent=1 // pred_check_branch
      %204 = sbr.rel (0) target = $region101
    $region100: #{tpu_custom_call.1} parent=1 // pred_region
      %206 = dma.done [#allocation10], 48
    $region101: #{tpu_custom_call.1} parent=1 // pred_fallthru
      _
    // Predicated region
    $region102: #{tpu_custom_call.1} parent=1 // pred_check
      _
    $region103: #{tpu_custom_call.1} parent=1 // pred_check_branch
      %208 = sbr.rel (0) target = $region105
    $region104: #{tpu_custom_call.1} parent=1 // pred_region
      %210 = dma.done [#allocation13], 48
    $region105: #{tpu_custom_call.1} parent=1 // pred_fallthru
      _
    // Predicated region
    $region106: #{tpu_custom_call.1} parent=1 // pred_check
      _
    $region107: #{tpu_custom_call.1} parent=1 // pred_check_branch
      %212 = sbr.rel (0) target = $region109
    $region108: #{tpu_custom_call.1} parent=1 // pred_region
      %214 = dma.done [#allocation13], 48
    $region109: #{tpu_custom_call.1} parent=1 // pred_fallthru
      _
    // Predicated region
    $region110: #{tpu_custom_call.1} parent=1 // pred_check
      _
    $region111: #{tpu_custom_call.1} parent=1 // pred_check_branch
      %216 = sbr.rel (0) target = $region113
    $region112: #{tpu_custom_call.1} parent=1 // pred_region
      %218 = dma.done [#allocation16], 48
    $region113: #{tpu_custom_call.1} parent=1 // pred_fallthru
      _
    // Predicated region
    $region114: #{tpu_custom_call.1} parent=1 // pred_check
      _
    $region115: #{tpu_custom_call.1} parent=1 // pred_check_branch
      %220 = sbr.rel (0) target = $region117
    $region116: #{tpu_custom_call.1} parent=1 // pred_region
      %222 = dma.done [#allocation16], 48
    $region117: #{tpu_custom_call.1} parent=1 // pred_fallthru
      _
    // Predicated region
    $region118: #{tpu_custom_call.1} parent=1 // pred_check
      _
    $region119: #{tpu_custom_call.1} parent=1 // pred_check_branch
      %224 = sbr.rel (0) target = $region121
    $region120: #{tpu_custom_call.1} parent=1 // pred_region
      %226 = dma.done [#allocation19], 512
    $region121: #{tpu_custom_call.1} parent=1 // pred_fallthru
      _
    // Predicated region
    $region122: #{tpu_custom_call.1} parent=1 // pred_check
      _
    $region123: #{tpu_custom_call.1} parent=1 // pred_check_branch
      %228 = sbr.rel (0) target = $region125
    $region124: #{tpu_custom_call.1} parent=1 // pred_region
      %230 = dma.done [#allocation19], 512
    $region125: #{tpu_custom_call.1} parent=1 // pred_fallthru
      _
    %v231 = vld [vmem:[#allocation3] sm:$0xff]
    %v232 = vld [vmem:[#allocation3 + $0x8] sm:$0xff]
    %v233 = vld [vmem:[#allocation8] sm:$0x1]
    %v234 = vld [vmem:[#allocation9] sm:$0x1]
    %vm235 = vcmask 261120
    %v236 = vsel %vm235, %v231, 0.0
    %237 = vadd.xlane.f32.xlu0 %v236
    %v238 = vpop.xlane.xlu0 %237
    %v239 = vsel %vm235, %v232, 0.0
    %240 = vadd.xlane.f32.xlu0 %v239
    %v241 = vpop.xlane.xlu0 %240
    %v242 = vrcp.pop 32.0
    %v243 = vmul.f32 32.0, %v242
    %v244 = vsub.f32 1.0, %v243
    %v245 = vmul.f32 %v242, %v244
    %v246 = vadd.f32 %v242, %v245
    %vm247 = vweird.f32 %v242
    %v248 = vsel %vm247, %v242, %v246
    %v249 = vmul.f32 %v238, %v248
    %v250 = vmul.f32 %v241, %v248
    %v251 = vsub.f32 %v231, %v249
    %v252 = vsub.f32 %v232, %v250
    %v253 = vmul.f32 %v251, %v251
    %v254 = vmul.f32 %v252, %v252
    %v255 = vsel %vm235, %v253, 0.0
    %256 = vadd.xlane.f32.xlu0 %v255
    %v257 = vpop.xlane.xlu0 %256
    %v258 = vsel %vm235, %v254, 0.0
    %259 = vadd.xlane.f32.xlu0 %v258
    %v260 = vpop.xlane.xlu0 %259
    %v261 = vmul.f32 %v257, %v248
    %v262 = vmul.f32 %v260, %v248
    %v263 = vadd.f32 %v261, 1e-12
    %v264 = vadd.f32 %v262, 1e-12
    %v265 = vrsqrt.pop %v263
    %v266 = vmul.f32 %v265, %v263
    %v267 = vmul.f32 %v266, %v265
    %v268 = vmul.f32 0.5, %v267
    %v269 = vsub.f32 1.5, %v268
    %v270 = vmul.f32 %v265, %v269
    %vm271 = vweird.f32 %v263
    %vm272 = vweird.f32 %v265
    %vm273 = vmor %vm271, %vm272
    %v274 = vsel %vm273, %v265, %v270
    %v275 = vrsqrt.pop %v264
    %v276 = vmul.f32 %v275, %v264
    %v277 = vmul.f32 %v276, %v275
    %v278 = vmul.f32 0.5, %v277
    %v279 = vsub.f32 1.5, %v278
    %v280 = vmul.f32 %v275, %v279
    %vm281 = vweird.f32 %v264
    %vm282 = vweird.f32 %v275
    %vm283 = vmor %vm281, %vm282
    %v284 = vsel %vm283, %v275, %v280
    %v285 = vmul.f32 %v251, %v274
    %v286 = vmul.f32 %v252, %v284
    %v288 = vperm.slane %v233, 0
    %v290 = vmul.f32 %v285, %v288
    %v291 = vmul.f32 %v286, %v288
    %v293 = vperm.slane %v234, 0
    %v295 = vadd.f32 %v290, %v293
    %v296 = vadd.f32 %v291, %v293
    %v297 = vld [vmem:[%s4] sm:$0xff]
    %v298 = vld [vmem:[%s4 + $0x8] sm:$0xff]
    %v299 = vld [vmem:[%s4 + $0x10] sm:$0xff]
    %v300 = vld [vmem:[%s4 + $0x18] sm:$0xff]
    %v301 = vld [vmem:[%s5] sm:$0x1]
    %v303 = vperm.slane %v301, 0
    %v306 = vsel %vm235, %v295, 0
    %v309 = vsel %vm235, %v296, 0
    %311 = vmatpush.msra.mxu0 0.0
    %312 = vmatpush.msra.mxu0 0.0
    %313 = vmatpush.msra.mxu0 0.0
    %314 = vmatpush.msra.mxu0 0.0
    %315 = vmatpush.msra.mxu0 0.0
    %316 = vmatpush.msra.mxu0 0.0
    %317 = vmatpush.msra.mxu0 0.0
    %318 = vmatpush.msra.mxu0 0.0
    %319 = vmatpush.msra.mxu0 0.0
    %320 = vmatpush.msra.mxu0 0.0
    %321 = vmatpush.msra.mxu0 0.0
    %322 = vmatpush.msra.mxu0 0.0
    %323 = vmatpush.msra.mxu0 %v300
    %324 = vmatpush.msra.mxu0 %v299
    %325 = vmatpush.msra.mxu0 %v298
    %326 = vmatpush.msra.mxu0 %v297
    %327 = vmatmul.f32.gmra.mxu0 %v306
    %v328 = vpop.f32.mrf.mxu0
    %v329 = vadd.f32 %v303, %v328
    %330 = vmatmul.f32.gmra.mxu0 %v309
    %v331 = vpop.f32.mrf.mxu0
    %v332 = vadd.f32 %v303, %v331
    %333 = vdwg.mxu0
    %v334 = vld [vmem:[#allocation6] sm:$0x1]
    %336 = vrot.lane.b32.xlu0 %v329, 96
    %v337 = vpop.permute.xlu0 %336
    %vm338 = vcmask 64512
    %v339 = vsel %vm338, %v329, 0
    %v341 = vsel %vm338, %v337, 0
    %343 = vmatpush.xpose.msra.mxu0 0.0
    %344 = vmatpush.xpose.msra.mxu0 0.0
    %345 = vmatpush.xpose.msra.mxu0 0.0
    %346 = vmatpush.xpose.msra.mxu0 0.0
    %347 = vmatpush.xpose.msra.mxu0 0.0
    %348 = vmatpush.xpose.msra.mxu0 0.0
    %349 = vmatpush.xpose.msra.mxu0 0.0
    %350 = vmatpush.xpose.msra.mxu0 0.0
    %351 = vmatpush.xpose.msra.mxu0 0.0
    %352 = vmatpush.xpose.msra.mxu0 0.0
    %353 = vmatpush.xpose.msra.mxu0 0.0
    %354 = vmatpush.xpose.msra.mxu0 0.0
    %355 = vmatpush.xpose.msra.mxu0 0.0
    %356 = vmatpush.xpose.msra.mxu0 0.0
    %357 = vmatpush.xpose.msra.mxu0 0.0
    %358 = vmatpush.xpose.msra.mxu0 %v341
    %359 = vmatmul.f32.gmra.mxu0 %v339
    %v360 = vpop.f32.mrf.mxu0
    %v361 = vadd.f32 0.0, %v360
    %362 = vdwg.mxu0
    %v363 = vmul.f32 %v361, 0.35355338
    %v364 = vperm.slane %v334, 0
    %v365 = vadd.f32 %v363, %v364
    %v366 = vsel %vm338, %v365, -inf
    %367 = vmax.xlane.f32.xlu0 %v366
    %v368 = vpop.xlane.xlu0 %367
    %v369 = vsub.f32 %v365, %v368
    %v370 = vmul.f32 %v369, 1.442695
    %v371 = vpow.pop %v370
    %v372 = vsel %vm338, %v371, 0.0
    %373 = vadd.xlane.f32.xlu0 %v372
    %v374 = vpop.xlane.xlu0 %373
    %v375 = vrcp.pop %v374
    %v376 = vmul.f32 %v371, %v375
    %377 = vrot.lane.b32.xlu0 %v329, 64
    %v378 = vpop.permute.xlu0 %377
    %v381 = vsel %vm338, %v376, 0
    %383 = vmatpush.msra.mxu0 0.0
    %384 = vmatpush.msra.mxu0 0.0
    %385 = vmatpush.msra.mxu0 0.0
    %386 = vmatpush.msra.mxu0 0.0
    %387 = vmatpush.msra.mxu0 0.0
    %388 = vmatpush.msra.mxu0 0.0
    %389 = vmatpush.msra.mxu0 0.0
    %390 = vmatpush.msra.mxu0 0.0
    %391 = vmatpush.msra.mxu0 0.0
    %392 = vmatpush.msra.mxu0 0.0
    %393 = vmatpush.msra.mxu0 0.0
    %394 = vmatpush.msra.mxu0 0.0
    %395 = vmatpush.msra.mxu0 0.0
    %396 = vmatpush.msra.mxu0 0.0
    %397 = vmatpush.msra.mxu0 0.0
    %398 = vmatpush.msra.mxu0 %v378
    %399 = vmatmul.f32.gmra.mxu0 %v381
    %v400 = vpop.f32.mrf.mxu0
    %v401 = vadd.f32 0.0, %v400
    %402 = vdwg.mxu0
    %403 = vst.msk [vmem:[#allocation2] sm:$0xff] %vm338, %v401
    %404 = vrot.lane.b32.xlu0 %v329, 120
    %v405 = vpop.permute.xlu0 %404
    %406 = vrot.lane.b32.xlu0 %v329, 88
    %v407 = vpop.permute.xlu0 %406
    %v408 = vsel %vm338, %v405, 0
    %v410 = vsel %vm338, %v407, 0
    %412 = vmatpush.xpose.msra.mxu0 0.0
    %413 = vmatpush.xpose.msra.mxu0 0.0
    %414 = vmatpush.xpose.msra.mxu0 0.0
    %415 = vmatpush.xpose.msra.mxu0 0.0
    %416 = vmatpush.xpose.msra.mxu0 0.0
    %417 = vmatpush.xpose.msra.mxu0 0.0
    %418 = vmatpush.xpose.msra.mxu0 0.0
    %419 = vmatpush.xpose.msra.mxu0 0.0
    %420 = vmatpush.xpose.msra.mxu0 0.0
    %421 = vmatpush.xpose.msra.mxu0 0.0
    %422 = vmatpush.xpose.msra.mxu0 0.0
    %423 = vmatpush.xpose.msra.mxu0 0.0
    %424 = vmatpush.xpose.msra.mxu0 0.0
    %425 = vmatpush.xpose.msra.mxu0 0.0
    %426 = vmatpush.xpose.msra.mxu0 0.0
    %427 = vmatpush.xpose.msra.mxu0 %v410
    %428 = vmatmul.f32.gmra.mxu0 %v408
    %v429 = vpop.f32.mrf.mxu0
    %v430 = vadd.f32 0.0, %v429
    %431 = vdwg.mxu0
    %v432 = vmul.f32 %v430, 0.35355338
    %v433 = vadd.f32 %v432, %v364
    %v434 = vsel %vm338, %v433, -inf
    %435 = vmax.xlane.f32.xlu0 %v434
    %v436 = vpop.xlane.xlu0 %435
    %v437 = vsub.f32 %v433, %v436
    %v438 = vmul.f32 %v437, 1.442695
    %v439 = vpow.pop %v438
    %v440 = vsel %vm338, %v439, 0.0
    %441 = vadd.xlane.f32.xlu0 %v440
    %v442 = vpop.xlane.xlu0 %441
    %v443 = vrcp.pop %v442
    %v444 = vmul.f32 %v439, %v443
    %445 = vrot.lane.b32.xlu0 %v329, 56
    %v446 = vpop.permute.xlu0 %445
    %v449 = vsel %vm338, %v444, 0
    %451 = vmatpush.msra.mxu0 0.0
    %452 = vmatpush.msra.mxu0 0.0
    %453 = vmatpush.msra.mxu0 0.0
    %454 = vmatpush.msra.mxu0 0.0
    %455 = vmatpush.msra.mxu0 0.0
    %456 = vmatpush.msra.mxu0 0.0
    %457 = vmatpush.msra.mxu0 0.0
    %458 = vmatpush.msra.mxu0 0.0
    %459 = vmatpush.msra.mxu0 0.0
    %460 = vmatpush.msra.mxu0 0.0
    %461 = vmatpush.msra.mxu0 0.0
    %462 = vmatpush.msra.mxu0 0.0
    %463 = vmatpush.msra.mxu0 0.0
    %464 = vmatpush.msra.mxu0 0.0
    %465 = vmatpush.msra.mxu0 0.0
    %466 = vmatpush.msra.mxu0 %v446
    %467 = vmatmul.f32.gmra.mxu0 %v449
    %v468 = vpop.f32.mrf.mxu0
    %v469 = vadd.f32 0.0, %v468
    %470 = vdwg.mxu0
    %472 = vrot.lane.b32.xlu0 %v469, 8
    %v473 = vpop.permute.xlu0 %472
    %vm475 = vcmask 130112
    %476 = vst.msk [vmem:[#allocation2] sm:$0xff] %vm475, %v473
    %477 = vrot.lane.b32.xlu0 %v329, 112
    %v478 = vpop.permute.xlu0 %477
    %479 = vrot.lane.b32.xlu0 %v329, 80
    %v480 = vpop.permute.xlu0 %479
    %v481 = vsel %vm338, %v478, 0
    %v483 = vsel %vm338, %v480, 0
    %485 = vmatpush.xpose.msra.mxu0 0.0
    %486 = vmatpush.xpose.msra.mxu0 0.0
    %487 = vmatpush.xpose.msra.mxu0 0.0
    %488 = vmatpush.xpose.msra.mxu0 0.0
    %489 = vmatpush.xpose.msra.mxu0 0.0
    %490 = vmatpush.xpose.msra.mxu0 0.0
    %491 = vmatpush.xpose.msra.mxu0 0.0
    %492 = vmatpush.xpose.msra.mxu0 0.0
    %493 = vmatpush.xpose.msra.mxu0 0.0
    %494 = vmatpush.xpose.msra.mxu0 0.0
    %495 = vmatpush.xpose.msra.mxu0 0.0
    %496 = vmatpush.xpose.msra.mxu0 0.0
    %497 = vmatpush.xpose.msra.mxu0 0.0
    %498 = vmatpush.xpose.msra.mxu0 0.0
    %499 = vmatpush.xpose.msra.mxu0 0.0
    %500 = vmatpush.xpose.msra.mxu0 %v483
    %501 = vmatmul.f32.gmra.mxu0 %v481
    %v502 = vpop.f32.mrf.mxu0
    %v503 = vadd.f32 0.0, %v502
    %504 = vdwg.mxu0
    %v505 = vmul.f32 %v503, 0.35355338
    %v506 = vadd.f32 %v505, %v364
    %v507 = vsel %vm338, %v506, -inf
    %508 = vmax.xlane.f32.xlu0 %v507
    %v509 = vpop.xlane.xlu0 %508
    %v510 = vsub.f32 %v506, %v509
    %v511 = vmul.f32 %v510, 1.442695
    %v512 = vpow.pop %v511
    %v513 = vsel %vm338, %v512, 0.0
    %514 = vadd.xlane.f32.xlu0 %v513
    %v515 = vpop.xlane.xlu0 %514
    %v516 = vrcp.pop %v515
    %v517 = vmul.f32 %v512, %v516
    %518 = vrot.lane.b32.xlu0 %v329, 48
    %v519 = vpop.permute.xlu0 %518
    %v522 = vsel %vm338, %v517, 0
    %524 = vmatpush.msra.mxu0 0.0
    %525 = vmatpush.msra.mxu0 0.0
    %526 = vmatpush.msra.mxu0 0.0
    %527 = vmatpush.msra.mxu0 0.0
    %528 = vmatpush.msra.mxu0 0.0
    %529 = vmatpush.msra.mxu0 0.0
    %530 = vmatpush.msra.mxu0 0.0
    %531 = vmatpush.msra.mxu0 0.0
    %532 = vmatpush.msra.mxu0 0.0
    %533 = vmatpush.msra.mxu0 0.0
    %534 = vmatpush.msra.mxu0 0.0
    %535 = vmatpush.msra.mxu0 0.0
    %536 = vmatpush.msra.mxu0 0.0
    %537 = vmatpush.msra.mxu0 0.0
    %538 = vmatpush.msra.mxu0 0.0
    %539 = vmatpush.msra.mxu0 %v519
    %540 = vmatmul.f32.gmra.mxu0 %v522
    %v541 = vpop.f32.mrf.mxu0
    %v542 = vadd.f32 0.0, %v541
    %543 = vdwg.mxu0
    %545 = vrot.lane.b32.xlu0 %v542, 16
    %v546 = vpop.permute.xlu0 %545
    %vm548 = vcmask 195712
    %549 = vst.msk [vmem:[#allocation2] sm:$0xff] %vm548, %v546
    %550 = vrot.lane.b32.xlu0 %v329, 104
    %v551 = vpop.permute.xlu0 %550
    %552 = vrot.lane.b32.xlu0 %v329, 72
    %v553 = vpop.permute.xlu0 %552
    %v554 = vsel %vm338, %v551, 0
    %v556 = vsel %vm338, %v553, 0
    %558 = vmatpush.xpose.msra.mxu0 0.0
    %559 = vmatpush.xpose.msra.mxu0 0.0
    %560 = vmatpush.xpose.msra.mxu0 0.0
    %561 = vmatpush.xpose.msra.mxu0 0.0
    %562 = vmatpush.xpose.msra.mxu0 0.0
    %563 = vmatpush.xpose.msra.mxu0 0.0
    %564 = vmatpush.xpose.msra.mxu0 0.0
    %565 = vmatpush.xpose.msra.mxu0 0.0
    %566 = vmatpush.xpose.msra.mxu0 0.0
    %567 = vmatpush.xpose.msra.mxu0 0.0
    %568 = vmatpush.xpose.msra.mxu0 0.0
    %569 = vmatpush.xpose.msra.mxu0 0.0
    %570 = vmatpush.xpose.msra.mxu0 0.0
    %571 = vmatpush.xpose.msra.mxu0 0.0
    %572 = vmatpush.xpose.msra.mxu0 0.0
    %573 = vmatpush.xpose.msra.mxu0 %v556
    %574 = vmatmul.f32.gmra.mxu0 %v554
    %v575 = vpop.f32.mrf.mxu0
    %v576 = vadd.f32 0.0, %v575
    %577 = vdwg.mxu0
    %v578 = vmul.f32 %v576, 0.35355338
    %v579 = vadd.f32 %v578, %v364
    %v580 = vsel %vm338, %v579, -inf
    %581 = vmax.xlane.f32.xlu0 %v580
    %v582 = vpop.xlane.xlu0 %581
    %v583 = vsub.f32 %v579, %v582
    %v584 = vmul.f32 %v583, 1.442695
    %v585 = vpow.pop %v584
    %v586 = vsel %vm338, %v585, 0.0
    %587 = vadd.xlane.f32.xlu0 %v586
    %v588 = vpop.xlane.xlu0 %587
    %v589 = vrcp.pop %v588
    %v590 = vmul.f32 %v585, %v589
    %591 = vrot.lane.b32.xlu0 %v329, 40
    %v592 = vpop.permute.xlu0 %591
    %v595 = vsel %vm338, %v590, 0
    %597 = vmatpush.msra.mxu0 0.0
    %598 = vmatpush.msra.mxu0 0.0
    %599 = vmatpush.msra.mxu0 0.0
    %600 = vmatpush.msra.mxu0 0.0
    %601 = vmatpush.msra.mxu0 0.0
    %602 = vmatpush.msra.mxu0 0.0
    %603 = vmatpush.msra.mxu0 0.0
    %604 = vmatpush.msra.mxu0 0.0
    %605 = vmatpush.msra.mxu0 0.0
    %606 = vmatpush.msra.mxu0 0.0
    %607 = vmatpush.msra.mxu0 0.0
    %608 = vmatpush.msra.mxu0 0.0
    %609 = vmatpush.msra.mxu0 0.0
    %610 = vmatpush.msra.mxu0 0.0
    %611 = vmatpush.msra.mxu0 0.0
    %612 = vmatpush.msra.mxu0 %v592
    %613 = vmatmul.f32.gmra.mxu0 %v595
    %v614 = vpop.f32.mrf.mxu0
    %v615 = vadd.f32 0.0, %v614
    %616 = vdwg.mxu0
    %618 = vrot.lane.b32.xlu0 %v615, 24
    %v619 = vpop.permute.xlu0 %618
    %vm621 = vcmask 261312
    %622 = vst.msk [vmem:[#allocation2] sm:$0xff] %vm621, %v619
    %v623 = vld [vmem:[#allocation6 + $0x1] sm:$0x1]
    %625 = vrot.lane.b32.xlu0 %v332, 96
    %v626 = vpop.permute.xlu0 %625
    %v627 = vsel %vm338, %v332, 0
    %v629 = vsel %vm338, %v626, 0
    %631 = vmatpush.xpose.msra.mxu0 0.0
    %632 = vmatpush.xpose.msra.mxu0 0.0
    %633 = vmatpush.xpose.msra.mxu0 0.0
    %634 = vmatpush.xpose.msra.mxu0 0.0
    %635 = vmatpush.xpose.msra.mxu0 0.0
    %636 = vmatpush.xpose.msra.mxu0 0.0
    %637 = vmatpush.xpose.msra.mxu0 0.0
    %638 = vmatpush.xpose.msra.mxu0 0.0
    %639 = vmatpush.xpose.msra.mxu0 0.0
    %640 = vmatpush.xpose.msra.mxu0 0.0
    %641 = vmatpush.xpose.msra.mxu0 0.0
    %642 = vmatpush.xpose.msra.mxu0 0.0
    %643 = vmatpush.xpose.msra.mxu0 0.0
    %644 = vmatpush.xpose.msra.mxu0 0.0
    %645 = vmatpush.xpose.msra.mxu0 0.0
    %646 = vmatpush.xpose.msra.mxu0 %v629
    %647 = vmatmul.f32.gmra.mxu0 %v627
    %v648 = vpop.f32.mrf.mxu0
    %v649 = vadd.f32 0.0, %v648
    %650 = vdwg.mxu0
    %v651 = vmul.f32 %v649, 0.35355338
    %v652 = vperm.slane %v623, 0
    %v653 = vadd.f32 %v651, %v652
    %v654 = vsel %vm338, %v653, -inf
    %655 = vmax.xlane.f32.xlu0 %v654
    %v656 = vpop.xlane.xlu0 %655
    %v657 = vsub.f32 %v653, %v656
    %v658 = vmul.f32 %v657, 1.442695
    %v659 = vpow.pop %v658
    %v660 = vsel %vm338, %v659, 0.0
    %661 = vadd.xlane.f32.xlu0 %v660
    %v662 = vpop.xlane.xlu0 %661
    %v663 = vrcp.pop %v662
    %v664 = vmul.f32 %v659, %v663
    %665 = vrot.lane.b32.xlu0 %v332, 64
    %v666 = vpop.permute.xlu0 %665
    %v669 = vsel %vm338, %v664, 0
    %671 = vmatpush.msra.mxu0 0.0
    %672 = vmatpush.msra.mxu0 0.0
    %673 = vmatpush.msra.mxu0 0.0
    %674 = vmatpush.msra.mxu0 0.0
    %675 = vmatpush.msra.mxu0 0.0
    %676 = vmatpush.msra.mxu0 0.0
    %677 = vmatpush.msra.mxu0 0.0
    %678 = vmatpush.msra.mxu0 0.0
    %679 = vmatpush.msra.mxu0 0.0
    %680 = vmatpush.msra.mxu0 0.0
    %681 = vmatpush.msra.mxu0 0.0
    %682 = vmatpush.msra.mxu0 0.0
    %683 = vmatpush.msra.mxu0 0.0
    %684 = vmatpush.msra.mxu0 0.0
    %685 = vmatpush.msra.mxu0 0.0
    %686 = vmatpush.msra.mxu0 %v666
    %687 = vmatmul.f32.gmra.mxu0 %v669
    %v688 = vpop.f32.mrf.mxu0
    %v689 = vadd.f32 0.0, %v688
    %690 = vdwg.mxu0
    %691 = vst.msk [vmem:[#allocation2 + $0x8] sm:$0xff] %vm338, %v689
    %692 = vrot.lane.b32.xlu0 %v332, 120
    %v693 = vpop.permute.xlu0 %692
    %694 = vrot.lane.b32.xlu0 %v332, 88
    %v695 = vpop.permute.xlu0 %694
    %v696 = vsel %vm338, %v693, 0
    %v698 = vsel %vm338, %v695, 0
    %700 = vmatpush.xpose.msra.mxu0 0.0
    %701 = vmatpush.xpose.msra.mxu0 0.0
    %702 = vmatpush.xpose.msra.mxu0 0.0
    %703 = vmatpush.xpose.msra.mxu0 0.0
    %704 = vmatpush.xpose.msra.mxu0 0.0
    %705 = vmatpush.xpose.msra.mxu0 0.0
    %706 = vmatpush.xpose.msra.mxu0 0.0
    %707 = vmatpush.xpose.msra.mxu0 0.0
    %708 = vmatpush.xpose.msra.mxu0 0.0
    %709 = vmatpush.xpose.msra.mxu0 0.0
    %710 = vmatpush.xpose.msra.mxu0 0.0
    %711 = vmatpush.xpose.msra.mxu0 0.0
    %712 = vmatpush.xpose.msra.mxu0 0.0
    %713 = vmatpush.xpose.msra.mxu0 0.0
    %714 = vmatpush.xpose.msra.mxu0 0.0
    %715 = vmatpush.xpose.msra.mxu0 %v698
    %716 = vmatmul.f32.gmra.mxu0 %v696
    %v717 = vpop.f32.mrf.mxu0
    %v718 = vadd.f32 0.0, %v717
    %719 = vdwg.mxu0
    %v720 = vmul.f32 %v718, 0.35355338
    %v721 = vadd.f32 %v720, %v652
    %v722 = vsel %vm338, %v721, -inf
    %723 = vmax.xlane.f32.xlu0 %v722
    %v724 = vpop.xlane.xlu0 %723
    %v725 = vsub.f32 %v721, %v724
    %v726 = vmul.f32 %v725, 1.442695
    %v727 = vpow.pop %v726
    %v728 = vsel %vm338, %v727, 0.0
    %729 = vadd.xlane.f32.xlu0 %v728
    %v730 = vpop.xlane.xlu0 %729
    %v731 = vrcp.pop %v730
    %v732 = vmul.f32 %v727, %v731
    %733 = vrot.lane.b32.xlu0 %v332, 56
    %v734 = vpop.permute.xlu0 %733
    %v737 = vsel %vm338, %v732, 0
    %739 = vmatpush.msra.mxu0 0.0
    %740 = vmatpush.msra.mxu0 0.0
    %741 = vmatpush.msra.mxu0 0.0
    %742 = vmatpush.msra.mxu0 0.0
    %743 = vmatpush.msra.mxu0 0.0
    %744 = vmatpush.msra.mxu0 0.0
    %745 = vmatpush.msra.mxu0 0.0
    %746 = vmatpush.msra.mxu0 0.0
    %747 = vmatpush.msra.mxu0 0.0
    %748 = vmatpush.msra.mxu0 0.0
    %749 = vmatpush.msra.mxu0 0.0
    %750 = vmatpush.msra.mxu0 0.0
    %751 = vmatpush.msra.mxu0 0.0
    %752 = vmatpush.msra.mxu0 0.0
    %753 = vmatpush.msra.mxu0 0.0
    %754 = vmatpush.msra.mxu0 %v734
    %755 = vmatmul.f32.gmra.mxu0 %v737
    %v756 = vpop.f32.mrf.mxu0
    %v757 = vadd.f32 0.0, %v756
    %758 = vdwg.mxu0
    %760 = vrot.lane.b32.xlu0 %v757, 8
    %v761 = vpop.permute.xlu0 %760
    %763 = vst.msk [vmem:[#allocation2 + $0x8] sm:$0xff] %vm475, %v761
    %764 = vrot.lane.b32.xlu0 %v332, 112
    %v765 = vpop.permute.xlu0 %764
    %766 = vrot.lane.b32.xlu0 %v332, 80
    %v767 = vpop.permute.xlu0 %766
    %v768 = vsel %vm338, %v765, 0
    %v770 = vsel %vm338, %v767, 0
    %772 = vmatpush.xpose.msra.mxu0 0.0
    %773 = vmatpush.xpose.msra.mxu0 0.0
    %774 = vmatpush.xpose.msra.mxu0 0.0
    %775 = vmatpush.xpose.msra.mxu0 0.0
    %776 = vmatpush.xpose.msra.mxu0 0.0
    %777 = vmatpush.xpose.msra.mxu0 0.0
    %778 = vmatpush.xpose.msra.mxu0 0.0
    %779 = vmatpush.xpose.msra.mxu0 0.0
    %780 = vmatpush.xpose.msra.mxu0 0.0
    %781 = vmatpush.xpose.msra.mxu0 0.0
    %782 = vmatpush.xpose.msra.mxu0 0.0
    %783 = vmatpush.xpose.msra.mxu0 0.0
    %784 = vmatpush.xpose.msra.mxu0 0.0
    %785 = vmatpush.xpose.msra.mxu0 0.0
    %786 = vmatpush.xpose.msra.mxu0 0.0
    %787 = vmatpush.xpose.msra.mxu0 %v770
    %788 = vmatmul.f32.gmra.mxu0 %v768
    %v789 = vpop.f32.mrf.mxu0
    %v790 = vadd.f32 0.0, %v789
    %791 = vdwg.mxu0
    %v792 = vmul.f32 %v790, 0.35355338
    %v793 = vadd.f32 %v792, %v652
    %v794 = vsel %vm338, %v793, -inf
    %795 = vmax.xlane.f32.xlu0 %v794
    %v796 = vpop.xlane.xlu0 %795
    %v797 = vsub.f32 %v793, %v796
    %v798 = vmul.f32 %v797, 1.442695
    %v799 = vpow.pop %v798
    %v800 = vsel %vm338, %v799, 0.0
    %801 = vadd.xlane.f32.xlu0 %v800
    %v802 = vpop.xlane.xlu0 %801
    %v803 = vrcp.pop %v802
    %v804 = vmul.f32 %v799, %v803
    %805 = vrot.lane.b32.xlu0 %v332, 48
    %v806 = vpop.permute.xlu0 %805
    %v809 = vsel %vm338, %v804, 0
    %811 = vmatpush.msra.mxu0 0.0
    %812 = vmatpush.msra.mxu0 0.0
    %813 = vmatpush.msra.mxu0 0.0
    %814 = vmatpush.msra.mxu0 0.0
    %815 = vmatpush.msra.mxu0 0.0
    %816 = vmatpush.msra.mxu0 0.0
    %817 = vmatpush.msra.mxu0 0.0
    %818 = vmatpush.msra.mxu0 0.0
    %819 = vmatpush.msra.mxu0 0.0
    %820 = vmatpush.msra.mxu0 0.0
    %821 = vmatpush.msra.mxu0 0.0
    %822 = vmatpush.msra.mxu0 0.0
    %823 = vmatpush.msra.mxu0 0.0
    %824 = vmatpush.msra.mxu0 0.0
    %825 = vmatpush.msra.mxu0 0.0
    %826 = vmatpush.msra.mxu0 %v806
    %827 = vmatmul.f32.gmra.mxu0 %v809
    %v828 = vpop.f32.mrf.mxu0
    %v829 = vadd.f32 0.0, %v828
    %830 = vdwg.mxu0
    %832 = vrot.lane.b32.xlu0 %v829, 16
    %v833 = vpop.permute.xlu0 %832
    %835 = vst.msk [vmem:[#allocation2 + $0x8] sm:$0xff] %vm548, %v833
    %836 = vrot.lane.b32.xlu0 %v332, 104
    %v837 = vpop.permute.xlu0 %836
    %838 = vrot.lane.b32.xlu0 %v332, 72
    %v839 = vpop.permute.xlu0 %838
    %v840 = vsel %vm338, %v837, 0
    %v842 = vsel %vm338, %v839, 0
    %844 = vmatpush.xpose.msra.mxu0 0.0
    %845 = vmatpush.xpose.msra.mxu0 0.0
    %846 = vmatpush.xpose.msra.mxu0 0.0
    %847 = vmatpush.xpose.msra.mxu0 0.0
    %848 = vmatpush.xpose.msra.mxu0 0.0
    %849 = vmatpush.xpose.msra.mxu0 0.0
    %850 = vmatpush.xpose.msra.mxu0 0.0
    %851 = vmatpush.xpose.msra.mxu0 0.0
    %852 = vmatpush.xpose.msra.mxu0 0.0
    %853 = vmatpush.xpose.msra.mxu0 0.0
    %854 = vmatpush.xpose.msra.mxu0 0.0
    %855 = vmatpush.xpose.msra.mxu0 0.0
    %856 = vmatpush.xpose.msra.mxu0 0.0
    %857 = vmatpush.xpose.msra.mxu0 0.0
    %858 = vmatpush.xpose.msra.mxu0 0.0
    %859 = vmatpush.xpose.msra.mxu0 %v842
    %860 = vmatmul.f32.gmra.mxu0 %v840
    %v861 = vpop.f32.mrf.mxu0
    %v862 = vadd.f32 0.0, %v861
    %863 = vdwg.mxu0
    %v864 = vmul.f32 %v862, 0.35355338
    %v865 = vadd.f32 %v864, %v652
    %v866 = vsel %vm338, %v865, -inf
    %867 = vmax.xlane.f32.xlu0 %v866
    %v868 = vpop.xlane.xlu0 %867
    %v869 = vsub.f32 %v865, %v868
    %v870 = vmul.f32 %v869, 1.442695
    %v871 = vpow.pop %v870
    %v872 = vsel %vm338, %v871, 0.0
    %873 = vadd.xlane.f32.xlu0 %v872
    %v874 = vpop.xlane.xlu0 %873
    %v875 = vrcp.pop %v874
    %v876 = vmul.f32 %v871, %v875
    %877 = vrot.lane.b32.xlu0 %v332, 40
    %v878 = vpop.permute.xlu0 %877
    %v881 = vsel %vm338, %v876, 0
    %883 = vmatpush.msra.mxu0 0.0
    %884 = vmatpush.msra.mxu0 0.0
    %885 = vmatpush.msra.mxu0 0.0
    %886 = vmatpush.msra.mxu0 0.0
    %887 = vmatpush.msra.mxu0 0.0
    %888 = vmatpush.msra.mxu0 0.0
    %889 = vmatpush.msra.mxu0 0.0
    %890 = vmatpush.msra.mxu0 0.0
    %891 = vmatpush.msra.mxu0 0.0
    %892 = vmatpush.msra.mxu0 0.0
    %893 = vmatpush.msra.mxu0 0.0
    %894 = vmatpush.msra.mxu0 0.0
    %895 = vmatpush.msra.mxu0 0.0
    %896 = vmatpush.msra.mxu0 0.0
    %897 = vmatpush.msra.mxu0 0.0
    %898 = vmatpush.msra.mxu0 %v878
    %899 = vmatmul.f32.gmra.mxu0 %v881
    %v900 = vpop.f32.mrf.mxu0
    %v901 = vadd.f32 0.0, %v900
    %902 = vdwg.mxu0
    %904 = vrot.lane.b32.xlu0 %v901, 24
    %v905 = vpop.permute.xlu0 %904
    %907 = vst.msk [vmem:[#allocation2 + $0x8] sm:$0xff] %vm621, %v905
    %v908 = vld [vmem:[#allocation2] sm:$0xff]
    %v909 = vld [vmem:[#allocation2 + $0x8] sm:$0xff]
    %v910 = vld [vmem:[%s6] sm:$0xff]
    %v911 = vld [vmem:[%s6 + $0x8] sm:$0xff]
    %v912 = vld [vmem:[%s6 + $0x10] sm:$0xff]
    %v913 = vld [vmem:[%s6 + $0x18] sm:$0xff]
    %v914 = vld [vmem:[#allocation11] sm:$0x1]
    %v916 = vperm.slane %v914, 0
    %v919 = vsel %vm235, %v908, 0
    %v922 = vsel %vm235, %v909, 0
    %924 = vmatpush.msra.mxu0 0.0
    %925 = vmatpush.msra.mxu0 0.0
    %926 = vmatpush.msra.mxu0 0.0
    %927 = vmatpush.msra.mxu0 0.0
    %928 = vmatpush.msra.mxu0 0.0
    %929 = vmatpush.msra.mxu0 0.0
    %930 = vmatpush.msra.mxu0 0.0
    %931 = vmatpush.msra.mxu0 0.0
    %932 = vmatpush.msra.mxu0 0.0
    %933 = vmatpush.msra.mxu0 0.0
    %934 = vmatpush.msra.mxu0 0.0
    %935 = vmatpush.msra.mxu0 0.0
    %936 = vmatpush.msra.mxu0 %v913
    %937 = vmatpush.msra.mxu0 %v912
    %938 = vmatpush.msra.mxu0 %v911
    %939 = vmatpush.msra.mxu0 %v910
    %940 = vmatmul.f32.gmra.mxu0 %v919
    %v941 = vpop.f32.mrf.mxu0
    %v942 = vadd.f32 %v916, %v941
    %943 = vmatmul.f32.gmra.mxu0 %v922
    %v944 = vpop.f32.mrf.mxu0
    %v945 = vadd.f32 %v916, %v944
    %946 = vdwg.mxu0
    %v947 = vadd.f32 %v295, %v942
    %v948 = vadd.f32 %v296, %v945
    %v949 = vld [vmem:[%s8] sm:$0x1]
    %v950 = vld [vmem:[#allocation12] sm:$0x1]
    %v951 = vsel %vm235, %v947, 0.0
    %952 = vadd.xlane.f32.xlu0 %v951
    %v953 = vpop.xlane.xlu0 %952
    %v954 = vsel %vm235, %v948, 0.0
    %955 = vadd.xlane.f32.xlu0 %v954
    %v956 = vpop.xlane.xlu0 %955
    %v957 = vmul.f32 %v953, %v248
    %v958 = vmul.f32 %v956, %v248
    %v959 = vsub.f32 %v947, %v957
    %v960 = vsub.f32 %v948, %v958
    %v961 = vmul.f32 %v959, %v959
    %v962 = vmul.f32 %v960, %v960
    %v963 = vsel %vm235, %v961, 0.0
    %964 = vadd.xlane.f32.xlu0 %v963
    %v965 = vpop.xlane.xlu0 %964
    %v966 = vsel %vm235, %v962, 0.0
    %967 = vadd.xlane.f32.xlu0 %v966
    %v968 = vpop.xlane.xlu0 %967
    %v969 = vmul.f32 %v965, %v248
    %v970 = vmul.f32 %v968, %v248
    %v971 = vadd.f32 %v969, 1e-12
    %v972 = vadd.f32 %v970, 1e-12
    %v973 = vrsqrt.pop %v971
    %v974 = vmul.f32 %v973, %v971
    %v975 = vmul.f32 %v974, %v973
    %v976 = vmul.f32 0.5, %v975
    %v977 = vsub.f32 1.5, %v976
    %v978 = vmul.f32 %v973, %v977
    %vm979 = vweird.f32 %v971
    %vm980 = vweird.f32 %v973
    %vm981 = vmor %vm979, %vm980
    %v982 = vsel %vm981, %v973, %v978
    %v983 = vrsqrt.pop %v972
    %v984 = vmul.f32 %v983, %v972
    %v985 = vmul.f32 %v984, %v983
    %v986 = vmul.f32 0.5, %v985
    %v987 = vsub.f32 1.5, %v986
    %v988 = vmul.f32 %v983, %v987
    %vm989 = vweird.f32 %v972
    %vm990 = vweird.f32 %v983
    %vm991 = vmor %vm989, %vm990
    %v992 = vsel %vm991, %v983, %v988
    %v993 = vmul.f32 %v959, %v982
    %v994 = vmul.f32 %v960, %v992
    %v996 = vperm.slane %v949, 0
    %v998 = vmul.f32 %v993, %v996
    %v999 = vmul.f32 %v994, %v996
    %v1001 = vperm.slane %v950, 0
    %v1003 = vadd.f32 %v998, %v1001
    %v1004 = vadd.f32 %v999, %v1001
    %v1005 = vld [vmem:[%s10] sm:$0xff]
    %v1006 = vld [vmem:[%s10 + $0x8] sm:$0xff]
    %v1007 = vld [vmem:[%s10 + $0x10] sm:$0xff]
    %v1008 = vld [vmem:[%s10 + $0x18] sm:$0xff]
    %v1009 = vld [vmem:[#allocation14] sm:$0x1]
    %v1011 = vperm.slane %v1009, 0
    %v1014 = vsel %vm235, %v1003, 0
    %v1017 = vsel %vm235, %v1004, 0
    %1019 = vmatpush.msra.mxu0 0.0
    %1020 = vmatpush.msra.mxu0 0.0
    %1021 = vmatpush.msra.mxu0 0.0
    %1022 = vmatpush.msra.mxu0 0.0
    %1023 = vmatpush.msra.mxu0 0.0
    %1024 = vmatpush.msra.mxu0 0.0
    %1025 = vmatpush.msra.mxu0 0.0
    %1026 = vmatpush.msra.mxu0 0.0
    %1027 = vmatpush.msra.mxu0 0.0
    %1028 = vmatpush.msra.mxu0 0.0
    %1029 = vmatpush.msra.mxu0 0.0
    %1030 = vmatpush.msra.mxu0 0.0
    %1031 = vmatpush.msra.mxu0 %v1008
    %1032 = vmatpush.msra.mxu0 %v1007
    %1033 = vmatpush.msra.mxu0 %v1006
    %1034 = vmatpush.msra.mxu0 %v1005
    %1035 = vmatmul.f32.gmra.mxu0 %v1014
    %v1036 = vpop.f32.mrf.mxu0
    %v1037 = vadd.f32 %v1011, %v1036
    %1038 = vmatmul.f32.gmra.mxu0 %v1017
    %v1039 = vpop.f32.mrf.mxu0
    %v1040 = vadd.f32 %v1011, %v1039
    %1041 = vdwg.mxu0
    %v1042 = vmul.f32 %v1037, %v1037
    %v1043 = vmul.f32 %v1040, %v1040
    %v1044 = vmul.f32 %v1037, %v1042
    %v1045 = vmul.f32 %v1040, %v1043
    %v1046 = vmul.f32 %v1044, 0.044715
    %v1047 = vmul.f32 %v1045, 0.044715
    %v1048 = vadd.f32 %v1037, %v1046
    %v1049 = vadd.f32 %v1040, %v1047
    %v1050 = vmul.f32 %v1048, 0.7978846
    %v1051 = vmul.f32 %v1049, 0.7978846
    %v1052 = vtanh.pop %v1050
    %v1053 = vtanh.pop %v1051
    %v1054 = vadd.f32 %v1052, 1.0
    %v1055 = vadd.f32 %v1053, 1.0
    %v1056 = vmul.f32 %v1054, 0.5
    %v1057 = vmul.f32 %v1055, 0.5
    %v1058 = vmul.f32 %v1037, %v1056
    %v1059 = vmul.f32 %v1040, %v1057
    %v1060 = vld [vmem:[%s12] sm:$0xff]
    %v1061 = vld [vmem:[%s12 + $0x8] sm:$0xff]
    %v1062 = vld [vmem:[%s12 + $0x10] sm:$0xff]
    %v1063 = vld [vmem:[%s12 + $0x18] sm:$0xff]
    %v1064 = vld [vmem:[%s12 + $0x20] sm:$0xff]
    %v1065 = vld [vmem:[%s12 + $0x28] sm:$0xff]
    %v1066 = vld [vmem:[%s12 + $0x30] sm:$0xff]
    %v1067 = vld [vmem:[%s12 + $0x38] sm:$0xff]
    %v1068 = vld [vmem:[%s13] sm:$0x1]
    %v1070 = vperm.slane %v1068, 0
    %vm1072 = vcmask 523264
    %v1074 = vsel %vm1072, %v1058, 0
    %v1077 = vsel %vm1072, %v1059, 0
    %1079 = vmatpush.msra.mxu0 0.0
    %1080 = vmatpush.msra.mxu0 0.0
    %1081 = vmatpush.msra.mxu0 0.0
    %1082 = vmatpush.msra.mxu0 0.0
    %1083 = vmatpush.msra.mxu0 0.0
    %1084 = vmatpush.msra.mxu0 0.0
    %1085 = vmatpush.msra.mxu0 0.0
    %1086 = vmatpush.msra.mxu0 0.0
    %1087 = vmatpush.msra.mxu0 %v1067
    %1088 = vmatpush.msra.mxu0 %v1066
    %1089 = vmatpush.msra.mxu0 %v1065
    %1090 = vmatpush.msra.mxu0 %v1064
    %1091 = vmatpush.msra.mxu0 %v1063
    %1092 = vmatpush.msra.mxu0 %v1062
    %1093 = vmatpush.msra.mxu0 %v1061
    %1094 = vmatpush.msra.mxu0 %v1060
    %1095 = vmatmul.f32.gmra.mxu0 %v1074
    %v1096 = vpop.f32.mrf.mxu0
    %v1097 = vadd.f32 %v1070, %v1096
    %1098 = vmatmul.f32.gmra.mxu0 %v1077
    %v1099 = vpop.f32.mrf.mxu0
    %v1100 = vadd.f32 %v1070, %v1099
    %1101 = vdwg.mxu0
    %v1102 = vadd.f32 %v1003, %v1097
    %v1103 = vadd.f32 %v1004, %v1100
    %v1104 = vld [vmem:[#allocation15] sm:$0x1]
    %v1105 = vld [vmem:[#allocation17] sm:$0x1]
    %v1106 = vsel %vm235, %v1102, 0.0
    %1107 = vadd.xlane.f32.xlu0 %v1106
    %v1108 = vpop.xlane.xlu0 %1107
    %v1109 = vsel %vm235, %v1103, 0.0
    %1110 = vadd.xlane.f32.xlu0 %v1109
    %v1111 = vpop.xlane.xlu0 %1110
    %v1112 = vmul.f32 %v1108, %v248
    %v1113 = vmul.f32 %v1111, %v248
    %v1114 = vsub.f32 %v1102, %v1112
    %v1115 = vsub.f32 %v1103, %v1113
    %v1116 = vmul.f32 %v1114, %v1114
    %v1117 = vmul.f32 %v1115, %v1115
    %v1118 = vsel %vm235, %v1116, 0.0
    %1119 = vadd.xlane.f32.xlu0 %v1118
    %v1120 = vpop.xlane.xlu0 %1119
    %v1121 = vsel %vm235, %v1117, 0.0
    %1122 = vadd.xlane.f32.xlu0 %v1121
    %v1123 = vpop.xlane.xlu0 %1122
    %v1124 = vmul.f32 %v1120, %v248
    %v1125 = vmul.f32 %v1123, %v248
    %v1126 = vadd.f32 %v1124, 1e-12
    %v1127 = vadd.f32 %v1125, 1e-12
    %v1128 = vrsqrt.pop %v1126
    %v1129 = vmul.f32 %v1128, %v1126
    %v1130 = vmul.f32 %v1129, %v1128
    %v1131 = vmul.f32 0.5, %v1130
    %v1132 = vsub.f32 1.5, %v1131
    %v1133 = vmul.f32 %v1128, %v1132
    %vm1134 = vweird.f32 %v1126
    %vm1135 = vweird.f32 %v1128
    %vm1136 = vmor %vm1134, %vm1135
    %v1137 = vsel %vm1136, %v1128, %v1133
    %v1138 = vrsqrt.pop %v1127
    %v1139 = vmul.f32 %v1138, %v1127
    %v1140 = vmul.f32 %v1139, %v1138
    %v1141 = vmul.f32 0.5, %v1140
    %v1142 = vsub.f32 1.5, %v1141
    %v1143 = vmul.f32 %v1138, %v1142
    %vm1144 = vweird.f32 %v1127
    %vm1145 = vweird.f32 %v1138
    %vm1146 = vmor %vm1144, %vm1145
    %v1147 = vsel %vm1146, %v1138, %v1143
    %v1148 = vmul.f32 %v1114, %v1137
    %v1149 = vmul.f32 %v1115, %v1147
    %v1151 = vperm.slane %v1104, 0
    %v1153 = vmul.f32 %v1148, %v1151
    %v1154 = vmul.f32 %v1149, %v1151
    %v1156 = vperm.slane %v1105, 0
    %v1158 = vadd.f32 %v1153, %v1156
    %v1159 = vadd.f32 %v1154, %v1156
    %s1160 = scalar_lea.vmem %s4, 32
    %v1161 = vld [vmem:[%s1160] sm:$0xff]
    %v1162 = vld [vmem:[%s1160 + $0x8] sm:$0xff]
    %v1163 = vld [vmem:[%s1160 + $0x10] sm:$0xff]
    %v1164 = vld [vmem:[%s1160 + $0x18] sm:$0xff]
    %s1165 = scalar_lea.vmem %s5, 1
    %v1166 = vld [vmem:[%s1165] sm:$0x1]
    %v1168 = vperm.slane %v1166, 0
    %v1171 = vsel %vm235, %v1158, 0
    %v1174 = vsel %vm235, %v1159, 0
    %1176 = vmatpush.msra.mxu0 0.0
    %1177 = vmatpush.msra.mxu0 0.0
    %1178 = vmatpush.msra.mxu0 0.0
    %1179 = vmatpush.msra.mxu0 0.0
    %1180 = vmatpush.msra.mxu0 0.0
    %1181 = vmatpush.msra.mxu0 0.0
    %1182 = vmatpush.msra.mxu0 0.0
    %1183 = vmatpush.msra.mxu0 0.0
    %1184 = vmatpush.msra.mxu0 0.0
    %1185 = vmatpush.msra.mxu0 0.0
    %1186 = vmatpush.msra.mxu0 0.0
    %1187 = vmatpush.msra.mxu0 0.0
    %1188 = vmatpush.msra.mxu0 %v1164
    %1189 = vmatpush.msra.mxu0 %v1163
    %1190 = vmatpush.msra.mxu0 %v1162
    %1191 = vmatpush.msra.mxu0 %v1161
    %1192 = vmatmul.f32.gmra.mxu0 %v1171
    %v1193 = vpop.f32.mrf.mxu0
    %v1194 = vadd.f32 %v1168, %v1193
    %1195 = vmatmul.f32.gmra.mxu0 %v1174
    %v1196 = vpop.f32.mrf.mxu0
    %v1197 = vadd.f32 %v1168, %v1196
    %1198 = vdwg.mxu0
    %v1199 = vld [vmem:[#allocation6] sm:$0x1]
    %1201 = vrot.lane.b32.xlu0 %v1194, 96
    %v1202 = vpop.permute.xlu0 %1201
    %v1203 = vsel %vm338, %v1194, 0
    %v1205 = vsel %vm338, %v1202, 0
    %1207 = vmatpush.xpose.msra.mxu0 0.0
    %1208 = vmatpush.xpose.msra.mxu0 0.0
    %1209 = vmatpush.xpose.msra.mxu0 0.0
    %1210 = vmatpush.xpose.msra.mxu0 0.0
    %1211 = vmatpush.xpose.msra.mxu0 0.0
    %1212 = vmatpush.xpose.msra.mxu0 0.0
    %1213 = vmatpush.xpose.msra.mxu0 0.0
    %1214 = vmatpush.xpose.msra.mxu0 0.0
    %1215 = vmatpush.xpose.msra.mxu0 0.0
    %1216 = vmatpush.xpose.msra.mxu0 0.0
    %1217 = vmatpush.xpose.msra.mxu0 0.0
    %1218 = vmatpush.xpose.msra.mxu0 0.0
    %1219 = vmatpush.xpose.msra.mxu0 0.0
    %1220 = vmatpush.xpose.msra.mxu0 0.0
    %1221 = vmatpush.xpose.msra.mxu0 0.0
    %1222 = vmatpush.xpose.msra.mxu0 %v1205
    %1223 = vmatmul.f32.gmra.mxu0 %v1203
    %v1224 = vpop.f32.mrf.mxu0
    %v1225 = vadd.f32 0.0, %v1224
    %1226 = vdwg.mxu0
    %v1227 = vmul.f32 %v1225, 0.35355338
    %v1228 = vperm.slane %v1199, 0
    %v1229 = vadd.f32 %v1227, %v1228
    %v1230 = vsel %vm338, %v1229, -inf
    %1231 = vmax.xlane.f32.xlu0 %v1230
    %v1232 = vpop.xlane.xlu0 %1231
    %v1233 = vsub.f32 %v1229, %v1232
    %v1234 = vmul.f32 %v1233, 1.442695
    %v1235 = vpow.pop %v1234
    %v1236 = vsel %vm338, %v1235, 0.0
    %1237 = vadd.xlane.f32.xlu0 %v1236
    %v1238 = vpop.xlane.xlu0 %1237
    %v1239 = vrcp.pop %v1238
    %v1240 = vmul.f32 %v1235, %v1239
    %1241 = vrot.lane.b32.xlu0 %v1194, 64
    %v1242 = vpop.permute.xlu0 %1241
    %v1245 = vsel %vm338, %v1240, 0
    %1247 = vmatpush.msra.mxu0 0.0
    %1248 = vmatpush.msra.mxu0 0.0
    %1249 = vmatpush.msra.mxu0 0.0
    %1250 = vmatpush.msra.mxu0 0.0
    %1251 = vmatpush.msra.mxu0 0.0
    %1252 = vmatpush.msra.mxu0 0.0
    %1253 = vmatpush.msra.mxu0 0.0
    %1254 = vmatpush.msra.mxu0 0.0
    %1255 = vmatpush.msra.mxu0 0.0
    %1256 = vmatpush.msra.mxu0 0.0
    %1257 = vmatpush.msra.mxu0 0.0
    %1258 = vmatpush.msra.mxu0 0.0
    %1259 = vmatpush.msra.mxu0 0.0
    %1260 = vmatpush.msra.mxu0 0.0
    %1261 = vmatpush.msra.mxu0 0.0
    %1262 = vmatpush.msra.mxu0 %v1242
    %1263 = vmatmul.f32.gmra.mxu0 %v1245
    %v1264 = vpop.f32.mrf.mxu0
    %v1265 = vadd.f32 0.0, %v1264
    %1266 = vdwg.mxu0
    %1267 = vst.msk [vmem:[#allocation2] sm:$0xff] %vm338, %v1265
    %1268 = vrot.lane.b32.xlu0 %v1194, 120
    %v1269 = vpop.permute.xlu0 %1268
    %1270 = vrot.lane.b32.xlu0 %v1194, 88
    %v1271 = vpop.permute.xlu0 %1270
    %v1272 = vsel %vm338, %v1269, 0
    %v1274 = vsel %vm338, %v1271, 0
    %1276 = vmatpush.xpose.msra.mxu0 0.0
    %1277 = vmatpush.xpose.msra.mxu0 0.0
    %1278 = vmatpush.xpose.msra.mxu0 0.0
    %1279 = vmatpush.xpose.msra.mxu0 0.0
    %1280 = vmatpush.xpose.msra.mxu0 0.0
    %1281 = vmatpush.xpose.msra.mxu0 0.0
    %1282 = vmatpush.xpose.msra.mxu0 0.0
    %1283 = vmatpush.xpose.msra.mxu0 0.0
    %1284 = vmatpush.xpose.msra.mxu0 0.0
    %1285 = vmatpush.xpose.msra.mxu0 0.0
    %1286 = vmatpush.xpose.msra.mxu0 0.0
    %1287 = vmatpush.xpose.msra.mxu0 0.0
    %1288 = vmatpush.xpose.msra.mxu0 0.0
    %1289 = vmatpush.xpose.msra.mxu0 0.0
    %1290 = vmatpush.xpose.msra.mxu0 0.0
    %1291 = vmatpush.xpose.msra.mxu0 %v1274
    %1292 = vmatmul.f32.gmra.mxu0 %v1272
    %v1293 = vpop.f32.mrf.mxu0
    %v1294 = vadd.f32 0.0, %v1293
    %1295 = vdwg.mxu0
    %v1296 = vmul.f32 %v1294, 0.35355338
    %v1297 = vadd.f32 %v1296, %v1228
    %v1298 = vsel %vm338, %v1297, -inf
    %1299 = vmax.xlane.f32.xlu0 %v1298
    %v1300 = vpop.xlane.xlu0 %1299
    %v1301 = vsub.f32 %v1297, %v1300
    %v1302 = vmul.f32 %v1301, 1.442695
    %v1303 = vpow.pop %v1302
    %v1304 = vsel %vm338, %v1303, 0.0
    %1305 = vadd.xlane.f32.xlu0 %v1304
    %v1306 = vpop.xlane.xlu0 %1305
    %v1307 = vrcp.pop %v1306
    %v1308 = vmul.f32 %v1303, %v1307
    %1309 = vrot.lane.b32.xlu0 %v1194, 56
    %v1310 = vpop.permute.xlu0 %1309
    %v1313 = vsel %vm338, %v1308, 0
    %1315 = vmatpush.msra.mxu0 0.0
    %1316 = vmatpush.msra.mxu0 0.0
    %1317 = vmatpush.msra.mxu0 0.0
    %1318 = vmatpush.msra.mxu0 0.0
    %1319 = vmatpush.msra.mxu0 0.0
    %1320 = vmatpush.msra.mxu0 0.0
    %1321 = vmatpush.msra.mxu0 0.0
    %1322 = vmatpush.msra.mxu0 0.0
    %1323 = vmatpush.msra.mxu0 0.0
    %1324 = vmatpush.msra.mxu0 0.0
    %1325 = vmatpush.msra.mxu0 0.0
    %1326 = vmatpush.msra.mxu0 0.0
    %1327 = vmatpush.msra.mxu0 0.0
    %1328 = vmatpush.msra.mxu0 0.0
    %1329 = vmatpush.msra.mxu0 0.0
    %1330 = vmatpush.msra.mxu0 %v1310
    %1331 = vmatmul.f32.gmra.mxu0 %v1313
    %v1332 = vpop.f32.mrf.mxu0
    %v1333 = vadd.f32 0.0, %v1332
    %1334 = vdwg.mxu0
    %1336 = vrot.lane.b32.xlu0 %v1333, 8
    %v1337 = vpop.permute.xlu0 %1336
    %1339 = vst.msk [vmem:[#allocation2] sm:$0xff] %vm475, %v1337
    %1340 = vrot.lane.b32.xlu0 %v1194, 112
    %v1341 = vpop.permute.xlu0 %1340
    %1342 = vrot.lane.b32.xlu0 %v1194, 80
    %v1343 = vpop.permute.xlu0 %1342
    %v1344 = vsel %vm338, %v1341, 0
    %v1346 = vsel %vm338, %v1343, 0
    %1348 = vmatpush.xpose.msra.mxu0 0.0
    %1349 = vmatpush.xpose.msra.mxu0 0.0
    %1350 = vmatpush.xpose.msra.mxu0 0.0
    %1351 = vmatpush.xpose.msra.mxu0 0.0
    %1352 = vmatpush.xpose.msra.mxu0 0.0
    %1353 = vmatpush.xpose.msra.mxu0 0.0
    %1354 = vmatpush.xpose.msra.mxu0 0.0
    %1355 = vmatpush.xpose.msra.mxu0 0.0
    %1356 = vmatpush.xpose.msra.mxu0 0.0
    %1357 = vmatpush.xpose.msra.mxu0 0.0
    %1358 = vmatpush.xpose.msra.mxu0 0.0
    %1359 = vmatpush.xpose.msra.mxu0 0.0
    %1360 = vmatpush.xpose.msra.mxu0 0.0
    %1361 = vmatpush.xpose.msra.mxu0 0.0
    %1362 = vmatpush.xpose.msra.mxu0 0.0
    %1363 = vmatpush.xpose.msra.mxu0 %v1346
    %1364 = vmatmul.f32.gmra.mxu0 %v1344
    %v1365 = vpop.f32.mrf.mxu0
    %v1366 = vadd.f32 0.0, %v1365
    %1367 = vdwg.mxu0
    %v1368 = vmul.f32 %v1366, 0.35355338
    %v1369 = vadd.f32 %v1368, %v1228
    %v1370 = vsel %vm338, %v1369, -inf
    %1371 = vmax.xlane.f32.xlu0 %v1370
    %v1372 = vpop.xlane.xlu0 %1371
    %v1373 = vsub.f32 %v1369, %v1372
    %v1374 = vmul.f32 %v1373, 1.442695
    %v1375 = vpow.pop %v1374
    %v1376 = vsel %vm338, %v1375, 0.0
    %1377 = vadd.xlane.f32.xlu0 %v1376
    %v1378 = vpop.xlane.xlu0 %1377
    %v1379 = vrcp.pop %v1378
    %v1380 = vmul.f32 %v1375, %v1379
    %1381 = vrot.lane.b32.xlu0 %v1194, 48
    %v1382 = vpop.permute.xlu0 %1381
    %v1385 = vsel %vm338, %v1380, 0
    %1387 = vmatpush.msra.mxu0 0.0
    %1388 = vmatpush.msra.mxu0 0.0
    %1389 = vmatpush.msra.mxu0 0.0
    %1390 = vmatpush.msra.mxu0 0.0
    %1391 = vmatpush.msra.mxu0 0.0
    %1392 = vmatpush.msra.mxu0 0.0
    %1393 = vmatpush.msra.mxu0 0.0
    %1394 = vmatpush.msra.mxu0 0.0
    %1395 = vmatpush.msra.mxu0 0.0
    %1396 = vmatpush.msra.mxu0 0.0
    %1397 = vmatpush.msra.mxu0 0.0
    %1398 = vmatpush.msra.mxu0 0.0
    %1399 = vmatpush.msra.mxu0 0.0
    %1400 = vmatpush.msra.mxu0 0.0
    %1401 = vmatpush.msra.mxu0 0.0
    %1402 = vmatpush.msra.mxu0 %v1382
    %1403 = vmatmul.f32.gmra.mxu0 %v1385
    %v1404 = vpop.f32.mrf.mxu0
    %v1405 = vadd.f32 0.0, %v1404
    %1406 = vdwg.mxu0
    %1408 = vrot.lane.b32.xlu0 %v1405, 16
    %v1409 = vpop.permute.xlu0 %1408
    %1411 = vst.msk [vmem:[#allocation2] sm:$0xff] %vm548, %v1409
    %1412 = vrot.lane.b32.xlu0 %v1194, 104
    %v1413 = vpop.permute.xlu0 %1412
    %1414 = vrot.lane.b32.xlu0 %v1194, 72
    %v1415 = vpop.permute.xlu0 %1414
    %v1416 = vsel %vm338, %v1413, 0
    %v1418 = vsel %vm338, %v1415, 0
    %1420 = vmatpush.xpose.msra.mxu0 0.0
    %1421 = vmatpush.xpose.msra.mxu0 0.0
    %1422 = vmatpush.xpose.msra.mxu0 0.0
    %1423 = vmatpush.xpose.msra.mxu0 0.0
    %1424 = vmatpush.xpose.msra.mxu0 0.0
    %1425 = vmatpush.xpose.msra.mxu0 0.0
    %1426 = vmatpush.xpose.msra.mxu0 0.0
    %1427 = vmatpush.xpose.msra.mxu0 0.0
    %1428 = vmatpush.xpose.msra.mxu0 0.0
    %1429 = vmatpush.xpose.msra.mxu0 0.0
    %1430 = vmatpush.xpose.msra.mxu0 0.0
    %1431 = vmatpush.xpose.msra.mxu0 0.0
    %1432 = vmatpush.xpose.msra.mxu0 0.0
    %1433 = vmatpush.xpose.msra.mxu0 0.0
    %1434 = vmatpush.xpose.msra.mxu0 0.0
    %1435 = vmatpush.xpose.msra.mxu0 %v1418
    %1436 = vmatmul.f32.gmra.mxu0 %v1416
    %v1437 = vpop.f32.mrf.mxu0
    %v1438 = vadd.f32 0.0, %v1437
    %1439 = vdwg.mxu0
    %v1440 = vmul.f32 %v1438, 0.35355338
    %v1441 = vadd.f32 %v1440, %v1228
    %v1442 = vsel %vm338, %v1441, -inf
    %1443 = vmax.xlane.f32.xlu0 %v1442
    %v1444 = vpop.xlane.xlu0 %1443
    %v1445 = vsub.f32 %v1441, %v1444
    %v1446 = vmul.f32 %v1445, 1.442695
    %v1447 = vpow.pop %v1446
    %v1448 = vsel %vm338, %v1447, 0.0
    %1449 = vadd.xlane.f32.xlu0 %v1448
    %v1450 = vpop.xlane.xlu0 %1449
    %v1451 = vrcp.pop %v1450
    %v1452 = vmul.f32 %v1447, %v1451
    %1453 = vrot.lane.b32.xlu0 %v1194, 40
    %v1454 = vpop.permute.xlu0 %1453
    %v1457 = vsel %vm338, %v1452, 0
    %1459 = vmatpush.msra.mxu0 0.0
    %1460 = vmatpush.msra.mxu0 0.0
    %1461 = vmatpush.msra.mxu0 0.0
    %1462 = vmatpush.msra.mxu0 0.0
    %1463 = vmatpush.msra.mxu0 0.0
    %1464 = vmatpush.msra.mxu0 0.0
    %1465 = vmatpush.msra.mxu0 0.0
    %1466 = vmatpush.msra.mxu0 0.0
    %1467 = vmatpush.msra.mxu0 0.0
    %1468 = vmatpush.msra.mxu0 0.0
    %1469 = vmatpush.msra.mxu0 0.0
    %1470 = vmatpush.msra.mxu0 0.0
    %1471 = vmatpush.msra.mxu0 0.0
    %1472 = vmatpush.msra.mxu0 0.0
    %1473 = vmatpush.msra.mxu0 0.0
    %1474 = vmatpush.msra.mxu0 %v1454
    %1475 = vmatmul.f32.gmra.mxu0 %v1457
    %v1476 = vpop.f32.mrf.mxu0
    %v1477 = vadd.f32 0.0, %v1476
    %1478 = vdwg.mxu0
    %1480 = vrot.lane.b32.xlu0 %v1477, 24
    %v1481 = vpop.permute.xlu0 %1480
    %1483 = vst.msk [vmem:[#allocation2] sm:$0xff] %vm621, %v1481
    %v1484 = vld [vmem:[#allocation6 + $0x1] sm:$0x1]
    %1486 = vrot.lane.b32.xlu0 %v1197, 96
    %v1487 = vpop.permute.xlu0 %1486
    %v1488 = vsel %vm338, %v1197, 0
    %v1490 = vsel %vm338, %v1487, 0
    %1492 = vmatpush.xpose.msra.mxu0 0.0
    %1493 = vmatpush.xpose.msra.mxu0 0.0
    %1494 = vmatpush.xpose.msra.mxu0 0.0
    %1495 = vmatpush.xpose.msra.mxu0 0.0
    %1496 = vmatpush.xpose.msra.mxu0 0.0
    %1497 = vmatpush.xpose.msra.mxu0 0.0
    %1498 = vmatpush.xpose.msra.mxu0 0.0
    %1499 = vmatpush.xpose.msra.mxu0 0.0
    %1500 = vmatpush.xpose.msra.mxu0 0.0
    %1501 = vmatpush.xpose.msra.mxu0 0.0
    %1502 = vmatpush.xpose.msra.mxu0 0.0
    %1503 = vmatpush.xpose.msra.mxu0 0.0
    %1504 = vmatpush.xpose.msra.mxu0 0.0
    %1505 = vmatpush.xpose.msra.mxu0 0.0
    %1506 = vmatpush.xpose.msra.mxu0 0.0
    %1507 = vmatpush.xpose.msra.mxu0 %v1490
    %1508 = vmatmul.f32.gmra.mxu0 %v1488
    %v1509 = vpop.f32.mrf.mxu0
    %v1510 = vadd.f32 0.0, %v1509
    %1511 = vdwg.mxu0
    %v1512 = vmul.f32 %v1510, 0.35355338
    %v1513 = vperm.slane %v1484, 0
    %v1514 = vadd.f32 %v1512, %v1513
    %v1515 = vsel %vm338, %v1514, -inf
    %1516 = vmax.xlane.f32.xlu0 %v1515
    %v1517 = vpop.xlane.xlu0 %1516
    %v1518 = vsub.f32 %v1514, %v1517
    %v1519 = vmul.f32 %v1518, 1.442695
    %v1520 = vpow.pop %v1519
    %v1521 = vsel %vm338, %v1520, 0.0
    %1522 = vadd.xlane.f32.xlu0 %v1521
    %v1523 = vpop.xlane.xlu0 %1522
    %v1524 = vrcp.pop %v1523
    %v1525 = vmul.f32 %v1520, %v1524
    %1526 = vrot.lane.b32.xlu0 %v1197, 64
    %v1527 = vpop.permute.xlu0 %1526
    %v1530 = vsel %vm338, %v1525, 0
    %1532 = vmatpush.msra.mxu0 0.0
    %1533 = vmatpush.msra.mxu0 0.0
    %1534 = vmatpush.msra.mxu0 0.0
    %1535 = vmatpush.msra.mxu0 0.0
    %1536 = vmatpush.msra.mxu0 0.0
    %1537 = vmatpush.msra.mxu0 0.0
    %1538 = vmatpush.msra.mxu0 0.0
    %1539 = vmatpush.msra.mxu0 0.0
    %1540 = vmatpush.msra.mxu0 0.0
    %1541 = vmatpush.msra.mxu0 0.0
    %1542 = vmatpush.msra.mxu0 0.0
    %1543 = vmatpush.msra.mxu0 0.0
    %1544 = vmatpush.msra.mxu0 0.0
    %1545 = vmatpush.msra.mxu0 0.0
    %1546 = vmatpush.msra.mxu0 0.0
    %1547 = vmatpush.msra.mxu0 %v1527
    %1548 = vmatmul.f32.gmra.mxu0 %v1530
    %v1549 = vpop.f32.mrf.mxu0
    %v1550 = vadd.f32 0.0, %v1549
    %1551 = vdwg.mxu0
    %1552 = vst.msk [vmem:[#allocation2 + $0x8] sm:$0xff] %vm338, %v1550
    %1553 = vrot.lane.b32.xlu0 %v1197, 120
    %v1554 = vpop.permute.xlu0 %1553
    %1555 = vrot.lane.b32.xlu0 %v1197, 88
    %v1556 = vpop.permute.xlu0 %1555
    %v1557 = vsel %vm338, %v1554, 0
    %v1559 = vsel %vm338, %v1556, 0
    %1561 = vmatpush.xpose.msra.mxu0 0.0
    %1562 = vmatpush.xpose.msra.mxu0 0.0
    %1563 = vmatpush.xpose.msra.mxu0 0.0
    %1564 = vmatpush.xpose.msra.mxu0 0.0
    %1565 = vmatpush.xpose.msra.mxu0 0.0
    %1566 = vmatpush.xpose.msra.mxu0 0.0
    %1567 = vmatpush.xpose.msra.mxu0 0.0
    %1568 = vmatpush.xpose.msra.mxu0 0.0
    %1569 = vmatpush.xpose.msra.mxu0 0.0
    %1570 = vmatpush.xpose.msra.mxu0 0.0
    %1571 = vmatpush.xpose.msra.mxu0 0.0
    %1572 = vmatpush.xpose.msra.mxu0 0.0
    %1573 = vmatpush.xpose.msra.mxu0 0.0
    %1574 = vmatpush.xpose.msra.mxu0 0.0
    %1575 = vmatpush.xpose.msra.mxu0 0.0
    %1576 = vmatpush.xpose.msra.mxu0 %v1559
    %1577 = vmatmul.f32.gmra.mxu0 %v1557
    %v1578 = vpop.f32.mrf.mxu0
    %v1579 = vadd.f32 0.0, %v1578
    %1580 = vdwg.mxu0
    %v1581 = vmul.f32 %v1579, 0.35355338
    %v1582 = vadd.f32 %v1581, %v1513
    %v1583 = vsel %vm338, %v1582, -inf
    %1584 = vmax.xlane.f32.xlu0 %v1583
    %v1585 = vpop.xlane.xlu0 %1584
    %v1586 = vsub.f32 %v1582, %v1585
    %v1587 = vmul.f32 %v1586, 1.442695
    %v1588 = vpow.pop %v1587
    %v1589 = vsel %vm338, %v1588, 0.0
    %1590 = vadd.xlane.f32.xlu0 %v1589
    %v1591 = vpop.xlane.xlu0 %1590
    %v1592 = vrcp.pop %v1591
    %v1593 = vmul.f32 %v1588, %v1592
    %1594 = vrot.lane.b32.xlu0 %v1197, 56
    %v1595 = vpop.permute.xlu0 %1594
    %v1598 = vsel %vm338, %v1593, 0
    %1600 = vmatpush.msra.mxu0 0.0
    %1601 = vmatpush.msra.mxu0 0.0
    %1602 = vmatpush.msra.mxu0 0.0
    %1603 = vmatpush.msra.mxu0 0.0
    %1604 = vmatpush.msra.mxu0 0.0
    %1605 = vmatpush.msra.mxu0 0.0
    %1606 = vmatpush.msra.mxu0 0.0
    %1607 = vmatpush.msra.mxu0 0.0
    %1608 = vmatpush.msra.mxu0 0.0
    %1609 = vmatpush.msra.mxu0 0.0
    %1610 = vmatpush.msra.mxu0 0.0
    %1611 = vmatpush.msra.mxu0 0.0
    %1612 = vmatpush.msra.mxu0 0.0
    %1613 = vmatpush.msra.mxu0 0.0
    %1614 = vmatpush.msra.mxu0 0.0
    %1615 = vmatpush.msra.mxu0 %v1595
    %1616 = vmatmul.f32.gmra.mxu0 %v1598
    %v1617 = vpop.f32.mrf.mxu0
    %v1618 = vadd.f32 0.0, %v1617
    %1619 = vdwg.mxu0
    %1621 = vrot.lane.b32.xlu0 %v1618, 8
    %v1622 = vpop.permute.xlu0 %1621
    %1624 = vst.msk [vmem:[#allocation2 + $0x8] sm:$0xff] %vm475, %v1622
    %1625 = vrot.lane.b32.xlu0 %v1197, 112
    %v1626 = vpop.permute.xlu0 %1625
    %1627 = vrot.lane.b32.xlu0 %v1197, 80
    %v1628 = vpop.permute.xlu0 %1627
    %v1629 = vsel %vm338, %v1626, 0
    %v1631 = vsel %vm338, %v1628, 0
    %1633 = vmatpush.xpose.msra.mxu0 0.0
    %1634 = vmatpush.xpose.msra.mxu0 0.0
    %1635 = vmatpush.xpose.msra.mxu0 0.0
    %1636 = vmatpush.xpose.msra.mxu0 0.0
    %1637 = vmatpush.xpose.msra.mxu0 0.0
    %1638 = vmatpush.xpose.msra.mxu0 0.0
    %1639 = vmatpush.xpose.msra.mxu0 0.0
    %1640 = vmatpush.xpose.msra.mxu0 0.0
    %1641 = vmatpush.xpose.msra.mxu0 0.0
    %1642 = vmatpush.xpose.msra.mxu0 0.0
    %1643 = vmatpush.xpose.msra.mxu0 0.0
    %1644 = vmatpush.xpose.msra.mxu0 0.0
    %1645 = vmatpush.xpose.msra.mxu0 0.0
    %1646 = vmatpush.xpose.msra.mxu0 0.0
    %1647 = vmatpush.xpose.msra.mxu0 0.0
    %1648 = vmatpush.xpose.msra.mxu0 %v1631
    %1649 = vmatmul.f32.gmra.mxu0 %v1629
    %v1650 = vpop.f32.mrf.mxu0
    %v1651 = vadd.f32 0.0, %v1650
    %1652 = vdwg.mxu0
    %v1653 = vmul.f32 %v1651, 0.35355338
    %v1654 = vadd.f32 %v1653, %v1513
    %v1655 = vsel %vm338, %v1654, -inf
    %1656 = vmax.xlane.f32.xlu0 %v1655
    %v1657 = vpop.xlane.xlu0 %1656
    %v1658 = vsub.f32 %v1654, %v1657
    %v1659 = vmul.f32 %v1658, 1.442695
    %v1660 = vpow.pop %v1659
    %v1661 = vsel %vm338, %v1660, 0.0
    %1662 = vadd.xlane.f32.xlu0 %v1661
    %v1663 = vpop.xlane.xlu0 %1662
    %v1664 = vrcp.pop %v1663
    %v1665 = vmul.f32 %v1660, %v1664
    %1666 = vrot.lane.b32.xlu0 %v1197, 48
    %v1667 = vpop.permute.xlu0 %1666
    %v1670 = vsel %vm338, %v1665, 0
    %1672 = vmatpush.msra.mxu0 0.0
    %1673 = vmatpush.msra.mxu0 0.0
    %1674 = vmatpush.msra.mxu0 0.0
    %1675 = vmatpush.msra.mxu0 0.0
    %1676 = vmatpush.msra.mxu0 0.0
    %1677 = vmatpush.msra.mxu0 0.0
    %1678 = vmatpush.msra.mxu0 0.0
    %1679 = vmatpush.msra.mxu0 0.0
    %1680 = vmatpush.msra.mxu0 0.0
    %1681 = vmatpush.msra.mxu0 0.0
    %1682 = vmatpush.msra.mxu0 0.0
    %1683 = vmatpush.msra.mxu0 0.0
    %1684 = vmatpush.msra.mxu0 0.0
    %1685 = vmatpush.msra.mxu0 0.0
    %1686 = vmatpush.msra.mxu0 0.0
    %1687 = vmatpush.msra.mxu0 %v1667
    %1688 = vmatmul.f32.gmra.mxu0 %v1670
    %v1689 = vpop.f32.mrf.mxu0
    %v1690 = vadd.f32 0.0, %v1689
    %1691 = vdwg.mxu0
    %1693 = vrot.lane.b32.xlu0 %v1690, 16
    %v1694 = vpop.permute.xlu0 %1693
    %1696 = vst.msk [vmem:[#allocation2 + $0x8] sm:$0xff] %vm548, %v1694
    %1697 = vrot.lane.b32.xlu0 %v1197, 104
    %v1698 = vpop.permute.xlu0 %1697
    %1699 = vrot.lane.b32.xlu0 %v1197, 72
    %v1700 = vpop.permute.xlu0 %1699
    %v1701 = vsel %vm338, %v1698, 0
    %v1703 = vsel %vm338, %v1700, 0
    %1705 = vmatpush.xpose.msra.mxu0 0.0
    %1706 = vmatpush.xpose.msra.mxu0 0.0
    %1707 = vmatpush.xpose.msra.mxu0 0.0
    %1708 = vmatpush.xpose.msra.mxu0 0.0
    %1709 = vmatpush.xpose.msra.mxu0 0.0
    %1710 = vmatpush.xpose.msra.mxu0 0.0
    %1711 = vmatpush.xpose.msra.mxu0 0.0
    %1712 = vmatpush.xpose.msra.mxu0 0.0
    %1713 = vmatpush.xpose.msra.mxu0 0.0
    %1714 = vmatpush.xpose.msra.mxu0 0.0
    %1715 = vmatpush.xpose.msra.mxu0 0.0
    %1716 = vmatpush.xpose.msra.mxu0 0.0
    %1717 = vmatpush.xpose.msra.mxu0 0.0
    %1718 = vmatpush.xpose.msra.mxu0 0.0
    %1719 = vmatpush.xpose.msra.mxu0 0.0
    %1720 = vmatpush.xpose.msra.mxu0 %v1703
    %1721 = vmatmul.f32.gmra.mxu0 %v1701
    %v1722 = vpop.f32.mrf.mxu0
    %v1723 = vadd.f32 0.0, %v1722
    %1724 = vdwg.mxu0
    %v1725 = vmul.f32 %v1723, 0.35355338
    %v1726 = vadd.f32 %v1725, %v1513
    %v1727 = vsel %vm338, %v1726, -inf
    %1728 = vmax.xlane.f32.xlu0 %v1727
    %v1729 = vpop.xlane.xlu0 %1728
    %v1730 = vsub.f32 %v1726, %v1729
    %v1731 = vmul.f32 %v1730, 1.442695
    %v1732 = vpow.pop %v1731
    %v1733 = vsel %vm338, %v1732, 0.0
    %1734 = vadd.xlane.f32.xlu0 %v1733
    %v1735 = vpop.xlane.xlu0 %1734
    %v1736 = vrcp.pop %v1735
    %v1737 = vmul.f32 %v1732, %v1736
    %1738 = vrot.lane.b32.xlu0 %v1197, 40
    %v1739 = vpop.permute.xlu0 %1738
    %v1742 = vsel %vm338, %v1737, 0
    %1744 = vmatpush.msra.mxu0 0.0
    %1745 = vmatpush.msra.mxu0 0.0
    %1746 = vmatpush.msra.mxu0 0.0
    %1747 = vmatpush.msra.mxu0 0.0
    %1748 = vmatpush.msra.mxu0 0.0
    %1749 = vmatpush.msra.mxu0 0.0
    %1750 = vmatpush.msra.mxu0 0.0
    %1751 = vmatpush.msra.mxu0 0.0
    %1752 = vmatpush.msra.mxu0 0.0
    %1753 = vmatpush.msra.mxu0 0.0
    %1754 = vmatpush.msra.mxu0 0.0
    %1755 = vmatpush.msra.mxu0 0.0
    %1756 = vmatpush.msra.mxu0 0.0
    %1757 = vmatpush.msra.mxu0 0.0
    %1758 = vmatpush.msra.mxu0 0.0
    %1759 = vmatpush.msra.mxu0 %v1739
    %1760 = vmatmul.f32.gmra.mxu0 %v1742
    %v1761 = vpop.f32.mrf.mxu0
    %v1762 = vadd.f32 0.0, %v1761
    %1763 = vdwg.mxu0
    %1765 = vrot.lane.b32.xlu0 %v1762, 24
    %v1766 = vpop.permute.xlu0 %1765
    %1768 = vst.msk [vmem:[#allocation2 + $0x8] sm:$0xff] %vm621, %v1766
    %v1769 = vld [vmem:[#allocation2] sm:$0xff]
    %v1770 = vld [vmem:[#allocation2 + $0x8] sm:$0xff]
    %s1771 = scalar_lea.vmem %s6, 32
    %v1772 = vld [vmem:[%s1771] sm:$0xff]
    %v1773 = vld [vmem:[%s1771 + $0x8] sm:$0xff]
    %v1774 = vld [vmem:[%s1771 + $0x10] sm:$0xff]
    %v1775 = vld [vmem:[%s1771 + $0x18] sm:$0xff]
    %s1776 = scalar_lea.vmem [#allocation11], 1
    %v1777 = vld [vmem:[%s1776] sm:$0x1]
    %v1779 = vperm.slane %v1777, 0
    %v1782 = vsel %vm235, %v1769, 0
    %v1785 = vsel %vm235, %v1770, 0
    %1787 = vmatpush.msra.mxu0 0.0
    %1788 = vmatpush.msra.mxu0 0.0
    %1789 = vmatpush.msra.mxu0 0.0
    %1790 = vmatpush.msra.mxu0 0.0
    %1791 = vmatpush.msra.mxu0 0.0
    %1792 = vmatpush.msra.mxu0 0.0
    %1793 = vmatpush.msra.mxu0 0.0
    %1794 = vmatpush.msra.mxu0 0.0
    %1795 = vmatpush.msra.mxu0 0.0
    %1796 = vmatpush.msra.mxu0 0.0
    %1797 = vmatpush.msra.mxu0 0.0
    %1798 = vmatpush.msra.mxu0 0.0
    %1799 = vmatpush.msra.mxu0 %v1775
    %1800 = vmatpush.msra.mxu0 %v1774
    %1801 = vmatpush.msra.mxu0 %v1773
    %1802 = vmatpush.msra.mxu0 %v1772
    %1803 = vmatmul.f32.gmra.mxu0 %v1782
    %v1804 = vpop.f32.mrf.mxu0
    %v1805 = vadd.f32 %v1779, %v1804
    %1806 = vmatmul.f32.gmra.mxu0 %v1785
    %v1807 = vpop.f32.mrf.mxu0
    %v1808 = vadd.f32 %v1779, %v1807
    %1809 = vdwg.mxu0
    %v1810 = vadd.f32 %v1158, %v1805
    %v1811 = vadd.f32 %v1159, %v1808
    %s1812 = scalar_lea.vmem %s8, 1
    %v1813 = vld [vmem:[%s1812] sm:$0x1]
    %s1814 = scalar_lea.vmem [#allocation12], 1
    %v1815 = vld [vmem:[%s1814] sm:$0x1]
    %v1816 = vsel %vm235, %v1810, 0.0
    %1817 = vadd.xlane.f32.xlu0 %v1816
    %v1818 = vpop.xlane.xlu0 %1817
    %v1819 = vsel %vm235, %v1811, 0.0
    %1820 = vadd.xlane.f32.xlu0 %v1819
    %v1821 = vpop.xlane.xlu0 %1820
    %v1822 = vmul.f32 %v1818, %v248
    %v1823 = vmul.f32 %v1821, %v248
    %v1824 = vsub.f32 %v1810, %v1822
    %v1825 = vsub.f32 %v1811, %v1823
    %v1826 = vmul.f32 %v1824, %v1824
    %v1827 = vmul.f32 %v1825, %v1825
    %v1828 = vsel %vm235, %v1826, 0.0
    %1829 = vadd.xlane.f32.xlu0 %v1828
    %v1830 = vpop.xlane.xlu0 %1829
    %v1831 = vsel %vm235, %v1827, 0.0
    %1832 = vadd.xlane.f32.xlu0 %v1831
    %v1833 = vpop.xlane.xlu0 %1832
    %v1834 = vmul.f32 %v1830, %v248
    %v1835 = vmul.f32 %v1833, %v248
    %v1836 = vadd.f32 %v1834, 1e-12
    %v1837 = vadd.f32 %v1835, 1e-12
    %v1838 = vrsqrt.pop %v1836
    %v1839 = vmul.f32 %v1838, %v1836
    %v1840 = vmul.f32 %v1839, %v1838
    %v1841 = vmul.f32 0.5, %v1840
    %v1842 = vsub.f32 1.5, %v1841
    %v1843 = vmul.f32 %v1838, %v1842
    %vm1844 = vweird.f32 %v1836
    %vm1845 = vweird.f32 %v1838
    %vm1846 = vmor %vm1844, %vm1845
    %v1847 = vsel %vm1846, %v1838, %v1843
    %v1848 = vrsqrt.pop %v1837
    %v1849 = vmul.f32 %v1848, %v1837
    %v1850 = vmul.f32 %v1849, %v1848
    %v1851 = vmul.f32 0.5, %v1850
    %v1852 = vsub.f32 1.5, %v1851
    %v1853 = vmul.f32 %v1848, %v1852
    %vm1854 = vweird.f32 %v1837
    %vm1855 = vweird.f32 %v1848
    %vm1856 = vmor %vm1854, %vm1855
    %v1857 = vsel %vm1856, %v1848, %v1853
    %v1858 = vmul.f32 %v1824, %v1847
    %v1859 = vmul.f32 %v1825, %v1857
    %v1861 = vperm.slane %v1813, 0
    %v1863 = vmul.f32 %v1858, %v1861
    %v1864 = vmul.f32 %v1859, %v1861
    %v1866 = vperm.slane %v1815, 0
    %v1868 = vadd.f32 %v1863, %v1866
    %v1869 = vadd.f32 %v1864, %v1866
    %s1870 = scalar_lea.vmem %s10, 32
    %v1871 = vld [vmem:[%s1870] sm:$0xff]
    %v1872 = vld [vmem:[%s1870 + $0x8] sm:$0xff]
    %v1873 = vld [vmem:[%s1870 + $0x10] sm:$0xff]
    %v1874 = vld [vmem:[%s1870 + $0x18] sm:$0xff]
    %s1875 = scalar_lea.vmem [#allocation14], 1
    %v1876 = vld [vmem:[%s1875] sm:$0x1]
    %v1878 = vperm.slane %v1876, 0
    %v1881 = vsel %vm235, %v1868, 0
    %v1884 = vsel %vm235, %v1869, 0
    %1886 = vmatpush.msra.mxu0 0.0
    %1887 = vmatpush.msra.mxu0 0.0
    %1888 = vmatpush.msra.mxu0 0.0
    %1889 = vmatpush.msra.mxu0 0.0
    %1890 = vmatpush.msra.mxu0 0.0
    %1891 = vmatpush.msra.mxu0 0.0
    %1892 = vmatpush.msra.mxu0 0.0
    %1893 = vmatpush.msra.mxu0 0.0
    %1894 = vmatpush.msra.mxu0 0.0
    %1895 = vmatpush.msra.mxu0 0.0
    %1896 = vmatpush.msra.mxu0 0.0
    %1897 = vmatpush.msra.mxu0 0.0
    %1898 = vmatpush.msra.mxu0 %v1874
    %1899 = vmatpush.msra.mxu0 %v1873
    %1900 = vmatpush.msra.mxu0 %v1872
    %1901 = vmatpush.msra.mxu0 %v1871
    %1902 = vmatmul.f32.gmra.mxu0 %v1881
    %v1903 = vpop.f32.mrf.mxu0
    %v1904 = vadd.f32 %v1878, %v1903
    %1905 = vmatmul.f32.gmra.mxu0 %v1884
    %v1906 = vpop.f32.mrf.mxu0
    %v1907 = vadd.f32 %v1878, %v1906
    %1908 = vdwg.mxu0
    %v1909 = vmul.f32 %v1904, %v1904
    %v1910 = vmul.f32 %v1907, %v1907
    %v1911 = vmul.f32 %v1904, %v1909
    %v1912 = vmul.f32 %v1907, %v1910
    %v1913 = vmul.f32 %v1911, 0.044715
    %v1914 = vmul.f32 %v1912, 0.044715
    %v1915 = vadd.f32 %v1904, %v1913
    %v1916 = vadd.f32 %v1907, %v1914
    %v1917 = vmul.f32 %v1915, 0.7978846
    %v1918 = vmul.f32 %v1916, 0.7978846
    %v1919 = vtanh.pop %v1917
    %v1920 = vtanh.pop %v1918
    %v1921 = vadd.f32 %v1919, 1.0
    %v1922 = vadd.f32 %v1920, 1.0
    %v1923 = vmul.f32 %v1921, 0.5
    %v1924 = vmul.f32 %v1922, 0.5
    %v1925 = vmul.f32 %v1904, %v1923
    %v1926 = vmul.f32 %v1907, %v1924
    %s1927 = scalar_lea.vmem %s12, 64
    %v1928 = vld [vmem:[%s1927] sm:$0xff]
    %v1929 = vld [vmem:[%s1927 + $0x8] sm:$0xff]
    %v1930 = vld [vmem:[%s1927 + $0x10] sm:$0xff]
    %v1931 = vld [vmem:[%s1927 + $0x18] sm:$0xff]
    %v1932 = vld [vmem:[%s1927 + $0x20] sm:$0xff]
    %v1933 = vld [vmem:[%s1927 + $0x28] sm:$0xff]
    %v1934 = vld [vmem:[%s1927 + $0x30] sm:$0xff]
    %v1935 = vld [vmem:[%s1927 + $0x38] sm:$0xff]
    %s1936 = scalar_lea.vmem %s13, 1
    %v1937 = vld [vmem:[%s1936] sm:$0x1]
    %v1939 = vperm.slane %v1937, 0
    %v1942 = vsel %vm1072, %v1925, 0
    %v1945 = vsel %vm1072, %v1926, 0
    %1947 = vmatpush.msra.mxu0 0.0
    %1948 = vmatpush.msra.mxu0 0.0
    %1949 = vmatpush.msra.mxu0 0.0
    %1950 = vmatpush.msra.mxu0 0.0
    %1951 = vmatpush.msra.mxu0 0.0
    %1952 = vmatpush.msra.mxu0 0.0
    %1953 = vmatpush.msra.mxu0 0.0
    %1954 = vmatpush.msra.mxu0 0.0
    %1955 = vmatpush.msra.mxu0 %v1935
    %1956 = vmatpush.msra.mxu0 %v1934
    %1957 = vmatpush.msra.mxu0 %v1933
    %1958 = vmatpush.msra.mxu0 %v1932
    %1959 = vmatpush.msra.mxu0 %v1931
    %1960 = vmatpush.msra.mxu0 %v1930
    %1961 = vmatpush.msra.mxu0 %v1929
    %1962 = vmatpush.msra.mxu0 %v1928
    %1963 = vmatmul.f32.gmra.mxu0 %v1942
    %v1964 = vpop.f32.mrf.mxu0
    %v1965 = vadd.f32 %v1939, %v1964
    %1966 = vmatmul.f32.gmra.mxu0 %v1945
    %v1967 = vpop.f32.mrf.mxu0
    %v1968 = vadd.f32 %v1939, %v1967
    %1969 = vdwg.mxu0
    %v1970 = vadd.f32 %v1868, %v1965
    %v1971 = vadd.f32 %v1869, %v1968
    %s1972 = scalar_lea.vmem [#allocation15], 1
    %v1973 = vld [vmem:[%s1972] sm:$0x1]
    %s1974 = scalar_lea.vmem [#allocation17], 1
    %v1975 = vld [vmem:[%s1974] sm:$0x1]
    %v1976 = vsel %vm235, %v1970, 0.0
    %1977 = vadd.xlane.f32.xlu0 %v1976
    %v1978 = vpop.xlane.xlu0 %1977
    %v1979 = vsel %vm235, %v1971, 0.0
    %1980 = vadd.xlane.f32.xlu0 %v1979
    %v1981 = vpop.xlane.xlu0 %1980
    %v1982 = vmul.f32 %v1978, %v248
    %v1983 = vmul.f32 %v1981, %v248
    %v1984 = vsub.f32 %v1970, %v1982
    %v1985 = vsub.f32 %v1971, %v1983
    %v1986 = vmul.f32 %v1984, %v1984
    %v1987 = vmul.f32 %v1985, %v1985
    %v1988 = vsel %vm235, %v1986, 0.0
    %1989 = vadd.xlane.f32.xlu0 %v1988
    %v1990 = vpop.xlane.xlu0 %1989
    %v1991 = vsel %vm235, %v1987, 0.0
    %1992 = vadd.xlane.f32.xlu0 %v1991
    %v1993 = vpop.xlane.xlu0 %1992
    %v1994 = vmul.f32 %v1990, %v248
    %v1995 = vmul.f32 %v1993, %v248
    %v1996 = vadd.f32 %v1994, 1e-12
    %v1997 = vadd.f32 %v1995, 1e-12
    %v1998 = vrsqrt.pop %v1996
    %v1999 = vmul.f32 %v1998, %v1996
    %v2000 = vmul.f32 %v1999, %v1998
    %v2001 = vmul.f32 0.5, %v2000
    %v2002 = vsub.f32 1.5, %v2001
    %v2003 = vmul.f32 %v1998, %v2002
    %vm2004 = vweird.f32 %v1996
    %vm2005 = vweird.f32 %v1998
    %vm2006 = vmor %vm2004, %vm2005
    %v2007 = vsel %vm2006, %v1998, %v2003
    %v2008 = vrsqrt.pop %v1997
    %v2009 = vmul.f32 %v2008, %v1997
    %v2010 = vmul.f32 %v2009, %v2008
    %v2011 = vmul.f32 0.5, %v2010
    %v2012 = vsub.f32 1.5, %v2011
    %v2013 = vmul.f32 %v2008, %v2012
    %vm2014 = vweird.f32 %v1997
    %vm2015 = vweird.f32 %v2008
    %vm2016 = vmor %vm2014, %vm2015
    %v2017 = vsel %vm2016, %v2008, %v2013
    %v2018 = vmul.f32 %v1984, %v2007
    %v2019 = vmul.f32 %v1985, %v2017
    %v2021 = vperm.slane %v1973, 0
    %v2023 = vmul.f32 %v2018, %v2021
    %v2024 = vmul.f32 %v2019, %v2021
    %v2026 = vperm.slane %v1975, 0
    %v2028 = vadd.f32 %v2023, %v2026
    %v2029 = vadd.f32 %v2024, %v2026
    %s2030 = scalar_lea.vmem %s4, 64
    %v2031 = vld [vmem:[%s2030] sm:$0xff]
    %v2032 = vld [vmem:[%s2030 + $0x8] sm:$0xff]
    %v2033 = vld [vmem:[%s2030 + $0x10] sm:$0xff]
    %v2034 = vld [vmem:[%s2030 + $0x18] sm:$0xff]
    %s2035 = scalar_lea.vmem %s5, 2
    %v2036 = vld [vmem:[%s2035] sm:$0x1]
    %v2038 = vperm.slane %v2036, 0
    %v2041 = vsel %vm235, %v2028, 0
    %v2044 = vsel %vm235, %v2029, 0
    %2046 = vmatpush.msra.mxu0 0.0
    %2047 = vmatpush.msra.mxu0 0.0
    %2048 = vmatpush.msra.mxu0 0.0
    %2049 = vmatpush.msra.mxu0 0.0
    %2050 = vmatpush.msra.mxu0 0.0
    %2051 = vmatpush.msra.mxu0 0.0
    %2052 = vmatpush.msra.mxu0 0.0
    %2053 = vmatpush.msra.mxu0 0.0
    %2054 = vmatpush.msra.mxu0 0.0
    %2055 = vmatpush.msra.mxu0 0.0
    %2056 = vmatpush.msra.mxu0 0.0
    %2057 = vmatpush.msra.mxu0 0.0
    %2058 = vmatpush.msra.mxu0 %v2034
    %2059 = vmatpush.msra.mxu0 %v2033
    %2060 = vmatpush.msra.mxu0 %v2032
    %2061 = vmatpush.msra.mxu0 %v2031
    %2062 = vmatmul.f32.gmra.mxu0 %v2041
    %v2063 = vpop.f32.mrf.mxu0
    %v2064 = vadd.f32 %v2038, %v2063
    %2065 = vmatmul.f32.gmra.mxu0 %v2044
    %v2066 = vpop.f32.mrf.mxu0
    %v2067 = vadd.f32 %v2038, %v2066
    %2068 = vdwg.mxu0
    %v2069 = vld [vmem:[#allocation6] sm:$0x1]
    %2071 = vrot.lane.b32.xlu0 %v2064, 96
    %v2072 = vpop.permute.xlu0 %2071
    %v2073 = vsel %vm338, %v2064, 0
    %v2075 = vsel %vm338, %v2072, 0
    %2077 = vmatpush.xpose.msra.mxu0 0.0
    %2078 = vmatpush.xpose.msra.mxu0 0.0
    %2079 = vmatpush.xpose.msra.mxu0 0.0
    %2080 = vmatpush.xpose.msra.mxu0 0.0
    %2081 = vmatpush.xpose.msra.mxu0 0.0
    %2082 = vmatpush.xpose.msra.mxu0 0.0
    %2083 = vmatpush.xpose.msra.mxu0 0.0
    %2084 = vmatpush.xpose.msra.mxu0 0.0
    %2085 = vmatpush.xpose.msra.mxu0 0.0
    %2086 = vmatpush.xpose.msra.mxu0 0.0
    %2087 = vmatpush.xpose.msra.mxu0 0.0
    %2088 = vmatpush.xpose.msra.mxu0 0.0
    %2089 = vmatpush.xpose.msra.mxu0 0.0
    %2090 = vmatpush.xpose.msra.mxu0 0.0
    %2091 = vmatpush.xpose.msra.mxu0 0.0
    %2092 = vmatpush.xpose.msra.mxu0 %v2075
    %2093 = vmatmul.f32.gmra.mxu0 %v2073
    %v2094 = vpop.f32.mrf.mxu0
    %v2095 = vadd.f32 0.0, %v2094
    %2096 = vdwg.mxu0
    %v2097 = vmul.f32 %v2095, 0.35355338
    %v2098 = vperm.slane %v2069, 0
    %v2099 = vadd.f32 %v2097, %v2098
    %v2100 = vsel %vm338, %v2099, -inf
    %2101 = vmax.xlane.f32.xlu0 %v2100
    %v2102 = vpop.xlane.xlu0 %2101
    %v2103 = vsub.f32 %v2099, %v2102
    %v2104 = vmul.f32 %v2103, 1.442695
    %v2105 = vpow.pop %v2104
    %v2106 = vsel %vm338, %v2105, 0.0
    %2107 = vadd.xlane.f32.xlu0 %v2106
    %v2108 = vpop.xlane.xlu0 %2107
    %v2109 = vrcp.pop %v2108
    %v2110 = vmul.f32 %v2105, %v2109
    %2111 = vrot.lane.b32.xlu0 %v2064, 64
    %v2112 = vpop.permute.xlu0 %2111
    %v2115 = vsel %vm338, %v2110, 0
    %2117 = vmatpush.msra.mxu0 0.0
    %2118 = vmatpush.msra.mxu0 0.0
    %2119 = vmatpush.msra.mxu0 0.0
    %2120 = vmatpush.msra.mxu0 0.0
    %2121 = vmatpush.msra.mxu0 0.0
    %2122 = vmatpush.msra.mxu0 0.0
    %2123 = vmatpush.msra.mxu0 0.0
    %2124 = vmatpush.msra.mxu0 0.0
    %2125 = vmatpush.msra.mxu0 0.0
    %2126 = vmatpush.msra.mxu0 0.0
    %2127 = vmatpush.msra.mxu0 0.0
    %2128 = vmatpush.msra.mxu0 0.0
    %2129 = vmatpush.msra.mxu0 0.0
    %2130 = vmatpush.msra.mxu0 0.0
    %2131 = vmatpush.msra.mxu0 0.0
    %2132 = vmatpush.msra.mxu0 %v2112
    %2133 = vmatmul.f32.gmra.mxu0 %v2115
    %v2134 = vpop.f32.mrf.mxu0
    %v2135 = vadd.f32 0.0, %v2134
    %2136 = vdwg.mxu0
    %2137 = vst.msk [vmem:[#allocation2] sm:$0xff] %vm338, %v2135
    %2138 = vrot.lane.b32.xlu0 %v2064, 120
    %v2139 = vpop.permute.xlu0 %2138
    %2140 = vrot.lane.b32.xlu0 %v2064, 88
    %v2141 = vpop.permute.xlu0 %2140
    %v2142 = vsel %vm338, %v2139, 0
    %v2144 = vsel %vm338, %v2141, 0
    %2146 = vmatpush.xpose.msra.mxu0 0.0
    %2147 = vmatpush.xpose.msra.mxu0 0.0
    %2148 = vmatpush.xpose.msra.mxu0 0.0
    %2149 = vmatpush.xpose.msra.mxu0 0.0
    %2150 = vmatpush.xpose.msra.mxu0 0.0
    %2151 = vmatpush.xpose.msra.mxu0 0.0
    %2152 = vmatpush.xpose.msra.mxu0 0.0
    %2153 = vmatpush.xpose.msra.mxu0 0.0
    %2154 = vmatpush.xpose.msra.mxu0 0.0
    %2155 = vmatpush.xpose.msra.mxu0 0.0
    %2156 = vmatpush.xpose.msra.mxu0 0.0
    %2157 = vmatpush.xpose.msra.mxu0 0.0
    %2158 = vmatpush.xpose.msra.mxu0 0.0
    %2159 = vmatpush.xpose.msra.mxu0 0.0
    %2160 = vmatpush.xpose.msra.mxu0 0.0
    %2161 = vmatpush.xpose.msra.mxu0 %v2144
    %2162 = vmatmul.f32.gmra.mxu0 %v2142
    %v2163 = vpop.f32.mrf.mxu0
    %v2164 = vadd.f32 0.0, %v2163
    %2165 = vdwg.mxu0
    %v2166 = vmul.f32 %v2164, 0.35355338
    %v2167 = vadd.f32 %v2166, %v2098
    %v2168 = vsel %vm338, %v2167, -inf
    %2169 = vmax.xlane.f32.xlu0 %v2168
    %v2170 = vpop.xlane.xlu0 %2169
    %v2171 = vsub.f32 %v2167, %v2170
    %v2172 = vmul.f32 %v2171, 1.442695
    %v2173 = vpow.pop %v2172
    %v2174 = vsel %vm338, %v2173, 0.0
    %2175 = vadd.xlane.f32.xlu0 %v2174
    %v2176 = vpop.xlane.xlu0 %2175
    %v2177 = vrcp.pop %v2176
    %v2178 = vmul.f32 %v2173, %v2177
    %2179 = vrot.lane.b32.xlu0 %v2064, 56
    %v2180 = vpop.permute.xlu0 %2179
    %v2183 = vsel %vm338, %v2178, 0
    %2185 = vmatpush.msra.mxu0 0.0
    %2186 = vmatpush.msra.mxu0 0.0
    %2187 = vmatpush.msra.mxu0 0.0
    %2188 = vmatpush.msra.mxu0 0.0
    %2189 = vmatpush.msra.mxu0 0.0
    %2190 = vmatpush.msra.mxu0 0.0
    %2191 = vmatpush.msra.mxu0 0.0
    %2192 = vmatpush.msra.mxu0 0.0
    %2193 = vmatpush.msra.mxu0 0.0
    %2194 = vmatpush.msra.mxu0 0.0
    %2195 = vmatpush.msra.mxu0 0.0
    %2196 = vmatpush.msra.mxu0 0.0
    %2197 = vmatpush.msra.mxu0 0.0
    %2198 = vmatpush.msra.mxu0 0.0
    %2199 = vmatpush.msra.mxu0 0.0
    %2200 = vmatpush.msra.mxu0 %v2180
    %2201 = vmatmul.f32.gmra.mxu0 %v2183
    %v2202 = vpop.f32.mrf.mxu0
    %v2203 = vadd.f32 0.0, %v2202
    %2204 = vdwg.mxu0
    %2206 = vrot.lane.b32.xlu0 %v2203, 8
    %v2207 = vpop.permute.xlu0 %2206
    %2209 = vst.msk [vmem:[#allocation2] sm:$0xff] %vm475, %v2207
    %2210 = vrot.lane.b32.xlu0 %v2064, 112
    %v2211 = vpop.permute.xlu0 %2210
    %2212 = vrot.lane.b32.xlu0 %v2064, 80
    %v2213 = vpop.permute.xlu0 %2212
    %v2214 = vsel %vm338, %v2211, 0
    %v2216 = vsel %vm338, %v2213, 0
    %2218 = vmatpush.xpose.msra.mxu0 0.0
    %2219 = vmatpush.xpose.msra.mxu0 0.0
    %2220 = vmatpush.xpose.msra.mxu0 0.0
    %2221 = vmatpush.xpose.msra.mxu0 0.0
    %2222 = vmatpush.xpose.msra.mxu0 0.0
    %2223 = vmatpush.xpose.msra.mxu0 0.0
    %2224 = vmatpush.xpose.msra.mxu0 0.0
    %2225 = vmatpush.xpose.msra.mxu0 0.0
    %2226 = vmatpush.xpose.msra.mxu0 0.0
    %2227 = vmatpush.xpose.msra.mxu0 0.0
    %2228 = vmatpush.xpose.msra.mxu0 0.0
    %2229 = vmatpush.xpose.msra.mxu0 0.0
    %2230 = vmatpush.xpose.msra.mxu0 0.0
    %2231 = vmatpush.xpose.msra.mxu0 0.0
    %2232 = vmatpush.xpose.msra.mxu0 0.0
    %2233 = vmatpush.xpose.msra.mxu0 %v2216
    %2234 = vmatmul.f32.gmra.mxu0 %v2214
    %v2235 = vpop.f32.mrf.mxu0
    %v2236 = vadd.f32 0.0, %v2235
    %2237 = vdwg.mxu0
    %v2238 = vmul.f32 %v2236, 0.35355338
    %v2239 = vadd.f32 %v2238, %v2098
    %v2240 = vsel %vm338, %v2239, -inf
    %2241 = vmax.xlane.f32.xlu0 %v2240
    %v2242 = vpop.xlane.xlu0 %2241
    %v2243 = vsub.f32 %v2239, %v2242
    %v2244 = vmul.f32 %v2243, 1.442695
    %v2245 = vpow.pop %v2244
    %v2246 = vsel %vm338, %v2245, 0.0
    %2247 = vadd.xlane.f32.xlu0 %v2246
    %v2248 = vpop.xlane.xlu0 %2247
    %v2249 = vrcp.pop %v2248
    %v2250 = vmul.f32 %v2245, %v2249
    %2251 = vrot.lane.b32.xlu0 %v2064, 48
    %v2252 = vpop.permute.xlu0 %2251
    %v2255 = vsel %vm338, %v2250, 0
    %2257 = vmatpush.msra.mxu0 0.0
    %2258 = vmatpush.msra.mxu0 0.0
    %2259 = vmatpush.msra.mxu0 0.0
    %2260 = vmatpush.msra.mxu0 0.0
    %2261 = vmatpush.msra.mxu0 0.0
    %2262 = vmatpush.msra.mxu0 0.0
    %2263 = vmatpush.msra.mxu0 0.0
    %2264 = vmatpush.msra.mxu0 0.0
    %2265 = vmatpush.msra.mxu0 0.0
    %2266 = vmatpush.msra.mxu0 0.0
    %2267 = vmatpush.msra.mxu0 0.0
    %2268 = vmatpush.msra.mxu0 0.0
    %2269 = vmatpush.msra.mxu0 0.0
    %2270 = vmatpush.msra.mxu0 0.0
    %2271 = vmatpush.msra.mxu0 0.0
    %2272 = vmatpush.msra.mxu0 %v2252
    %2273 = vmatmul.f32.gmra.mxu0 %v2255
    %v2274 = vpop.f32.mrf.mxu0
    %v2275 = vadd.f32 0.0, %v2274
    %2276 = vdwg.mxu0
    %2278 = vrot.lane.b32.xlu0 %v2275, 16
    %v2279 = vpop.permute.xlu0 %2278
    %2281 = vst.msk [vmem:[#allocation2] sm:$0xff] %vm548, %v2279
    %2282 = vrot.lane.b32.xlu0 %v2064, 104
    %v2283 = vpop.permute.xlu0 %2282
    %2284 = vrot.lane.b32.xlu0 %v2064, 72
    %v2285 = vpop.permute.xlu0 %2284
    %v2286 = vsel %vm338, %v2283, 0
    %v2288 = vsel %vm338, %v2285, 0
    %2290 = vmatpush.xpose.msra.mxu0 0.0
    %2291 = vmatpush.xpose.msra.mxu0 0.0
    %2292 = vmatpush.xpose.msra.mxu0 0.0
    %2293 = vmatpush.xpose.msra.mxu0 0.0
    %2294 = vmatpush.xpose.msra.mxu0 0.0
    %2295 = vmatpush.xpose.msra.mxu0 0.0
    %2296 = vmatpush.xpose.msra.mxu0 0.0
    %2297 = vmatpush.xpose.msra.mxu0 0.0
    %2298 = vmatpush.xpose.msra.mxu0 0.0
    %2299 = vmatpush.xpose.msra.mxu0 0.0
    %2300 = vmatpush.xpose.msra.mxu0 0.0
    %2301 = vmatpush.xpose.msra.mxu0 0.0
    %2302 = vmatpush.xpose.msra.mxu0 0.0
    %2303 = vmatpush.xpose.msra.mxu0 0.0
    %2304 = vmatpush.xpose.msra.mxu0 0.0
    %2305 = vmatpush.xpose.msra.mxu0 %v2288
    %2306 = vmatmul.f32.gmra.mxu0 %v2286
    %v2307 = vpop.f32.mrf.mxu0
    %v2308 = vadd.f32 0.0, %v2307
    %2309 = vdwg.mxu0
    %v2310 = vmul.f32 %v2308, 0.35355338
    %v2311 = vadd.f32 %v2310, %v2098
    %v2312 = vsel %vm338, %v2311, -inf
    %2313 = vmax.xlane.f32.xlu0 %v2312
    %v2314 = vpop.xlane.xlu0 %2313
    %v2315 = vsub.f32 %v2311, %v2314
    %v2316 = vmul.f32 %v2315, 1.442695
    %v2317 = vpow.pop %v2316
    %v2318 = vsel %vm338, %v2317, 0.0
    %2319 = vadd.xlane.f32.xlu0 %v2318
    %v2320 = vpop.xlane.xlu0 %2319
    %v2321 = vrcp.pop %v2320
    %v2322 = vmul.f32 %v2317, %v2321
    %2323 = vrot.lane.b32.xlu0 %v2064, 40
    %v2324 = vpop.permute.xlu0 %2323
    %v2327 = vsel %vm338, %v2322, 0
    %2329 = vmatpush.msra.mxu0 0.0
    %2330 = vmatpush.msra.mxu0 0.0
    %2331 = vmatpush.msra.mxu0 0.0
    %2332 = vmatpush.msra.mxu0 0.0
    %2333 = vmatpush.msra.mxu0 0.0
    %2334 = vmatpush.msra.mxu0 0.0
    %2335 = vmatpush.msra.mxu0 0.0
    %2336 = vmatpush.msra.mxu0 0.0
    %2337 = vmatpush.msra.mxu0 0.0
    %2338 = vmatpush.msra.mxu0 0.0
    %2339 = vmatpush.msra.mxu0 0.0
    %2340 = vmatpush.msra.mxu0 0.0
    %2341 = vmatpush.msra.mxu0 0.0
    %2342 = vmatpush.msra.mxu0 0.0
    %2343 = vmatpush.msra.mxu0 0.0
    %2344 = vmatpush.msra.mxu0 %v2324
    %2345 = vmatmul.f32.gmra.mxu0 %v2327
    %v2346 = vpop.f32.mrf.mxu0
    %v2347 = vadd.f32 0.0, %v2346
    %2348 = vdwg.mxu0
    %2350 = vrot.lane.b32.xlu0 %v2347, 24
    %v2351 = vpop.permute.xlu0 %2350
    %2353 = vst.msk [vmem:[#allocation2] sm:$0xff] %vm621, %v2351
    %v2354 = vld [vmem:[#allocation6 + $0x1] sm:$0x1]
    %2356 = vrot.lane.b32.xlu0 %v2067, 96
    %v2357 = vpop.permute.xlu0 %2356
    %v2358 = vsel %vm338, %v2067, 0
    %v2360 = vsel %vm338, %v2357, 0
    %2362 = vmatpush.xpose.msra.mxu0 0.0
    %2363 = vmatpush.xpose.msra.mxu0 0.0
    %2364 = vmatpush.xpose.msra.mxu0 0.0
    %2365 = vmatpush.xpose.msra.mxu0 0.0
    %2366 = vmatpush.xpose.msra.mxu0 0.0
    %2367 = vmatpush.xpose.msra.mxu0 0.0
    %2368 = vmatpush.xpose.msra.mxu0 0.0
    %2369 = vmatpush.xpose.msra.mxu0 0.0
    %2370 = vmatpush.xpose.msra.mxu0 0.0
    %2371 = vmatpush.xpose.msra.mxu0 0.0
    %2372 = vmatpush.xpose.msra.mxu0 0.0
    %2373 = vmatpush.xpose.msra.mxu0 0.0
    %2374 = vmatpush.xpose.msra.mxu0 0.0
    %2375 = vmatpush.xpose.msra.mxu0 0.0
    %2376 = vmatpush.xpose.msra.mxu0 0.0
    %2377 = vmatpush.xpose.msra.mxu0 %v2360
    %2378 = vmatmul.f32.gmra.mxu0 %v2358
    %v2379 = vpop.f32.mrf.mxu0
    %v2380 = vadd.f32 0.0, %v2379
    %2381 = vdwg.mxu0
    %v2382 = vmul.f32 %v2380, 0.35355338
    %v2383 = vperm.slane %v2354, 0
    %v2384 = vadd.f32 %v2382, %v2383
    %v2385 = vsel %vm338, %v2384, -inf
    %2386 = vmax.xlane.f32.xlu0 %v2385
    %v2387 = vpop.xlane.xlu0 %2386
    %v2388 = vsub.f32 %v2384, %v2387
    %v2389 = vmul.f32 %v2388, 1.442695
    %v2390 = vpow.pop %v2389
    %v2391 = vsel %vm338, %v2390, 0.0
    %2392 = vadd.xlane.f32.xlu0 %v2391
    %v2393 = vpop.xlane.xlu0 %2392
    %v2394 = vrcp.pop %v2393
    %v2395 = vmul.f32 %v2390, %v2394
    %2396 = vrot.lane.b32.xlu0 %v2067, 64
    %v2397 = vpop.permute.xlu0 %2396
    %v2400 = vsel %vm338, %v2395, 0
    %2402 = vmatpush.msra.mxu0 0.0
    %2403 = vmatpush.msra.mxu0 0.0
    %2404 = vmatpush.msra.mxu0 0.0
    %2405 = vmatpush.msra.mxu0 0.0
    %2406 = vmatpush.msra.mxu0 0.0
    %2407 = vmatpush.msra.mxu0 0.0
    %2408 = vmatpush.msra.mxu0 0.0
    %2409 = vmatpush.msra.mxu0 0.0
    %2410 = vmatpush.msra.mxu0 0.0
    %2411 = vmatpush.msra.mxu0 0.0
    %2412 = vmatpush.msra.mxu0 0.0
    %2413 = vmatpush.msra.mxu0 0.0
    %2414 = vmatpush.msra.mxu0 0.0
    %2415 = vmatpush.msra.mxu0 0.0
    %2416 = vmatpush.msra.mxu0 0.0
    %2417 = vmatpush.msra.mxu0 %v2397
    %2418 = vmatmul.f32.gmra.mxu0 %v2400
    %v2419 = vpop.f32.mrf.mxu0
    %v2420 = vadd.f32 0.0, %v2419
    %2421 = vdwg.mxu0
    %2422 = vst.msk [vmem:[#allocation2 + $0x8] sm:$0xff] %vm338, %v2420
    %2423 = vrot.lane.b32.xlu0 %v2067, 120
    %v2424 = vpop.permute.xlu0 %2423
    %2425 = vrot.lane.b32.xlu0 %v2067, 88
    %v2426 = vpop.permute.xlu0 %2425
    %v2427 = vsel %vm338, %v2424, 0
    %v2429 = vsel %vm338, %v2426, 0
    %2431 = vmatpush.xpose.msra.mxu0 0.0
    %2432 = vmatpush.xpose.msra.mxu0 0.0
    %2433 = vmatpush.xpose.msra.mxu0 0.0
    %2434 = vmatpush.xpose.msra.mxu0 0.0
    %2435 = vmatpush.xpose.msra.mxu0 0.0
    %2436 = vmatpush.xpose.msra.mxu0 0.0
    %2437 = vmatpush.xpose.msra.mxu0 0.0
    %2438 = vmatpush.xpose.msra.mxu0 0.0
    %2439 = vmatpush.xpose.msra.mxu0 0.0
    %2440 = vmatpush.xpose.msra.mxu0 0.0
    %2441 = vmatpush.xpose.msra.mxu0 0.0
    %2442 = vmatpush.xpose.msra.mxu0 0.0
    %2443 = vmatpush.xpose.msra.mxu0 0.0
    %2444 = vmatpush.xpose.msra.mxu0 0.0
    %2445 = vmatpush.xpose.msra.mxu0 0.0
    %2446 = vmatpush.xpose.msra.mxu0 %v2429
    %2447 = vmatmul.f32.gmra.mxu0 %v2427
    %v2448 = vpop.f32.mrf.mxu0
    %v2449 = vadd.f32 0.0, %v2448
    %2450 = vdwg.mxu0
    %v2451 = vmul.f32 %v2449, 0.35355338
    %v2452 = vadd.f32 %v2451, %v2383
    %v2453 = vsel %vm338, %v2452, -inf
    %2454 = vmax.xlane.f32.xlu0 %v2453
    %v2455 = vpop.xlane.xlu0 %2454
    %v2456 = vsub.f32 %v2452, %v2455
    %v2457 = vmul.f32 %v2456, 1.442695
    %v2458 = vpow.pop %v2457
    %v2459 = vsel %vm338, %v2458, 0.0
    %2460 = vadd.xlane.f32.xlu0 %v2459
    %v2461 = vpop.xlane.xlu0 %2460
    %v2462 = vrcp.pop %v2461
    %v2463 = vmul.f32 %v2458, %v2462
    %2464 = vrot.lane.b32.xlu0 %v2067, 56
    %v2465 = vpop.permute.xlu0 %2464
    %v2468 = vsel %vm338, %v2463, 0
    %2470 = vmatpush.msra.mxu0 0.0
    %2471 = vmatpush.msra.mxu0 0.0
    %2472 = vmatpush.msra.mxu0 0.0
    %2473 = vmatpush.msra.mxu0 0.0
    %2474 = vmatpush.msra.mxu0 0.0
    %2475 = vmatpush.msra.mxu0 0.0
    %2476 = vmatpush.msra.mxu0 0.0
    %2477 = vmatpush.msra.mxu0 0.0
    %2478 = vmatpush.msra.mxu0 0.0
    %2479 = vmatpush.msra.mxu0 0.0
    %2480 = vmatpush.msra.mxu0 0.0
    %2481 = vmatpush.msra.mxu0 0.0
    %2482 = vmatpush.msra.mxu0 0.0
    %2483 = vmatpush.msra.mxu0 0.0
    %2484 = vmatpush.msra.mxu0 0.0
    %2485 = vmatpush.msra.mxu0 %v2465
    %2486 = vmatmul.f32.gmra.mxu0 %v2468
    %v2487 = vpop.f32.mrf.mxu0
    %v2488 = vadd.f32 0.0, %v2487
    %2489 = vdwg.mxu0
    %2491 = vrot.lane.b32.xlu0 %v2488, 8
    %v2492 = vpop.permute.xlu0 %2491
    %2494 = vst.msk [vmem:[#allocation2 + $0x8] sm:$0xff] %vm475, %v2492
    %2495 = vrot.lane.b32.xlu0 %v2067, 112
    %v2496 = vpop.permute.xlu0 %2495
    %2497 = vrot.lane.b32.xlu0 %v2067, 80
    %v2498 = vpop.permute.xlu0 %2497
    %v2499 = vsel %vm338, %v2496, 0
    %v2501 = vsel %vm338, %v2498, 0
    %2503 = vmatpush.xpose.msra.mxu0 0.0
    %2504 = vmatpush.xpose.msra.mxu0 0.0
    %2505 = vmatpush.xpose.msra.mxu0 0.0
    %2506 = vmatpush.xpose.msra.mxu0 0.0
    %2507 = vmatpush.xpose.msra.mxu0 0.0
    %2508 = vmatpush.xpose.msra.mxu0 0.0
    %2509 = vmatpush.xpose.msra.mxu0 0.0
    %2510 = vmatpush.xpose.msra.mxu0 0.0
    %2511 = vmatpush.xpose.msra.mxu0 0.0
    %2512 = vmatpush.xpose.msra.mxu0 0.0
    %2513 = vmatpush.xpose.msra.mxu0 0.0
    %2514 = vmatpush.xpose.msra.mxu0 0.0
    %2515 = vmatpush.xpose.msra.mxu0 0.0
    %2516 = vmatpush.xpose.msra.mxu0 0.0
    %2517 = vmatpush.xpose.msra.mxu0 0.0
    %2518 = vmatpush.xpose.msra.mxu0 %v2501
    %2519 = vmatmul.f32.gmra.mxu0 %v2499
    %v2520 = vpop.f32.mrf.mxu0
    %v2521 = vadd.f32 0.0, %v2520
    %2522 = vdwg.mxu0
    %v2523 = vmul.f32 %v2521, 0.35355338
    %v2524 = vadd.f32 %v2523, %v2383
    %v2525 = vsel %vm338, %v2524, -inf
    %2526 = vmax.xlane.f32.xlu0 %v2525
    %v2527 = vpop.xlane.xlu0 %2526
    %v2528 = vsub.f32 %v2524, %v2527
    %v2529 = vmul.f32 %v2528, 1.442695
    %v2530 = vpow.pop %v2529
    %v2531 = vsel %vm338, %v2530, 0.0
    %2532 = vadd.xlane.f32.xlu0 %v2531
    %v2533 = vpop.xlane.xlu0 %2532
    %v2534 = vrcp.pop %v2533
    %v2535 = vmul.f32 %v2530, %v2534
    %2536 = vrot.lane.b32.xlu0 %v2067, 48
    %v2537 = vpop.permute.xlu0 %2536
    %v2540 = vsel %vm338, %v2535, 0
    %2542 = vmatpush.msra.mxu0 0.0
    %2543 = vmatpush.msra.mxu0 0.0
    %2544 = vmatpush.msra.mxu0 0.0
    %2545 = vmatpush.msra.mxu0 0.0
    %2546 = vmatpush.msra.mxu0 0.0
    %2547 = vmatpush.msra.mxu0 0.0
    %2548 = vmatpush.msra.mxu0 0.0
    %2549 = vmatpush.msra.mxu0 0.0
    %2550 = vmatpush.msra.mxu0 0.0
    %2551 = vmatpush.msra.mxu0 0.0
    %2552 = vmatpush.msra.mxu0 0.0
    %2553 = vmatpush.msra.mxu0 0.0
    %2554 = vmatpush.msra.mxu0 0.0
    %2555 = vmatpush.msra.mxu0 0.0
    %2556 = vmatpush.msra.mxu0 0.0
    %2557 = vmatpush.msra.mxu0 %v2537
    %2558 = vmatmul.f32.gmra.mxu0 %v2540
    %v2559 = vpop.f32.mrf.mxu0
    %v2560 = vadd.f32 0.0, %v2559
    %2561 = vdwg.mxu0
    %2563 = vrot.lane.b32.xlu0 %v2560, 16
    %v2564 = vpop.permute.xlu0 %2563
    %2566 = vst.msk [vmem:[#allocation2 + $0x8] sm:$0xff] %vm548, %v2564
    %2567 = vrot.lane.b32.xlu0 %v2067, 104
    %v2568 = vpop.permute.xlu0 %2567
    %2569 = vrot.lane.b32.xlu0 %v2067, 72
    %v2570 = vpop.permute.xlu0 %2569
    %v2571 = vsel %vm338, %v2568, 0
    %v2573 = vsel %vm338, %v2570, 0
    %2575 = vmatpush.xpose.msra.mxu0 0.0
    %2576 = vmatpush.xpose.msra.mxu0 0.0
    %2577 = vmatpush.xpose.msra.mxu0 0.0
    %2578 = vmatpush.xpose.msra.mxu0 0.0
    %2579 = vmatpush.xpose.msra.mxu0 0.0
    %2580 = vmatpush.xpose.msra.mxu0 0.0
    %2581 = vmatpush.xpose.msra.mxu0 0.0
    %2582 = vmatpush.xpose.msra.mxu0 0.0
    %2583 = vmatpush.xpose.msra.mxu0 0.0
    %2584 = vmatpush.xpose.msra.mxu0 0.0
    %2585 = vmatpush.xpose.msra.mxu0 0.0
    %2586 = vmatpush.xpose.msra.mxu0 0.0
    %2587 = vmatpush.xpose.msra.mxu0 0.0
    %2588 = vmatpush.xpose.msra.mxu0 0.0
    %2589 = vmatpush.xpose.msra.mxu0 0.0
    %2590 = vmatpush.xpose.msra.mxu0 %v2573
    %2591 = vmatmul.f32.gmra.mxu0 %v2571
    %v2592 = vpop.f32.mrf.mxu0
    %v2593 = vadd.f32 0.0, %v2592
    %2594 = vdwg.mxu0
    %v2595 = vmul.f32 %v2593, 0.35355338
    %v2596 = vadd.f32 %v2595, %v2383
    %v2597 = vsel %vm338, %v2596, -inf
    %2598 = vmax.xlane.f32.xlu0 %v2597
    %v2599 = vpop.xlane.xlu0 %2598
    %v2600 = vsub.f32 %v2596, %v2599
    %v2601 = vmul.f32 %v2600, 1.442695
    %v2602 = vpow.pop %v2601
    %v2603 = vsel %vm338, %v2602, 0.0
    %2604 = vadd.xlane.f32.xlu0 %v2603
    %v2605 = vpop.xlane.xlu0 %2604
    %v2606 = vrcp.pop %v2605
    %v2607 = vmul.f32 %v2602, %v2606
    %2608 = vrot.lane.b32.xlu0 %v2067, 40
    %v2609 = vpop.permute.xlu0 %2608
    %v2612 = vsel %vm338, %v2607, 0
    %2614 = vmatpush.msra.mxu0 0.0
    %2615 = vmatpush.msra.mxu0 0.0
    %2616 = vmatpush.msra.mxu0 0.0
    %2617 = vmatpush.msra.mxu0 0.0
    %2618 = vmatpush.msra.mxu0 0.0
    %2619 = vmatpush.msra.mxu0 0.0
    %2620 = vmatpush.msra.mxu0 0.0
    %2621 = vmatpush.msra.mxu0 0.0
    %2622 = vmatpush.msra.mxu0 0.0
    %2623 = vmatpush.msra.mxu0 0.0
    %2624 = vmatpush.msra.mxu0 0.0
    %2625 = vmatpush.msra.mxu0 0.0
    %2626 = vmatpush.msra.mxu0 0.0
    %2627 = vmatpush.msra.mxu0 0.0
    %2628 = vmatpush.msra.mxu0 0.0
    %2629 = vmatpush.msra.mxu0 %v2609
    %2630 = vmatmul.f32.gmra.mxu0 %v2612
    %v2631 = vpop.f32.mrf.mxu0
    %v2632 = vadd.f32 0.0, %v2631
    %2633 = vdwg.mxu0
    %2635 = vrot.lane.b32.xlu0 %v2632, 24
    %v2636 = vpop.permute.xlu0 %2635
    %2638 = vst.msk [vmem:[#allocation2 + $0x8] sm:$0xff] %vm621, %v2636
    %v2639 = vld [vmem:[#allocation2] sm:$0xff]
    %v2640 = vld [vmem:[#allocation2 + $0x8] sm:$0xff]
    %s2641 = scalar_lea.vmem %s6, 64
    %v2642 = vld [vmem:[%s2641] sm:$0xff]
    %v2643 = vld [vmem:[%s2641 + $0x8] sm:$0xff]
    %v2644 = vld [vmem:[%s2641 + $0x10] sm:$0xff]
    %v2645 = vld [vmem:[%s2641 + $0x18] sm:$0xff]
    %s2646 = scalar_lea.vmem [#allocation11], 2
    %v2647 = vld [vmem:[%s2646] sm:$0x1]
    %v2649 = vperm.slane %v2647, 0
    %v2652 = vsel %vm235, %v2639, 0
    %v2655 = vsel %vm235, %v2640, 0
    %2657 = vmatpush.msra.mxu0 0.0
    %2658 = vmatpush.msra.mxu0 0.0
    %2659 = vmatpush.msra.mxu0 0.0
    %2660 = vmatpush.msra.mxu0 0.0
    %2661 = vmatpush.msra.mxu0 0.0
    %2662 = vmatpush.msra.mxu0 0.0
    %2663 = vmatpush.msra.mxu0 0.0
    %2664 = vmatpush.msra.mxu0 0.0
    %2665 = vmatpush.msra.mxu0 0.0
    %2666 = vmatpush.msra.mxu0 0.0
    %2667 = vmatpush.msra.mxu0 0.0
    %2668 = vmatpush.msra.mxu0 0.0
    %2669 = vmatpush.msra.mxu0 %v2645
    %2670 = vmatpush.msra.mxu0 %v2644
    %2671 = vmatpush.msra.mxu0 %v2643
    %2672 = vmatpush.msra.mxu0 %v2642
    %2673 = vmatmul.f32.gmra.mxu0 %v2652
    %v2674 = vpop.f32.mrf.mxu0
    %v2675 = vadd.f32 %v2649, %v2674
    %2676 = vmatmul.f32.gmra.mxu0 %v2655
    %v2677 = vpop.f32.mrf.mxu0
    %v2678 = vadd.f32 %v2649, %v2677
    %2679 = vdwg.mxu0
    %v2680 = vadd.f32 %v2028, %v2675
    %v2681 = vadd.f32 %v2029, %v2678
    %s2682 = scalar_lea.vmem %s8, 2
    %v2683 = vld [vmem:[%s2682] sm:$0x1]
    %s2684 = scalar_lea.vmem [#allocation12], 2
    %v2685 = vld [vmem:[%s2684] sm:$0x1]
    %v2686 = vsel %vm235, %v2680, 0.0
    %2687 = vadd.xlane.f32.xlu0 %v2686
    %v2688 = vpop.xlane.xlu0 %2687
    %v2689 = vsel %vm235, %v2681, 0.0
    %2690 = vadd.xlane.f32.xlu0 %v2689
    %v2691 = vpop.xlane.xlu0 %2690
    %v2692 = vmul.f32 %v2688, %v248
    %v2693 = vmul.f32 %v2691, %v248
    %v2694 = vsub.f32 %v2680, %v2692
    %v2695 = vsub.f32 %v2681, %v2693
    %v2696 = vmul.f32 %v2694, %v2694
    %v2697 = vmul.f32 %v2695, %v2695
    %v2698 = vsel %vm235, %v2696, 0.0
    %2699 = vadd.xlane.f32.xlu0 %v2698
    %v2700 = vpop.xlane.xlu0 %2699
    %v2701 = vsel %vm235, %v2697, 0.0
    %2702 = vadd.xlane.f32.xlu0 %v2701
    %v2703 = vpop.xlane.xlu0 %2702
    %v2704 = vmul.f32 %v2700, %v248
    %v2705 = vmul.f32 %v2703, %v248
    %v2706 = vadd.f32 %v2704, 1e-12
    %v2707 = vadd.f32 %v2705, 1e-12
    %v2708 = vrsqrt.pop %v2706
    %v2709 = vmul.f32 %v2708, %v2706
    %v2710 = vmul.f32 %v2709, %v2708
    %v2711 = vmul.f32 0.5, %v2710
    %v2712 = vsub.f32 1.5, %v2711
    %v2713 = vmul.f32 %v2708, %v2712
    %vm2714 = vweird.f32 %v2706
    %vm2715 = vweird.f32 %v2708
    %vm2716 = vmor %vm2714, %vm2715
    %v2717 = vsel %vm2716, %v2708, %v2713
    %v2718 = vrsqrt.pop %v2707
    %v2719 = vmul.f32 %v2718, %v2707
    %v2720 = vmul.f32 %v2719, %v2718
    %v2721 = vmul.f32 0.5, %v2720
    %v2722 = vsub.f32 1.5, %v2721
    %v2723 = vmul.f32 %v2718, %v2722
    %vm2724 = vweird.f32 %v2707
    %vm2725 = vweird.f32 %v2718
    %vm2726 = vmor %vm2724, %vm2725
    %v2727 = vsel %vm2726, %v2718, %v2723
    %v2728 = vmul.f32 %v2694, %v2717
    %v2729 = vmul.f32 %v2695, %v2727
    %v2731 = vperm.slane %v2683, 0
    %v2733 = vmul.f32 %v2728, %v2731
    %v2734 = vmul.f32 %v2729, %v2731
    %v2736 = vperm.slane %v2685, 0
    %v2738 = vadd.f32 %v2733, %v2736
    %v2739 = vadd.f32 %v2734, %v2736
    %s2740 = scalar_lea.vmem %s10, 64
    %v2741 = vld [vmem:[%s2740] sm:$0xff]
    %v2742 = vld [vmem:[%s2740 + $0x8] sm:$0xff]
    %v2743 = vld [vmem:[%s2740 + $0x10] sm:$0xff]
    %v2744 = vld [vmem:[%s2740 + $0x18] sm:$0xff]
    %s2745 = scalar_lea.vmem [#allocation14], 2
    %v2746 = vld [vmem:[%s2745] sm:$0x1]
    %v2748 = vperm.slane %v2746, 0
    %v2751 = vsel %vm235, %v2738, 0
    %v2754 = vsel %vm235, %v2739, 0
    %2756 = vmatpush.msra.mxu0 0.0
    %2757 = vmatpush.msra.mxu0 0.0
    %2758 = vmatpush.msra.mxu0 0.0
    %2759 = vmatpush.msra.mxu0 0.0
    %2760 = vmatpush.msra.mxu0 0.0
    %2761 = vmatpush.msra.mxu0 0.0
    %2762 = vmatpush.msra.mxu0 0.0
    %2763 = vmatpush.msra.mxu0 0.0
    %2764 = vmatpush.msra.mxu0 0.0
    %2765 = vmatpush.msra.mxu0 0.0
    %2766 = vmatpush.msra.mxu0 0.0
    %2767 = vmatpush.msra.mxu0 0.0
    %2768 = vmatpush.msra.mxu0 %v2744
    %2769 = vmatpush.msra.mxu0 %v2743
    %2770 = vmatpush.msra.mxu0 %v2742
    %2771 = vmatpush.msra.mxu0 %v2741
    %2772 = vmatmul.f32.gmra.mxu0 %v2751
    %v2773 = vpop.f32.mrf.mxu0
    %v2774 = vadd.f32 %v2748, %v2773
    %2775 = vmatmul.f32.gmra.mxu0 %v2754
    %v2776 = vpop.f32.mrf.mxu0
    %v2777 = vadd.f32 %v2748, %v2776
    %2778 = vdwg.mxu0
    %v2779 = vmul.f32 %v2774, %v2774
    %v2780 = vmul.f32 %v2777, %v2777
    %v2781 = vmul.f32 %v2774, %v2779
    %v2782 = vmul.f32 %v2777, %v2780
    %v2783 = vmul.f32 %v2781, 0.044715
    %v2784 = vmul.f32 %v2782, 0.044715
    %v2785 = vadd.f32 %v2774, %v2783
    %v2786 = vadd.f32 %v2777, %v2784
    %v2787 = vmul.f32 %v2785, 0.7978846
    %v2788 = vmul.f32 %v2786, 0.7978846
    %v2789 = vtanh.pop %v2787
    %v2790 = vtanh.pop %v2788
    %v2791 = vadd.f32 %v2789, 1.0
    %v2792 = vadd.f32 %v2790, 1.0
    %v2793 = vmul.f32 %v2791, 0.5
    %v2794 = vmul.f32 %v2792, 0.5
    %v2795 = vmul.f32 %v2774, %v2793
    %v2796 = vmul.f32 %v2777, %v2794
    %s2797 = scalar_lea.vmem %s12, 128
    %v2798 = vld [vmem:[%s2797] sm:$0xff]
    %v2799 = vld [vmem:[%s2797 + $0x8] sm:$0xff]
    %v2800 = vld [vmem:[%s2797 + $0x10] sm:$0xff]
    %v2801 = vld [vmem:[%s2797 + $0x18] sm:$0xff]
    %v2802 = vld [vmem:[%s2797 + $0x20] sm:$0xff]
    %v2803 = vld [vmem:[%s2797 + $0x28] sm:$0xff]
    %v2804 = vld [vmem:[%s2797 + $0x30] sm:$0xff]
    %v2805 = vld [vmem:[%s2797 + $0x38] sm:$0xff]
    %s2806 = scalar_lea.vmem %s13, 2
    %v2807 = vld [vmem:[%s2806] sm:$0x1]
    %v2809 = vperm.slane %v2807, 0
    %v2812 = vsel %vm1072, %v2795, 0
    %v2815 = vsel %vm1072, %v2796, 0
    %2817 = vmatpush.msra.mxu0 0.0
    %2818 = vmatpush.msra.mxu0 0.0
    %2819 = vmatpush.msra.mxu0 0.0
    %2820 = vmatpush.msra.mxu0 0.0
    %2821 = vmatpush.msra.mxu0 0.0
    %2822 = vmatpush.msra.mxu0 0.0
    %2823 = vmatpush.msra.mxu0 0.0
    %2824 = vmatpush.msra.mxu0 0.0
    %2825 = vmatpush.msra.mxu0 %v2805
    %2826 = vmatpush.msra.mxu0 %v2804
    %2827 = vmatpush.msra.mxu0 %v2803
    %2828 = vmatpush.msra.mxu0 %v2802
    %2829 = vmatpush.msra.mxu0 %v2801
    %2830 = vmatpush.msra.mxu0 %v2800
    %2831 = vmatpush.msra.mxu0 %v2799
    %2832 = vmatpush.msra.mxu0 %v2798
    %2833 = vmatmul.f32.gmra.mxu0 %v2812
    %v2834 = vpop.f32.mrf.mxu0
    %v2835 = vadd.f32 %v2809, %v2834
    %2836 = vmatmul.f32.gmra.mxu0 %v2815
    %v2837 = vpop.f32.mrf.mxu0
    %v2838 = vadd.f32 %v2809, %v2837
    %2839 = vdwg.mxu0
    %v2840 = vadd.f32 %v2738, %v2835
    %v2841 = vadd.f32 %v2739, %v2838
    %s2842 = scalar_lea.vmem [#allocation15], 2
    %v2843 = vld [vmem:[%s2842] sm:$0x1]
    %s2844 = scalar_lea.vmem [#allocation17], 2
    %v2845 = vld [vmem:[%s2844] sm:$0x1]
    %v2846 = vsel %vm235, %v2840, 0.0
    %2847 = vadd.xlane.f32.xlu0 %v2846
    %v2848 = vpop.xlane.xlu0 %2847
    %v2849 = vsel %vm235, %v2841, 0.0
    %2850 = vadd.xlane.f32.xlu0 %v2849
    %v2851 = vpop.xlane.xlu0 %2850
    %v2852 = vmul.f32 %v2848, %v248
    %v2853 = vmul.f32 %v2851, %v248
    %v2854 = vsub.f32 %v2840, %v2852
    %v2855 = vsub.f32 %v2841, %v2853
    %v2856 = vmul.f32 %v2854, %v2854
    %v2857 = vmul.f32 %v2855, %v2855
    %v2858 = vsel %vm235, %v2856, 0.0
    %2859 = vadd.xlane.f32.xlu0 %v2858
    %v2860 = vpop.xlane.xlu0 %2859
    %v2861 = vsel %vm235, %v2857, 0.0
    %2862 = vadd.xlane.f32.xlu0 %v2861
    %v2863 = vpop.xlane.xlu0 %2862
    %v2864 = vmul.f32 %v2860, %v248
    %v2865 = vmul.f32 %v2863, %v248
    %v2866 = vadd.f32 %v2864, 1e-12
    %v2867 = vadd.f32 %v2865, 1e-12
    %v2868 = vrsqrt.pop %v2866
    %v2869 = vmul.f32 %v2868, %v2866
    %v2870 = vmul.f32 %v2869, %v2868
    %v2871 = vmul.f32 0.5, %v2870
    %v2872 = vsub.f32 1.5, %v2871
    %v2873 = vmul.f32 %v2868, %v2872
    %vm2874 = vweird.f32 %v2866
    %vm2875 = vweird.f32 %v2868
    %vm2876 = vmor %vm2874, %vm2875
    %v2877 = vsel %vm2876, %v2868, %v2873
    %v2878 = vrsqrt.pop %v2867
    %v2879 = vmul.f32 %v2878, %v2867
    %v2880 = vmul.f32 %v2879, %v2878
    %v2881 = vmul.f32 0.5, %v2880
    %v2882 = vsub.f32 1.5, %v2881
    %v2883 = vmul.f32 %v2878, %v2882
    %vm2884 = vweird.f32 %v2867
    %vm2885 = vweird.f32 %v2878
    %vm2886 = vmor %vm2884, %vm2885
    %v2887 = vsel %vm2886, %v2878, %v2883
    %v2888 = vmul.f32 %v2854, %v2877
    %v2889 = vmul.f32 %v2855, %v2887
    %v2891 = vperm.slane %v2843, 0
    %v2893 = vmul.f32 %v2888, %v2891
    %v2894 = vmul.f32 %v2889, %v2891
    %v2896 = vperm.slane %v2845, 0
    %v2898 = vadd.f32 %v2893, %v2896
    %v2899 = vadd.f32 %v2894, %v2896
    %v2900 = vadd.f32 %v2028, %v2898
    %v2901 = vadd.f32 %v2029, %v2899
    %v2902 = vmul.f32 %v2900, 0.5
    %vm2903 = vcmask 253952
    %2904 = vst.msk [vmem:[#allocation2] sm:$0x1] %vm2903, %v2902
    %v2905 = vmul.f32 %v2901, 0.5
    %2906 = vst.msk [vmem:[#allocation2 + $0x1] sm:$0x1] %vm2903, %v2905
    %v2907 = vld [vmem:[#allocation2] sm:$0x3]
    %v2908 = vld [vmem:[#allocation18] sm:$0xff]
    %v2909 = vld [vmem:[#allocation18 + $0x8] sm:$0xff]
    %v2910 = vld [vmem:[#allocation18 + $0x10] sm:$0xff]
    %v2911 = vld [vmem:[#allocation18 + $0x18] sm:$0xff]
    %v2912 = vld [vmem:[%s17] sm:$0x1]
    %v2914 = vperm.slane %v2912, 0
    %v2917 = vsel %vm235, %v2907, 0
    %2919 = vmatpush.msra.mxu0 0.0
    %2920 = vmatpush.msra.mxu0 0.0
    %2921 = vmatpush.msra.mxu0 0.0
    %2922 = vmatpush.msra.mxu0 0.0
    %2923 = vmatpush.msra.mxu0 0.0
    %2924 = vmatpush.msra.mxu0 0.0
    %2925 = vmatpush.msra.mxu0 0.0
    %2926 = vmatpush.msra.mxu0 0.0
    %2927 = vmatpush.msra.mxu0 0.0
    %2928 = vmatpush.msra.mxu0 0.0
    %2929 = vmatpush.msra.mxu0 0.0
    %2930 = vmatpush.msra.mxu0 0.0
    %2931 = vmatpush.msra.mxu0 %v2911
    %2932 = vmatpush.msra.mxu0 %v2910
    %2933 = vmatpush.msra.mxu0 %v2909
    %2934 = vmatpush.msra.mxu0 %v2908
    %2935 = vmatmul.f32.gmra.mxu0 %v2917
    %v2936 = vpop.f32.mrf.mxu0
    %v2937 = vadd.f32 %v2914, %v2936
    %2938 = vdwg.mxu0
    %v2939 = vtanh.pop %v2937
    %v2940 = vld [vmem:[#allocation20] sm:$0xff]
    %v2941 = vld [vmem:[#allocation20 + $0x8] sm:$0xff]
    %v2942 = vld [vmem:[#allocation20 + $0x10] sm:$0xff]
    %v2943 = vld [vmem:[#allocation20 + $0x18] sm:$0xff]
    %v2944 = vld [vmem:[%s19] sm:$0x1]
    %v2946 = vperm.slane %v2944, 0
    %v2949 = vsel %vm235, %v2939, 0
    %2951 = vmatpush.msra.mxu0 0.0
    %2952 = vmatpush.msra.mxu0 0.0
    %2953 = vmatpush.msra.mxu0 0.0
    %2954 = vmatpush.msra.mxu0 0.0
    %2955 = vmatpush.msra.mxu0 0.0
    %2956 = vmatpush.msra.mxu0 0.0
    %2957 = vmatpush.msra.mxu0 0.0
    %2958 = vmatpush.msra.mxu0 0.0
    %2959 = vmatpush.msra.mxu0 0.0
    %2960 = vmatpush.msra.mxu0 0.0
    %2961 = vmatpush.msra.mxu0 0.0
    %2962 = vmatpush.msra.mxu0 0.0
    %2963 = vmatpush.msra.mxu0 %v2943
    %2964 = vmatpush.msra.mxu0 %v2942
    %2965 = vmatpush.msra.mxu0 %v2941
    %2966 = vmatpush.msra.mxu0 %v2940
    %2967 = vmatmul.f32.gmra.mxu0 %v2949
    %v2968 = vpop.f32.mrf.mxu0
    %v2969 = vadd.f32 %v2946, %v2968
    %2970 = vdwg.mxu0
    %2971 = vst [vmem:[#allocation21] sm:$0x3] %v2969
    // Predicated region
    $region126: #{tpu_custom_call.1} parent=1 // pred_check
      _
    $region127: #{tpu_custom_call.1} parent=1 // pred_check_branch
      %2973 = sbr.rel (0) target = $region129
    $region128: #{tpu_custom_call.1} parent=1 // pred_region
      %2975 = vsyncadd [#allocation5], 0
      %s2977 = sshll.u32 [#allocation21], 4
      %s2978 = int_to_ptr.vmem [resolvable:$true] %s2977
      %s2979 = sshll.u32 %s20, 4
      %s2980 = int_to_ptr.hbm [resolvable:$true] %s2979
      %2982 = dma.vmem_to_hbm [thread:$0]  %s2978, 32, %s2980, [#allocation5]
    $region129: #{tpu_custom_call.1} parent=1 // pred_fallthru
      _
    // Predicated region
    $region130: #{tpu_custom_call.1} parent=1 // pred_check
      _
    $region131: #{tpu_custom_call.1} parent=1 // pred_check_branch
      %2984 = sbr.rel (0) target = $region133
    $region132: #{tpu_custom_call.1} parent=1 // pred_region
      %2986 = dma.done [#allocation5], 32
    $region133: #{tpu_custom_call.1} parent=1 // pred_fallthru
      _
    %2987 = vsyncpa [#allocation4], 1
    %2988 = vsyncpa [#allocation7], 1
    %2989 = vsyncpa [#allocation10], 1
    %2990 = vsyncpa [#allocation13], 1
    %2991 = vsyncpa [#allocation16], 1
    %2992 = vsyncpa [#allocation19], 1
    %2993 = vsyncpa [#allocation5], 1

</llo_original>
